<compile_context>
chip_gen: v5e
topology: v5e:2x2
jax: 0.10.0
libtpu: 0.0.40
codegen_flags: <defaults>
</compile_context>

<pallas_src>
import functools
import math

import jax
import jax.numpy as jnp
import numpy as np
from jax.experimental import pallas as pl
from jax.experimental.pallas import tpu as pltpu


# ---------------------------------------------------------------------------
# Device heuristics (trace-time Python, safe fallbacks)
# ---------------------------------------------------------------------------
def _device_kind():
    try:
        return jax.devices()[0].device_kind.lower()
    except Exception:
        return ""


def _is_dual_tensorcore():
    kind = _device_kind()
    return ("v7" in kind) or ("7x" in kind)


def _default_batch_block(B):
    # v7x: 2 TensorCores per chip -> keep >= 2 "parallel" grid steps.
    # v5e / v6e: single TC -> one big step (M = B*T rows) is strictly better.
    if _is_dual_tensorcore() and B % 2 == 0 and B >= 2:
        return B // 2
    return B


def _vmem_cap_bytes():
    if _is_dual_tensorcore():
        return 56 << 20          # leave headroom under v7x's 64 MiB physical VMEM
    return 100 << 20             # v5e / v6e have 128 MiB physical VMEM


# ---------------------------------------------------------------------------
# Pallas kernel: Bb batch elements per grid step
# (self-attn + encoder add + FFN + 3 post-LayerNorms)
# ---------------------------------------------------------------------------
def decoder_layer_kernel(
    x_ref, enc_ref,
    wqkv_ref, bqkv_ref, wo_ref, bo_ref,
    ln0g_ref, ln0b_ref, ln1g_ref, ln1b_ref, ln2g_ref, ln2b_ref,
    w1_ref, b1_ref, w2_ref, b2_ref,
    out_ref,
    attn_sc,
    *, num_heads, head_dim,
):
    Bb, T, C = x_ref.shape
    H, hd = num_heads, head_dim
    M = Bb * T
    cdt = wqkv_ref.dtype                      # matmul operand dtype (f32 or bf16)
    exact = np.dtype(cdt) == np.dtype(np.float32)

    # (Bb, T, C) -> (M, C); T % 8 == 0 keeps this a layout-free leading-dim merge.
    x = x_ref[...].reshape(M, C)              # f32 activations
    xm = x.astype(cdt)

    # ---- fused Q/K/V projection: one (M, C) x (C, 3C) MXU matmul, f32 accumulate ----
    # head_dim**-0.5 scale already folded into the Q columns of wqkv / bqkv.
    qkv = jnp.dot(xm, wqkv_ref[...], preferred_element_type=jnp.float32) + bqkv_ref[...]
    qkv_c = qkv.astype(cdt)                   # single f32->cdt pass covering Q, K and V

    if hd % 128 == 0:
        # lane-aligned static per-head slices; merged heads written to VMEM scratch
        # at static lane offsets (no stack/concatenate copies).
        for h in range(H):
            q_h = qkv_c[:, h * hd:(h + 1) * hd].reshape(Bb, T, hd)
            k_h = qkv_c[:, C + h * hd:C + (h + 1) * hd].reshape(Bb, T, hd)
            v_h = qkv_c[:, 2 * C + h * hd:2 * C + (h + 1) * hd].reshape(Bb, T, hd)

            s = jnp.einsum("bqd,bkd->bqk", q_h, k_h,
                           preferred_element_type=jnp.float32)        # (Bb, T, T) f32
            s = s - jnp.max(s, axis=-1, keepdims=True)
            p = jnp.exp(s)
            denom = jnp.sum(p, axis=-1, keepdims=True)
            # reciprocal-then-multiply: EUP slot instead of a full VPU divide pass;
            # exact reciprocal in the f32 test path, approx in the bf16 path.
            p = p * pl.reciprocal(denom, approx=not exact)

            o_h = jnp.einsum("bqk,bkd->bqd", p.astype(cdt), v_h,
                             preferred_element_type=jnp.float32)      # (Bb, T, hd) f32
            attn_sc[:, h * hd:(h + 1) * hd] = o_h.reshape(M, hd)
        attn = attn_sc[...]                                           # (M, C) f32
    else:
        # TODO(synk): generic head_dim (hd % 128 != 0) falls back to reshape/transpose
        # which relies on a Mosaic lane-splitting relayout -- correct but slower.
        qh = qkv_c[:, :C].reshape(Bb, T, H, hd).transpose(0, 2, 1, 3)
        kh = qkv_c[:, C:2 * C].reshape(Bb, T, H, hd).transpose(0, 2, 1, 3)
        vh = qkv_c[:, 2 * C:].reshape(Bb, T, H, hd).transpose(0, 2, 1, 3)
        s = jnp.einsum("bhqd,bhkd->bhqk", qh, kh, preferred_element_type=jnp.float32)
        s = s - jnp.max(s, axis=-1, keepdims=True)
        p = jnp.exp(s)
        denom = jnp.sum(p, axis=-1, keepdims=True)
        p = p * pl.reciprocal(denom, approx=not exact)
        o = jnp.einsum("bhqk,bhkd->bhqd", p.astype(cdt), vh,
                       preferred_element_type=jnp.float32)
        attn = o.transpose(0, 2, 1, 3).reshape(M, C)

    attn = jnp.dot(attn.astype(cdt), wo_ref[...],
                   preferred_element_type=jnp.float32) + bo_ref[...]

    def layer_norm(z, g, b):                  # f32 statistics
        mu = jnp.mean(z, axis=-1, keepdims=True)
        var = jnp.mean(jnp.square(z - mu), axis=-1, keepdims=True)
        return (z - mu) * jax.lax.rsqrt(var + 1e-5) * g + b

    # residual + LN0   (normalize_before = False -> post-norm)
    y = layer_norm(x + attn, ln0g_ref[...], ln0b_ref[...])

    # encoder_out broadcast-add (one (1, C) row per batch element) + LN1
    y = (y.reshape(Bb, T, C) + enc_ref[...]).reshape(M, C)
    y = layer_norm(y, ln1g_ref[...], ln1b_ref[...])

    # FFN + residual + LN2
    res = y
    h1 = jnp.maximum(
        jnp.dot(y.astype(cdt), w1_ref[...], preferred_element_type=jnp.float32)
        + b1_ref[...], 0.0)
    ffn = jnp.dot(h1.astype(cdt), w2_ref[...],
                  preferred_element_type=jnp.float32) + b2_ref[...]
    y = layer_norm(res + ffn, ln2g_ref[...], ln2b_ref[...])

    out_ref[...] = y.reshape(Bb, T, C).astype(out_ref.dtype)


# ---------------------------------------------------------------------------
# Batch-major wrapper: x (B, T, C), encoder_out (B, C) -> (B, T, C)
# ---------------------------------------------------------------------------
def transformer_decoder_layer_btc(x_btc, encoder_out, params, *, num_heads,
                                  compute_dtype=jnp.float32, batch_block=None):
    B, T, C = x_btc.shape
    H = num_heads
    assert C % H == 0
    hd = C // H
    F_dim = params["w1_t"].shape[1]
    cd = compute_dtype

    if batch_block is None:
        batch_block = _default_batch_block(B)
    assert B % batch_block == 0, "batch_block must divide B"
    n_steps = B // batch_block
    Mb = batch_block * T

    # fused QKV weight (C, 3C) with the softmax scale folded into the Q columns;
    # matmul weights cast once here to the compute dtype, biases / LN params stay f32.
    scale = hd ** -0.5
    wqkv = jnp.concatenate(
        [params["wq_t"] * scale, params["wk_t"], params["wv_t"]], axis=1).astype(cd)
    bqkv = jnp.concatenate(
        [params["bq"] * scale, params["bk"], params["bv"]], axis=1)          # (1, 3C) f32
    wo = params["wo_t"].astype(cd)
    w1 = params["w1_t"].astype(cd)
    w2 = params["w2_t"].astype(cd)

    x_f32 = x_btc.astype(jnp.float32)
    enc = encoder_out.reshape(B, 1, C).astype(jnp.float32)

    inputs = [
        x_f32, enc,
        wqkv, bqkv, wo, params["bo"],
        params["ln0_g"], params["ln0_b"], params["ln1_g"], params["ln1_b"],
        params["ln2_g"], params["ln2_b"],
        w1, params["b1"], w2, params["b2"],
    ]

    in_specs = [
        pl.BlockSpec((batch_block, T, C), lambda b: (b, 0, 0)),      # activations
        pl.BlockSpec((batch_block, 1, C), lambda b: (b, 0, 0)),      # encoder rows
    ] + [
        # weights / biases: single VMEM-resident block, constant index_map.
        # TODO(synk): at large C/F on v7x add pipeline_mode=pl.Buffered(1) to
        # single-buffer these constant blocks and halve their VMEM footprint.
        pl.BlockSpec(a.shape, lambda b, n=a.ndim: (0,) * n) for a in inputs[2:]
    ]
    out_specs = pl.BlockSpec((batch_block, T, C), lambda b: (b, 0, 0))

    # ---- footprint-derived VMEM limit -------------------------------------
    def nbytes(a):
        return int(np.prod(a.shape)) * np.dtype(a.dtype).itemsize

    itemsz = np.dtype(cd).itemsize
    weight_bytes = sum(nbytes(a) for a in inputs[2:])
    act_block = Mb * C * 4
    enc_block = batch_block * C * 4
    scratch_bytes = Mb * C * 4
    live_intermediates = (Mb * 3 * C * (4 + itemsz)       # fused qkv f32 + cdt copy
                          + batch_block * T * T * 4 * 2   # per-head scores / probs
                          + Mb * F_dim * (4 + itemsz))    # fc1 activations
    footprint = (2 * weight_bytes                         # double-buffered const blocks
                 + 2 * (2 * act_block + enc_block)        # x / out / enc double buffers
                 + scratch_bytes + live_intermediates)
    vmem_limit = int(min(max(int(footprint * 1.5) + (4 << 20), 16 << 20),
                         _vmem_cap_bytes()))

    flops = (2 * B * T * C * (3 * C)        # fused qkv projection
             + 2 * B * T * C * C            # out projection
             + 2 * 2 * B * T * T * C        # q k^T and p v
             + 2 * 2 * B * T * C * F_dim)   # fc1, fc2
    cost = pl.CostEstimate(
        flops=int(flops),
        transcendentals=int(B * H * T * T + B * T * (3 + H)),
        bytes_accessed=int(weight_bytes + 2 * B * T * C * 4 + B * C * 4),
    )

    kernel = functools.partial(decoder_layer_kernel, num_heads=H, head_dim=hd)

    return pl.pallas_call(
        kernel,
        out_shape=jax.ShapeDtypeStruct((B, T, C), jnp.float32),
        grid=(n_steps,),
        in_specs=in_specs,
        out_specs=out_specs,
        scratch_shapes=[pltpu.VMEM((Mb, C), jnp.float32)],    # merged attention heads
        compiler_params=pltpu.CompilerParams(
            dimension_semantics=("parallel",),     # shard batch steps across TCs on v7x
            vmem_limit_bytes=vmem_limit,
        ),
        cost_estimate=cost,
    )(*inputs)


# ---------------------------------------------------------------------------
# fairseq-layout wrapper: x (T, B, C) -> (T, B, C).
# The two transposes are un-hidden HBM traffic; prefer the batch-major entry
# point above when the caller can supply (B, T, C) directly.
# ---------------------------------------------------------------------------
def transformer_decoder_layer(x_tbc, encoder_out, params, **kwargs):
    y = transformer_decoder_layer_btc(jnp.transpose(x_tbc, (1, 0, 2)),
                                      encoder_out, params, **kwargs)
    return jnp.transpose(y, (1, 0, 2))


# ---------------------------------------------------------------------------
# Pure-JAX reference (same math, no Pallas) for sanity checking
# ---------------------------------------------------------------------------
def reference(x_tbc, encoder_out, p, *, num_heads):
    T, B, C = x_tbc.shape
    H = num_heads
    hd = C // H
    x = jnp.transpose(x_tbc, (1, 0, 2)).reshape(B * T, C)
    enc = jnp.repeat(encoder_out, T, axis=0)

    def ln(z, g, b):
        mu = jnp.mean(z, -1, keepdims=True)
        var = jnp.mean((z - mu) ** 2, -1, keepdims=True)
        return (z - mu) / jnp.sqrt(var + 1e-5) * g + b

    q = ((x @ p["wq_t"] + p["bq"]) * hd ** -0.5).reshape(B, T, H, hd)
    k = (x @ p["wk_t"] + p["bk"]).reshape(B, T, H, hd)
    v = (x @ p["wv_t"] + p["bv"]).reshape(B, T, H, hd)
    s = jnp.einsum("bqhd,bkhd->bhqk", q, k)
    a = jax.nn.softmax(s, axis=-1)
    o = jnp.einsum("bhqk,bkhd->bqhd", a, v).reshape(B * T, C)
    o = o @ p["wo_t"] + p["bo"]

    x = ln(x + o, p["ln0_g"], p["ln0_b"])
    x = ln(x + enc, p["ln1_g"], p["ln1_b"])
    res = x
    h = jnp.maximum(x @ p["w1_t"] + p["b1"], 0.0)
    x = h @ p["w2_t"] + p["b2"]
    x = ln(res + x, p["ln2_g"], p["ln2_b"])
    return jnp.transpose(x.reshape(B, T, C), (1, 0, 2))


# ---------------------------------------------------------------------------
# Deterministic parameter init (matches module __init__ shapes / init scheme)
# ---------------------------------------------------------------------------
def xavier_uniform(key, out_f, in_f):
    bound = math.sqrt(6.0 / (in_f + out_f))
    return jax.random.uniform(key, (out_f, in_f), jnp.float32, -bound, bound)


def make_params(key, C, F):
    ks = jax.random.split(key, 4)
    in_proj = xavier_uniform(ks[0], 3 * C, C)          # MultiheadAttention.in_proj_weight
    wq, wk, wv = in_proj[:C], in_proj[C:2 * C], in_proj[2 * C:]
    wo = xavier_uniform(ks[1], C, C)                   # out_proj
    w1 = xavier_uniform(ks[2], F, C)                   # fc1
    w2 = xavier_uniform(ks[3], C, F)                   # fc2
    zc = jnp.zeros((1, C), jnp.float32)
    return {
        "wq_t": wq.T, "bq": zc, "wk_t": wk.T, "bk": zc, "wv_t": wv.T, "bv": zc,
        "wo_t": wo.T, "bo": zc,
        "ln0_g": jnp.ones((1, C), jnp.float32), "ln0_b": zc,
        "ln1_g": jnp.ones((1, C), jnp.float32), "ln1_b": zc,
        "ln2_g": jnp.ones((1, C), jnp.float32), "ln2_b": zc,
        "w1_t": w1.T, "b1": jnp.zeros((1, F), jnp.float32),
        "w2_t": w2.T, "b2": zc,
    }


if __name__ == "__main__":
    # seq, batch, embed_dim, heads, ffn_dim  (head_dim = 128 -> lane-dense heads)
    T, B, C, H, F_dim = 16, 4, 256, 2, 512

    key = jax.random.PRNGKey(0)
    kx, ke, kp = jax.random.split(key, 3)
    x = jax.random.normal(kx, (T, B, C), jnp.float32)          # fairseq (T, B, C)
    encoder_out = jax.random.normal(ke, (B, C), jnp.float32)   # viewed as (1, B, C) in torch
    params = make_params(kp, C, F_dim)

    y_ref = jax.block_until_ready(reference(x, encoder_out, params, num_heads=H))

    # exact f32 path via the module-faithful (T, B, C) wrapper
    y32 = jax.block_until_ready(
        transformer_decoder_layer(x, encoder_out, params, num_heads=H,
                                  compute_dtype=jnp.float32))
    assert y32.shape == (T, B, C)
    np.testing.assert_allclose(np.asarray(y32), np.asarray(y_ref), rtol=1e-4, atol=1e-4)

    # bf16 MXU-operand fast path via the batch-major entry (no layout round trips);
    # f32 accumulation + f32 LayerNorm / softmax statistics.
    x_btc = jnp.transpose(x, (1, 0, 2))
    ybf = jax.block_until_ready(
        transformer_decoder_layer_btc(x_btc, encoder_out, params, num_heads=H,
                                      compute_dtype=jnp.bfloat16))
    assert ybf.shape == (B, T, C)
    np.testing.assert_allclose(np.asarray(jnp.transpose(ybf, (1, 0, 2))),
                               np.asarray(y_ref), rtol=1e-1, atol=1e-1)

    print("KERNEL_OK")
</pallas_src>

<mosaic_0001>
module attributes {stable_mosaic.version = 11 : i64} {
  func.func @decoder_layer_kernel(%arg0: i32, %arg1: memref<4x16x256xf32, #tpu.memory_space<vmem>>, %arg2: memref<4x1x256xf32, #tpu.memory_space<vmem>>, %arg3: memref<256x768xf32, #tpu.memory_space<vmem>>, %arg4: memref<1x768xf32, #tpu.memory_space<vmem>>, %arg5: memref<256x256xf32, #tpu.memory_space<vmem>>, %arg6: memref<1x256xf32, #tpu.memory_space<vmem>>, %arg7: memref<1x256xf32, #tpu.memory_space<vmem>>, %arg8: memref<1x256xf32, #tpu.memory_space<vmem>>, %arg9: memref<1x256xf32, #tpu.memory_space<vmem>>, %arg10: memref<1x256xf32, #tpu.memory_space<vmem>>, %arg11: memref<1x256xf32, #tpu.memory_space<vmem>>, %arg12: memref<1x256xf32, #tpu.memory_space<vmem>>, %arg13: memref<256x512xf32, #tpu.memory_space<vmem>>, %arg14: memref<1x512xf32, #tpu.memory_space<vmem>>, %arg15: memref<512x256xf32, #tpu.memory_space<vmem>>, %arg16: memref<1x256xf32, #tpu.memory_space<vmem>>, %arg17: memref<4x16x256xf32, #tpu.memory_space<vmem>>, %arg18: memref<64x256xf32, #tpu.memory_space<vmem>>) attributes {dimension_semantics = [#tpu.dimension_semantics<parallel>], iteration_bounds = array<i64: 1>, scalar_prefetch = 0 : i64, scratch_operands = 1 : i64, tpu.core_type = #tpu.core_type<tc>, window_params = [{transform_indices = @transform_0, window_bounds = array<i64: 4, 16, 256>}, {transform_indices = @transform_1, window_bounds = array<i64: 4, 1, 256>}, {pipeline_mode = #tpu.pipeline_mode<synchronous>, transform_indices = @transform_2, window_bounds = array<i64: 256, 768>}, {pipeline_mode = #tpu.pipeline_mode<synchronous>, transform_indices = @transform_3, window_bounds = array<i64: 1, 768>}, {pipeline_mode = #tpu.pipeline_mode<synchronous>, transform_indices = @transform_4, window_bounds = array<i64: 256, 256>}, {pipeline_mode = #tpu.pipeline_mode<synchronous>, transform_indices = @transform_5, window_bounds = array<i64: 1, 256>}, {pipeline_mode = #tpu.pipeline_mode<synchronous>, transform_indices = @transform_6, window_bounds = array<i64: 1, 256>}, {pipeline_mode = #tpu.pipeline_mode<synchronous>, transform_indices = @transform_7, window_bounds = array<i64: 1, 256>}, {pipeline_mode = #tpu.pipeline_mode<synchronous>, transform_indices = @transform_8, window_bounds = array<i64: 1, 256>}, {pipeline_mode = #tpu.pipeline_mode<synchronous>, transform_indices = @transform_9, window_bounds = array<i64: 1, 256>}, {pipeline_mode = #tpu.pipeline_mode<synchronous>, transform_indices = @transform_10, window_bounds = array<i64: 1, 256>}, {pipeline_mode = #tpu.pipeline_mode<synchronous>, transform_indices = @transform_11, window_bounds = array<i64: 1, 256>}, {pipeline_mode = #tpu.pipeline_mode<synchronous>, transform_indices = @transform_12, window_bounds = array<i64: 256, 512>}, {pipeline_mode = #tpu.pipeline_mode<synchronous>, transform_indices = @transform_13, window_bounds = array<i64: 1, 512>}, {pipeline_mode = #tpu.pipeline_mode<synchronous>, transform_indices = @transform_14, window_bounds = array<i64: 512, 256>}, {pipeline_mode = #tpu.pipeline_mode<synchronous>, transform_indices = @transform_15, window_bounds = array<i64: 1, 256>}, {transform_indices = @transform_16, window_bounds = array<i64: 4, 16, 256>}]} {
    %c0 = arith.constant 0 : index
    %c0_0 = arith.constant 0 : index
    %c0_1 = arith.constant 0 : index
    %0 = vector.load %arg1[%c0, %c0_0, %c0_1] : memref<4x16x256xf32, #tpu.memory_space<vmem>>, vector<4x16x256xf32>
    %1 = vector.shape_cast %0 : vector<4x16x256xf32> to vector<64x256xf32>
    %c0_2 = arith.constant 0 : index
    %c0_3 = arith.constant 0 : index
    %2 = vector.load %arg3[%c0_2, %c0_3] : memref<256x768xf32, #tpu.memory_space<vmem>>, vector<256x768xf32>
    %cst = arith.constant dense<0.000000e+00> : vector<64x768xf32>
    %3 = tpu.matmul %1, %2, %cst {dimension_numbers = #tpu.dot_dimension_numbers<[1], [0], [0], [1], [0, 0, 1, 1], [], []>} : vector<64x256xf32>, vector<256x768xf32>, vector<64x768xf32> -> vector<64x768xf32>
    %c0_4 = arith.constant 0 : index
    %c0_5 = arith.constant 0 : index
    %4 = vector.load %arg4[%c0_4, %c0_5] : memref<1x768xf32, #tpu.memory_space<vmem>>, vector<1x768xf32>
    %5 = vector.broadcast %4 : vector<1x768xf32> to vector<64x768xf32>
    %6 = arith.addf %3, %5 : vector<64x768xf32>
    %7 = vector.extract_strided_slice %6 {offsets = [0, 0], sizes = [64, 128], strides = [1, 1]} : vector<64x768xf32> to vector<64x128xf32>
    %8 = vector.shape_cast %7 : vector<64x128xf32> to vector<4x16x128xf32>
    %9 = vector.extract_strided_slice %6 {offsets = [0, 256], sizes = [64, 128], strides = [1, 1]} : vector<64x768xf32> to vector<64x128xf32>
    %10 = vector.shape_cast %9 : vector<64x128xf32> to vector<4x16x128xf32>
    %11 = vector.extract_strided_slice %6 {offsets = [0, 512], sizes = [64, 128], strides = [1, 1]} : vector<64x768xf32> to vector<64x128xf32>
    %12 = vector.shape_cast %11 : vector<64x128xf32> to vector<4x16x128xf32>
    "tpu.trace_start"() <{level = 10 : i32, message = "bqd,bkd->bqk"}> : () -> ()
    %cst_6 = arith.constant dense<0.000000e+00> : vector<4x16x16xf32>
    %13 = tpu.matmul %8, %10, %cst_6 {dimension_numbers = #tpu.dot_dimension_numbers<[2], [2], [1], [1], [0, 0, 0, 1, 1, 1], [0], [0]>} : vector<4x16x128xf32>, vector<4x16x128xf32>, vector<4x16x16xf32> -> vector<4x16x16xf32>
    "tpu.trace_stop"() : () -> ()
    %cst_7 = arith.constant dense<0xFF800000> : vector<4x16xf32>
    %14 = vector.multi_reduction <maximumf>, %13, %cst_7 [2] : vector<4x16x16xf32> to vector<4x16xf32>
    %15 = vector.shape_cast %14 : vector<4x16xf32> to vector<4x16x1xf32>
    %16 = vector.broadcast %15 : vector<4x16x1xf32> to vector<4x16x16xf32>
    %17 = arith.subf %13, %16 : vector<4x16x16xf32>
    %18 = math.exp %17 : vector<4x16x16xf32>
    %cst_8 = arith.constant dense<0.000000e+00> : vector<4x16xf32>
    %19 = vector.multi_reduction <add>, %18, %cst_8 [2] : vector<4x16x16xf32> to vector<4x16xf32>
    %20 = vector.shape_cast %19 : vector<4x16xf32> to vector<4x16x1xf32>
    %21 = tpu.reciprocal %20 : vector<4x16x1xf32> -> vector<4x16x1xf32>
    %22 = vector.broadcast %21 : vector<4x16x1xf32> to vector<4x16x16xf32>
    %23 = arith.mulf %18, %22 : vector<4x16x16xf32>
    "tpu.trace_start"() <{level = 10 : i32, message = "bqk,bkd->bqd"}> : () -> ()
    %cst_9 = arith.constant dense<0.000000e+00> : vector<4x16x128xf32>
    %24 = tpu.matmul %23, %12, %cst_9 {dimension_numbers = #tpu.dot_dimension_numbers<[2], [1], [1], [2], [0, 0, 0, 1, 1, 2], [0], [0]>} : vector<4x16x16xf32>, vector<4x16x128xf32>, vector<4x16x128xf32> -> vector<4x16x128xf32>
    "tpu.trace_stop"() : () -> ()
    %25 = vector.shape_cast %24 : vector<4x16x128xf32> to vector<64x128xf32>
    %c0_10 = arith.constant 0 : index
    %c0_11 = arith.constant 0 : index
    %26 = vector.load %arg18[%c0_10, %c0_11] : memref<64x256xf32, #tpu.memory_space<vmem>>, vector<64x128xf32>
    tpu.vector_store %arg18[%c0_10, %c0_11], %25 {strides = array<i32>} : memref<64x256xf32, #tpu.memory_space<vmem>>, vector<64x128xf32>,
    %27 = vector.extract_strided_slice %6 {offsets = [0, 128], sizes = [64, 128], strides = [1, 1]} : vector<64x768xf32> to vector<64x128xf32>
    %28 = vector.shape_cast %27 : vector<64x128xf32> to vector<4x16x128xf32>
    %29 = vector.extract_strided_slice %6 {offsets = [0, 384], sizes = [64, 128], strides = [1, 1]} : vector<64x768xf32> to vector<64x128xf32>
    %30 = vector.shape_cast %29 : vector<64x128xf32> to vector<4x16x128xf32>
    %31 = vector.extract_strided_slice %6 {offsets = [0, 640], sizes = [64, 128], strides = [1, 1]} : vector<64x768xf32> to vector<64x128xf32>
    %32 = vector.shape_cast %31 : vector<64x128xf32> to vector<4x16x128xf32>
    "tpu.trace_start"() <{level = 10 : i32, message = "bqd,bkd->bqk"}> : () -> ()
    %cst_12 = arith.constant dense<0.000000e+00> : vector<4x16x16xf32>
    %33 = tpu.matmul %28, %30, %cst_12 {dimension_numbers = #tpu.dot_dimension_numbers<[2], [2], [1], [1], [0, 0, 0, 1, 1, 1], [0], [0]>} : vector<4x16x128xf32>, vector<4x16x128xf32>, vector<4x16x16xf32> -> vector<4x16x16xf32>
    "tpu.trace_stop"() : () -> ()
    %cst_13 = arith.constant dense<0xFF800000> : vector<4x16xf32>
    %34 = vector.multi_reduction <maximumf>, %33, %cst_13 [2] : vector<4x16x16xf32> to vector<4x16xf32>
    %35 = vector.shape_cast %34 : vector<4x16xf32> to vector<4x16x1xf32>
    %36 = vector.broadcast %35 : vector<4x16x1xf32> to vector<4x16x16xf32>
    %37 = arith.subf %33, %36 : vector<4x16x16xf32>
    %38 = math.exp %37 : vector<4x16x16xf32>
    %cst_14 = arith.constant dense<0.000000e+00> : vector<4x16xf32>
    %39 = vector.multi_reduction <add>, %38, %cst_14 [2] : vector<4x16x16xf32> to vector<4x16xf32>
    %40 = vector.shape_cast %39 : vector<4x16xf32> to vector<4x16x1xf32>
    %41 = tpu.reciprocal %40 : vector<4x16x1xf32> -> vector<4x16x1xf32>
    %42 = vector.broadcast %41 : vector<4x16x1xf32> to vector<4x16x16xf32>
    %43 = arith.mulf %38, %42 : vector<4x16x16xf32>
    "tpu.trace_start"() <{level = 10 : i32, message = "bqk,bkd->bqd"}> : () -> ()
    %cst_15 = arith.constant dense<0.000000e+00> : vector<4x16x128xf32>
    %44 = tpu.matmul %43, %32, %cst_15 {dimension_numbers = #tpu.dot_dimension_numbers<[2], [1], [1], [2], [0, 0, 0, 1, 1, 2], [0], [0]>} : vector<4x16x16xf32>, vector<4x16x128xf32>, vector<4x16x128xf32> -> vector<4x16x128xf32>
    "tpu.trace_stop"() : () -> ()
    %45 = vector.shape_cast %44 : vector<4x16x128xf32> to vector<64x128xf32>
    %c0_16 = arith.constant 0 : index
    %c128 = arith.constant 128 : index
    %46 = vector.load %arg18[%c0_16, %c128] : memref<64x256xf32, #tpu.memory_space<vmem>>, vector<64x128xf32>
    tpu.vector_store %arg18[%c0_16, %c128], %45 {strides = array<i32>} : memref<64x256xf32, #tpu.memory_space<vmem>>, vector<64x128xf32>,
    %c0_17 = arith.constant 0 : index
    %c0_18 = arith.constant 0 : index
    %47 = vector.load %arg18[%c0_17, %c0_18] : memref<64x256xf32, #tpu.memory_space<vmem>>, vector<64x256xf32>
    %c0_19 = arith.constant 0 : index
    %c0_20 = arith.constant 0 : index
    %48 = vector.load %arg5[%c0_19, %c0_20] : memref<256x256xf32, #tpu.memory_space<vmem>>, vector<256x256xf32>
    %cst_21 = arith.constant dense<0.000000e+00> : vector<64x256xf32>
    %49 = tpu.matmul %47, %48, %cst_21 {dimension_numbers = #tpu.dot_dimension_numbers<[1], [0], [0], [1], [0, 0, 1, 1], [], []>} : vector<64x256xf32>, vector<256x256xf32>, vector<64x256xf32> -> vector<64x256xf32>
    %c0_22 = arith.constant 0 : index
    %c0_23 = arith.constant 0 : index
    %50 = vector.load %arg6[%c0_22, %c0_23] : memref<1x256xf32, #tpu.memory_space<vmem>>, vector<1x256xf32>
    %51 = vector.broadcast %50 : vector<1x256xf32> to vector<64x256xf32>
    %52 = arith.addf %49, %51 : vector<64x256xf32>
    %53 = arith.addf %1, %52 : vector<64x256xf32>
    %c0_24 = arith.constant 0 : index
    %c0_25 = arith.constant 0 : index
    %54 = vector.load %arg7[%c0_24, %c0_25] : memref<1x256xf32, #tpu.memory_space<vmem>>, vector<1x256xf32>
    %c0_26 = arith.constant 0 : index
    %c0_27 = arith.constant 0 : index
    %55 = vector.load %arg8[%c0_26, %c0_27] : memref<1x256xf32, #tpu.memory_space<vmem>>, vector<1x256xf32>
    %cst_28 = arith.constant dense<0.000000e+00> : vector<64xf32>
    %56 = vector.multi_reduction <add>, %53, %cst_28 [1] : vector<64x256xf32> to vector<64xf32>
    %57 = vector.shape_cast %56 : vector<64xf32> to vector<64x1xf32>
    %cst_29 = arith.constant 2.560000e+02 : f32
    %58 = vector.broadcast %cst_29 : f32 to vector<64x1xf32>
    %59 = arith.divf %57, %58 : vector<64x1xf32>
    %60 = vector.broadcast %59 : vector<64x1xf32> to vector<64x256xf32>
    %61 = arith.subf %53, %60 : vector<64x256xf32>
    %62 = arith.mulf %61, %61 : vector<64x256xf32>
    %cst_30 = arith.constant dense<0.000000e+00> : vector<64xf32>
    %63 = vector.multi_reduction <add>, %62, %cst_30 [1] : vector<64x256xf32> to vector<64xf32>
    %64 = vector.shape_cast %63 : vector<64xf32> to vector<64x1xf32>
    %cst_31 = arith.constant 2.560000e+02 : f32
    %65 = vector.broadcast %cst_31 : f32 to vector<64x1xf32>
    %66 = arith.divf %64, %65 : vector<64x1xf32>
    %67 = vector.broadcast %59 : vector<64x1xf32> to vector<64x256xf32>
    %68 = arith.subf %53, %67 : vector<64x256xf32>
    %cst_32 = arith.constant 9.99999974E-6 : f32
    %69 = vector.broadcast %cst_32 : f32 to vector<64x1xf32>
    %70 = arith.addf %66, %69 : vector<64x1xf32>
    %71 = math.rsqrt %70 : vector<64x1xf32>
    %72 = vector.broadcast %71 : vector<64x1xf32> to vector<64x256xf32>
    %73 = arith.mulf %68, %72 : vector<64x256xf32>
    %74 = vector.broadcast %54 : vector<1x256xf32> to vector<64x256xf32>
    %75 = arith.mulf %73, %74 : vector<64x256xf32>
    %76 = vector.broadcast %55 : vector<1x256xf32> to vector<64x256xf32>
    %77 = arith.addf %75, %76 : vector<64x256xf32>
    %78 = vector.shape_cast %77 : vector<64x256xf32> to vector<4x16x256xf32>
    %c0_33 = arith.constant 0 : index
    %c0_34 = arith.constant 0 : index
    %c0_35 = arith.constant 0 : index
    %79 = vector.load %arg2[%c0_33, %c0_34, %c0_35] : memref<4x1x256xf32, #tpu.memory_space<vmem>>, vector<4x1x256xf32>
    %80 = vector.broadcast %79 : vector<4x1x256xf32> to vector<4x16x256xf32>
    %81 = arith.addf %78, %80 : vector<4x16x256xf32>
    %82 = vector.shape_cast %81 : vector<4x16x256xf32> to vector<64x256xf32>
    %c0_36 = arith.constant 0 : index
    %c0_37 = arith.constant 0 : index
    %83 = vector.load %arg9[%c0_36, %c0_37] : memref<1x256xf32, #tpu.memory_space<vmem>>, vector<1x256xf32>
    %c0_38 = arith.constant 0 : index
    %c0_39 = arith.constant 0 : index
    %84 = vector.load %arg10[%c0_38, %c0_39] : memref<1x256xf32, #tpu.memory_space<vmem>>, vector<1x256xf32>
    %cst_40 = arith.constant dense<0.000000e+00> : vector<64xf32>
    %85 = vector.multi_reduction <add>, %82, %cst_40 [1] : vector<64x256xf32> to vector<64xf32>
    %86 = vector.shape_cast %85 : vector<64xf32> to vector<64x1xf32>
    %cst_41 = arith.constant 2.560000e+02 : f32
    %87 = vector.broadcast %cst_41 : f32 to vector<64x1xf32>
    %88 = arith.divf %86, %87 : vector<64x1xf32>
    %89 = vector.broadcast %88 : vector<64x1xf32> to vector<64x256xf32>
    %90 = arith.subf %82, %89 : vector<64x256xf32>
    %91 = arith.mulf %90, %90 : vector<64x256xf32>
    %cst_42 = arith.constant dense<0.000000e+00> : vector<64xf32>
    %92 = vector.multi_reduction <add>, %91, %cst_42 [1] : vector<64x256xf32> to vector<64xf32>
    %93 = vector.shape_cast %92 : vector<64xf32> to vector<64x1xf32>
    %cst_43 = arith.constant 2.560000e+02 : f32
    %94 = vector.broadcast %cst_43 : f32 to vector<64x1xf32>
    %95 = arith.divf %93, %94 : vector<64x1xf32>
    %96 = vector.broadcast %88 : vector<64x1xf32> to vector<64x256xf32>
    %97 = arith.subf %82, %96 : vector<64x256xf32>
    %cst_44 = arith.constant 9.99999974E-6 : f32
    %98 = vector.broadcast %cst_44 : f32 to vector<64x1xf32>
    %99 = arith.addf %95, %98 : vector<64x1xf32>
    %100 = math.rsqrt %99 : vector<64x1xf32>
    %101 = vector.broadcast %100 : vector<64x1xf32> to vector<64x256xf32>
    %102 = arith.mulf %97, %101 : vector<64x256xf32>
    %103 = vector.broadcast %83 : vector<1x256xf32> to vector<64x256xf32>
    %104 = arith.mulf %102, %103 : vector<64x256xf32>
    %105 = vector.broadcast %84 : vector<1x256xf32> to vector<64x256xf32>
    %106 = arith.addf %104, %105 : vector<64x256xf32>
    %c0_45 = arith.constant 0 : index
    %c0_46 = arith.constant 0 : index
    %107 = vector.load %arg13[%c0_45, %c0_46] : memref<256x512xf32, #tpu.memory_space<vmem>>, vector<256x512xf32>
    %cst_47 = arith.constant dense<0.000000e+00> : vector<64x512xf32>
    %108 = tpu.matmul %106, %107, %cst_47 {dimension_numbers = #tpu.dot_dimension_numbers<[1], [0], [0], [1], [0, 0, 1, 1], [], []>} : vector<64x256xf32>, vector<256x512xf32>, vector<64x512xf32> -> vector<64x512xf32>
    %c0_48 = arith.constant 0 : index
    %c0_49 = arith.constant 0 : index
    %109 = vector.load %arg14[%c0_48, %c0_49] : memref<1x512xf32, #tpu.memory_space<vmem>>, vector<1x512xf32>
    %110 = vector.broadcast %109 : vector<1x512xf32> to vector<64x512xf32>
    %111 = arith.addf %108, %110 : vector<64x512xf32>
    %cst_50 = arith.constant 0.000000e+00 : f32
    %112 = vector.broadcast %cst_50 : f32 to vector<64x512xf32>
    %113 = arith.maximumf %111, %112 : vector<64x512xf32>
    %c0_51 = arith.constant 0 : index
    %c0_52 = arith.constant 0 : index
    %114 = vector.load %arg15[%c0_51, %c0_52] : memref<512x256xf32, #tpu.memory_space<vmem>>, vector<512x256xf32>
    %cst_53 = arith.constant dense<0.000000e+00> : vector<64x256xf32>
    %115 = tpu.matmul %113, %114, %cst_53 {dimension_numbers = #tpu.dot_dimension_numbers<[1], [0], [0], [1], [0, 0, 1, 1], [], []>} : vector<64x512xf32>, vector<512x256xf32>, vector<64x256xf32> -> vector<64x256xf32>
    %c0_54 = arith.constant 0 : index
    %c0_55 = arith.constant 0 : index
    %116 = vector.load %arg16[%c0_54, %c0_55] : memref<1x256xf32, #tpu.memory_space<vmem>>, vector<1x256xf32>
    %117 = vector.broadcast %116 : vector<1x256xf32> to vector<64x256xf32>
    %118 = arith.addf %115, %117 : vector<64x256xf32>
    %119 = arith.addf %106, %118 : vector<64x256xf32>
    %c0_56 = arith.constant 0 : index
    %c0_57 = arith.constant 0 : index
    %120 = vector.load %arg11[%c0_56, %c0_57] : memref<1x256xf32, #tpu.memory_space<vmem>>, vector<1x256xf32>
    %c0_58 = arith.constant 0 : index
    %c0_59 = arith.constant 0 : index
    %121 = vector.load %arg12[%c0_58, %c0_59] : memref<1x256xf32, #tpu.memory_space<vmem>>, vector<1x256xf32>
    %cst_60 = arith.constant dense<0.000000e+00> : vector<64xf32>
    %122 = vector.multi_reduction <add>, %119, %cst_60 [1] : vector<64x256xf32> to vector<64xf32>
    %123 = vector.shape_cast %122 : vector<64xf32> to vector<64x1xf32>
    %cst_61 = arith.constant 2.560000e+02 : f32
    %124 = vector.broadcast %cst_61 : f32 to vector<64x1xf32>
    %125 = arith.divf %123, %124 : vector<64x1xf32>
    %126 = vector.broadcast %125 : vector<64x1xf32> to vector<64x256xf32>
    %127 = arith.subf %119, %126 : vector<64x256xf32>
    %128 = arith.mulf %127, %127 : vector<64x256xf32>
    %cst_62 = arith.constant dense<0.000000e+00> : vector<64xf32>
    %129 = vector.multi_reduction <add>, %128, %cst_62 [1] : vector<64x256xf32> to vector<64xf32>
    %130 = vector.shape_cast %129 : vector<64xf32> to vector<64x1xf32>
    %cst_63 = arith.constant 2.560000e+02 : f32
    %131 = vector.broadcast %cst_63 : f32 to vector<64x1xf32>
    %132 = arith.divf %130, %131 : vector<64x1xf32>
    %133 = vector.broadcast %125 : vector<64x1xf32> to vector<64x256xf32>
    %134 = arith.subf %119, %133 : vector<64x256xf32>
    %cst_64 = arith.constant 9.99999974E-6 : f32
    %135 = vector.broadcast %cst_64 : f32 to vector<64x1xf32>
    %136 = arith.addf %132, %135 : vector<64x1xf32>
    %137 = math.rsqrt %136 : vector<64x1xf32>
    %138 = vector.broadcast %137 : vector<64x1xf32> to vector<64x256xf32>
    %139 = arith.mulf %134, %138 : vector<64x256xf32>
    %140 = vector.broadcast %120 : vector<1x256xf32> to vector<64x256xf32>
    %141 = arith.mulf %139, %140 : vector<64x256xf32>
    %142 = vector.broadcast %121 : vector<1x256xf32> to vector<64x256xf32>
    %143 = arith.addf %141, %142 : vector<64x256xf32>
    %144 = vector.shape_cast %143 : vector<64x256xf32> to vector<4x16x256xf32>
    %c0_65 = arith.constant 0 : index
    %c0_66 = arith.constant 0 : index
    %c0_67 = arith.constant 0 : index
    %145 = vector.load %arg17[%c0_65, %c0_66, %c0_67] : memref<4x16x256xf32, #tpu.memory_space<vmem>>, vector<4x16x256xf32>
    tpu.vector_store %arg17[%c0_65, %c0_66, %c0_67], %144 {strides = array<i32>} : memref<4x16x256xf32, #tpu.memory_space<vmem>>, vector<4x16x256xf32>,
    return
  }
  func.func @transform_0(%arg0: i32) -> (i32, i32, i32) {
    %c0_i32 = arith.constant 0 : i32
    %c0_i32_0 = arith.constant 0 : i32
    %c0_i32_1 = arith.constant 0 : i32
    return %arg0, %c0_i32, %c0_i32_0 : i32, i32, i32
  }
  func.func @transform_1(%arg0: i32) -> (i32, i32, i32) {
    %c0_i32 = arith.constant 0 : i32
    %c0_i32_0 = arith.constant 0 : i32
    %c0_i32_1 = arith.constant 0 : i32
    return %arg0, %c0_i32, %c0_i32_0 : i32, i32, i32
  }
  func.func @transform_2(%arg0: i32) -> (i32, i32) {
    %c0_i32 = arith.constant 0 : i32
    %c0_i32_0 = arith.constant 0 : i32
    %c0_i32_1 = arith.constant 0 : i32
    return %c0_i32, %c0_i32_0 : i32, i32
  }
  func.func @transform_3(%arg0: i32) -> (i32, i32) {
    %c0_i32 = arith.constant 0 : i32
    %c0_i32_0 = arith.constant 0 : i32
    %c0_i32_1 = arith.constant 0 : i32
    return %c0_i32, %c0_i32_0 : i32, i32
  }
  func.func @transform_4(%arg0: i32) -> (i32, i32) {
    %c0_i32 = arith.constant 0 : i32
    %c0_i32_0 = arith.constant 0 : i32
    %c0_i32_1 = arith.constant 0 : i32
    return %c0_i32, %c0_i32_0 : i32, i32
  }
  func.func @transform_5(%arg0: i32) -> (i32, i32) {
    %c0_i32 = arith.constant 0 : i32
    %c0_i32_0 = arith.constant 0 : i32
    %c0_i32_1 = arith.constant 0 : i32
    return %c0_i32, %c0_i32_0 : i32, i32
  }
  func.func @transform_6(%arg0: i32) -> (i32, i32) {
    %c0_i32 = arith.constant 0 : i32
    %c0_i32_0 = arith.constant 0 : i32
    %c0_i32_1 = arith.constant 0 : i32
    return %c0_i32, %c0_i32_0 : i32, i32
  }
  func.func @transform_7(%arg0: i32) -> (i32, i32) {
    %c0_i32 = arith.constant 0 : i32
    %c0_i32_0 = arith.constant 0 : i32
    %c0_i32_1 = arith.constant 0 : i32
    return %c0_i32, %c0_i32_0 : i32, i32
  }
  func.func @transform_8(%arg0: i32) -> (i32, i32) {
    %c0_i32 = arith.constant 0 : i32
    %c0_i32_0 = arith.constant 0 : i32
    %c0_i32_1 = arith.constant 0 : i32
    return %c0_i32, %c0_i32_0 : i32, i32
  }
  func.func @transform_9(%arg0: i32) -> (i32, i32) {
    %c0_i32 = arith.constant 0 : i32
    %c0_i32_0 = arith.constant 0 : i32
    %c0_i32_1 = arith.constant 0 : i32
    return %c0_i32, %c0_i32_0 : i32, i32
  }
  func.func @transform_10(%arg0: i32) -> (i32, i32) {
    %c0_i32 = arith.constant 0 : i32
    %c0_i32_0 = arith.constant 0 : i32
    %c0_i32_1 = arith.constant 0 : i32
    return %c0_i32, %c0_i32_0 : i32, i32
  }
  func.func @transform_11(%arg0: i32) -> (i32, i32) {
    %c0_i32 = arith.constant 0 : i32
    %c0_i32_0 = arith.constant 0 : i32
    %c0_i32_1 = arith.constant 0 : i32
    return %c0_i32, %c0_i32_0 : i32, i32
  }
  func.func @transform_12(%arg0: i32) -> (i32, i32) {
    %c0_i32 = arith.constant 0 : i32
    %c0_i32_0 = arith.constant 0 : i32
    %c0_i32_1 = arith.constant 0 : i32
    return %c0_i32, %c0_i32_0 : i32, i32
  }
  func.func @transform_13(%arg0: i32) -> (i32, i32) {
    %c0_i32 = arith.constant 0 : i32
    %c0_i32_0 = arith.constant 0 : i32
    %c0_i32_1 = arith.constant 0 : i32
    return %c0_i32, %c0_i32_0 : i32, i32
  }
  func.func @transform_14(%arg0: i32) -> (i32, i32) {
    %c0_i32 = arith.constant 0 : i32
    %c0_i32_0 = arith.constant 0 : i32
    %c0_i32_1 = arith.constant 0 : i32
    return %c0_i32, %c0_i32_0 : i32, i32
  }
  func.func @transform_15(%arg0: i32) -> (i32, i32) {
    %c0_i32 = arith.constant 0 : i32
    %c0_i32_0 = arith.constant 0 : i32
    %c0_i32_1 = arith.constant 0 : i32
    return %c0_i32, %c0_i32_0 : i32, i32
  }
  func.func @transform_16(%arg0: i32) -> (i32, i32, i32) {
    %c0_i32 = arith.constant 0 : i32
    %c0_i32_0 = arith.constant 0 : i32
    %c0_i32_1 = arith.constant 0 : i32
    return %arg0, %c0_i32, %c0_i32_0 : i32, i32, i32
  }
}

</mosaic_0001>

<llo_original>
// kernel: tpu_custom_call.1
$region0: #{tpu_custom_call.1}
  #allocation0 [shape = 'u32[]', space=smem, size = 0x4, offset = 0x4, fixed_abs, tag = 'smem constant byte address 0x4 - core index']
  #allocation1 [shape = 'u32[72,128]{1,0:T(1,128)}', space=vmem, size = 0x9000, scoped, tag = 'internal scratch']
  #allocation2 [shape = 'f32[64,256]{1,0:T(8,128)}', space=vmem, size = 0x10000, scoped, tag = 'scratch operand']
  %s0 = inlined_call_operand.hbm [shape: f32[4,16,256], index: 0, kind: input, shape index: {}]
  %s1 = inlined_call_operand.hbm [shape: f32[4,1,256], index: 1, kind: input, shape index: {}]
  %s2 = inlined_call_operand.hbm [shape: f32[256,768], index: 2, kind: input, shape index: {}]
  %s3 = inlined_call_operand.hbm [shape: f32[1,768], index: 3, kind: input, shape index: {}]
  %s4 = inlined_call_operand.hbm [shape: f32[256,256], index: 4, kind: input, shape index: {}]
  %s5 = inlined_call_operand.vmem [shape: f32[1,256], index: 5, kind: input, shape index: {}]
  %s6 = inlined_call_operand.hbm [shape: f32[1,256], index: 6, kind: input, shape index: {}]
  %s7 = inlined_call_operand.hbm [shape: f32[1,256], index: 7, kind: input, shape index: {}]
  %s8 = inlined_call_operand.hbm [shape: f32[1,256], index: 8, kind: input, shape index: {}]
  %s9 = inlined_call_operand.vmem [shape: f32[1,256], index: 9, kind: input, shape index: {}]
  %s10 = inlined_call_operand.hbm [shape: f32[1,256], index: 10, kind: input, shape index: {}]
  %s11 = inlined_call_operand.vmem [shape: f32[1,256], index: 11, kind: input, shape index: {}]
  %s12 = inlined_call_operand.hbm [shape: f32[256,512], index: 12, kind: input, shape index: {}]
  %s13 = inlined_call_operand.vmem [shape: f32[1,512], index: 13, kind: input, shape index: {}]
  %s14 = inlined_call_operand.hbm [shape: f32[512,256], index: 14, kind: input, shape index: {}]
  %s15 = inlined_call_operand.vmem [shape: f32[1,256], index: 15, kind: input, shape index: {}]
  %s16 = inlined_call_operand.hbm [shape: f32[4,16,256], index: 16, kind: output, shape index: {}]
  %s17 = sld [smem:[#allocation0]]
  $region118: #{tpu_custom_call.1} parent=0
    _
  %s19 = ssub.s32 1, %s17
  %s20 = scalar_select 0, %s19, %s17
  $region1: #{tpu_custom_call.1} parent=0
    #allocation3 [shape = 'u8[65536]{0}', space=vmem, size = 0x10000, scoped, tag = 'input window, operand 0, single buffered']
    #allocation4 [shape = 's32[1]{0}', space=sflag, size = 0x4, scoped, tag = 'scoped memory for tpu_custom_call.1']
    #allocation5 [shape = 's32[1]{0}', space=sflag, size = 0x4, scoped, tag = 'scoped memory for tpu_custom_call.1']
    #allocation6 [shape = 'u8[4096]{0}', space=vmem, size = 0x1000, scoped, tag = 'input window, operand 1, single buffered']
    #allocation7 [shape = 's32[1]{0}', space=sflag, size = 0x4, scoped, tag = 'scoped memory for tpu_custom_call.1']
    #allocation8 [shape = 'u8[786432]{0}', space=vmem, size = 0xc0000, scoped, tag = 'input window, operand 2, single buffered']
    #allocation9 [shape = 'u8[3072]{0}', space=vmem, size = 0xc00, scoped, tag = 'input window, operand 3, single buffered']
    #allocation10 [shape = 's32[1]{0}', space=sflag, size = 0x4, scoped, tag = 'scoped memory for tpu_custom_call.1']
    #allocation11 [shape = 'u8[262144]{0}', space=vmem, size = 0x40000, scoped, tag = 'input window, operand 4, single buffered']
    #allocation12 [shape = 'u8[1024]{0}', space=vmem, size = 0x400, scoped, tag = 'input window, operand 6, single buffered']
    #allocation13 [shape = 's32[1]{0}', space=sflag, size = 0x4, scoped, tag = 'scoped memory for tpu_custom_call.1']
    #allocation14 [shape = 'u8[1024]{0}', space=vmem, size = 0x400, scoped, tag = 'input window, operand 7, single buffered']
    #allocation15 [shape = 'u8[1024]{0}', space=vmem, size = 0x400, scoped, tag = 'input window, operand 8, single buffered']
    #allocation16 [shape = 's32[1]{0}', space=sflag, size = 0x4, scoped, tag = 'scoped memory for tpu_custom_call.1']
    #allocation17 [shape = 'u8[1024]{0}', space=vmem, size = 0x400, scoped, tag = 'input window, operand 10, single buffered']
    #allocation18 [shape = 'u8[524288]{0}', space=vmem, size = 0x80000, scoped, tag = 'input window, operand 12, single buffered']
    #allocation19 [shape = 's32[1]{0}', space=sflag, size = 0x4, scoped, tag = 'scoped memory for tpu_custom_call.1']
    #allocation20 [shape = 'u8[524288]{0}', space=vmem, size = 0x80000, scoped, tag = 'input window, operand 14, single buffered']
    #allocation21 [shape = 'u8[65536]{0}', space=vmem, size = 0x10000, scoped, tag = 'output window, operand 0, single buffered']
    %21 = vsyncpa [#allocation4], 0
    %22 = vsyncpa [#allocation7], 0
    %23 = vsyncpa [#allocation10], 0
    %24 = vsyncpa [#allocation13], 0
    %25 = vsyncpa [#allocation16], 0
    %26 = vsyncpa [#allocation19], 0
    %27 = vsyncpa [#allocation5], 0
    // Predicated region
    $region2: #{tpu_custom_call.1} parent=1 // pred_check
      _
    $region3: #{tpu_custom_call.1} parent=1 // pred_check_branch
      %29 = sbr.rel (0) target = $region5
    $region4: #{tpu_custom_call.1} parent=1 // pred_region
      %31 = vsyncadd [#allocation4], 0
      %s32 = sshll.u32 %s0, 4
      %s33 = int_to_ptr.hbm [resolvable:$true] %s32
      %s34 = sshll.u32 [#allocation3], 4
      %s35 = int_to_ptr.vmem [resolvable:$true] %s34
      %40 = dma.hbm_to_vmem [thread:$0]  %s33, 2048, %s35, [#allocation4], 256, 256, 16
    $region5: #{tpu_custom_call.1} parent=1 // pred_fallthru
      _
    // Predicated region
    $region6: #{tpu_custom_call.1} parent=1 // pred_check
      _
    $region7: #{tpu_custom_call.1} parent=1 // pred_check_branch
      %42 = sbr.rel (0) target = $region9
    $region8: #{tpu_custom_call.1} parent=1 // pred_region
      %44 = vsyncadd [#allocation7], 0
      %s45 = sshll.u32 %s1, 4
      %s46 = int_to_ptr.hbm [resolvable:$true] %s45
      %s47 = sshll.u32 [#allocation6], 4
      %s48 = int_to_ptr.vmem [resolvable:$true] %s47
      %53 = dma.hbm_to_vmem [thread:$0]  %s46, 128, %s48, [#allocation7], 32, 32, 2
    $region9: #{tpu_custom_call.1} parent=1 // pred_fallthru
      _
    // Predicated region
    $region10: #{tpu_custom_call.1} parent=1 // pred_check
      _
    $region11: #{tpu_custom_call.1} parent=1 // pred_check_branch
      %55 = sbr.rel (0) target = $region13
    $region12: #{tpu_custom_call.1} parent=1 // pred_region
      %57 = vsyncadd [#allocation7], 0
      %s58 = sshll.u32 %s2, 4
      %s59 = int_to_ptr.hbm [resolvable:$true] %s58
      %s60 = sshll.u32 [#allocation8], 4
      %s61 = int_to_ptr.vmem [resolvable:$true] %s60
      %66 = dma.hbm_to_vmem [thread:$0]  %s59, 24576, %s61, [#allocation7], 768, 768, 48
    $region13: #{tpu_custom_call.1} parent=1 // pred_fallthru
      _
    // Predicated region
    $region14: #{tpu_custom_call.1} parent=1 // pred_check
      _
    $region15: #{tpu_custom_call.1} parent=1 // pred_check_branch
      %68 = sbr.rel (0) target = $region17
    $region16: #{tpu_custom_call.1} parent=1 // pred_region
      %70 = vsyncadd [#allocation10], 0
      %s72 = sshll.u32 %s3, 4
      %s73 = int_to_ptr.hbm [resolvable:$true] %s72
      %s74 = sshll.u32 [#allocation9], 4
      %s75 = int_to_ptr.vmem [resolvable:$true] %s74
      %77 = dma.hbm_to_vmem [thread:$0]  %s73, 96, %s75, [#allocation10]
    $region17: #{tpu_custom_call.1} parent=1 // pred_fallthru
      _
    // Predicated region
    $region18: #{tpu_custom_call.1} parent=1 // pred_check
      _
    $region19: #{tpu_custom_call.1} parent=1 // pred_check_branch
      %79 = sbr.rel (0) target = $region21
    $region20: #{tpu_custom_call.1} parent=1 // pred_region
      %81 = vsyncadd [#allocation10], 0
      %s82 = sshll.u32 %s4, 4
      %s83 = int_to_ptr.hbm [resolvable:$true] %s82
      %s84 = sshll.u32 [#allocation11], 4
      %s85 = int_to_ptr.vmem [resolvable:$true] %s84
      %90 = dma.hbm_to_vmem [thread:$0]  %s83, 8192, %s85, [#allocation10], 256, 256, 16
    $region21: #{tpu_custom_call.1} parent=1 // pred_fallthru
      _
    // Predicated region
    $region22: #{tpu_custom_call.1} parent=1 // pred_check
      _
    $region23: #{tpu_custom_call.1} parent=1 // pred_check_branch
      %92 = sbr.rel (0) target = $region25
    $region24: #{tpu_custom_call.1} parent=1 // pred_region
      _
    $region25: #{tpu_custom_call.1} parent=1 // pred_fallthru
      _
    // Predicated region
    $region26: #{tpu_custom_call.1} parent=1 // pred_check
      _
    $region27: #{tpu_custom_call.1} parent=1 // pred_check_branch
      %94 = sbr.rel (0) target = $region29
    $region28: #{tpu_custom_call.1} parent=1 // pred_region
      %96 = vsyncadd [#allocation13], 0
      %s98 = sshll.u32 %s6, 4
      %s99 = int_to_ptr.hbm [resolvable:$true] %s98
      %s100 = sshll.u32 [#allocation12], 4
      %s101 = int_to_ptr.vmem [resolvable:$true] %s100
      %103 = dma.hbm_to_vmem [thread:$0]  %s99, 32, %s101, [#allocation13]
    $region29: #{tpu_custom_call.1} parent=1 // pred_fallthru
      _
    // Predicated region
    $region30: #{tpu_custom_call.1} parent=1 // pred_check
      _
    $region31: #{tpu_custom_call.1} parent=1 // pred_check_branch
      %105 = sbr.rel (0) target = $region33
    $region32: #{tpu_custom_call.1} parent=1 // pred_region
      %107 = vsyncadd [#allocation13], 0
      %s109 = sshll.u32 %s7, 4
      %s110 = int_to_ptr.hbm [resolvable:$true] %s109
      %s111 = sshll.u32 [#allocation14], 4
      %s112 = int_to_ptr.vmem [resolvable:$true] %s111
      %114 = dma.hbm_to_vmem [thread:$0]  %s110, 32, %s112, [#allocation13]
    $region33: #{tpu_custom_call.1} parent=1 // pred_fallthru
      _
    // Predicated region
    $region34: #{tpu_custom_call.1} parent=1 // pred_check
      _
    $region35: #{tpu_custom_call.1} parent=1 // pred_check_branch
      %116 = sbr.rel (0) target = $region37
    $region36: #{tpu_custom_call.1} parent=1 // pred_region
      %118 = vsyncadd [#allocation16], 0
      %s120 = sshll.u32 %s8, 4
      %s121 = int_to_ptr.hbm [resolvable:$true] %s120
      %s122 = sshll.u32 [#allocation15], 4
      %s123 = int_to_ptr.vmem [resolvable:$true] %s122
      %125 = dma.hbm_to_vmem [thread:$0]  %s121, 32, %s123, [#allocation16]
    $region37: #{tpu_custom_call.1} parent=1 // pred_fallthru
      _
    // Predicated region
    $region38: #{tpu_custom_call.1} parent=1 // pred_check
      _
    $region39: #{tpu_custom_call.1} parent=1 // pred_check_branch
      %127 = sbr.rel (0) target = $region41
    $region40: #{tpu_custom_call.1} parent=1 // pred_region
      _
    $region41: #{tpu_custom_call.1} parent=1 // pred_fallthru
      _
    // Predicated region
    $region42: #{tpu_custom_call.1} parent=1 // pred_check
      _
    $region43: #{tpu_custom_call.1} parent=1 // pred_check_branch
      %129 = sbr.rel (0) target = $region45
    $region44: #{tpu_custom_call.1} parent=1 // pred_region
      %131 = vsyncadd [#allocation16], 0
      %s133 = sshll.u32 %s10, 4
      %s134 = int_to_ptr.hbm [resolvable:$true] %s133
      %s135 = sshll.u32 [#allocation17], 4
      %s136 = int_to_ptr.vmem [resolvable:$true] %s135
      %138 = dma.hbm_to_vmem [thread:$0]  %s134, 32, %s136, [#allocation16]
    $region45: #{tpu_custom_call.1} parent=1 // pred_fallthru
      _
    // Predicated region
    $region46: #{tpu_custom_call.1} parent=1 // pred_check
      _
    $region47: #{tpu_custom_call.1} parent=1 // pred_check_branch
      %140 = sbr.rel (0) target = $region49
    $region48: #{tpu_custom_call.1} parent=1 // pred_region
      _
    $region49: #{tpu_custom_call.1} parent=1 // pred_fallthru
      _
    // Predicated region
    $region50: #{tpu_custom_call.1} parent=1 // pred_check
      _
    $region51: #{tpu_custom_call.1} parent=1 // pred_check_branch
      %142 = sbr.rel (0) target = $region53
    $region52: #{tpu_custom_call.1} parent=1 // pred_region
      %144 = vsyncadd [#allocation19], 0
      %s145 = sshll.u32 %s12, 4
      %s146 = int_to_ptr.hbm [resolvable:$true] %s145
      %s147 = sshll.u32 [#allocation18], 4
      %s148 = int_to_ptr.vmem [resolvable:$true] %s147
      %153 = dma.hbm_to_vmem [thread:$0]  %s146, 16384, %s148, [#allocation19], 512, 512, 32
    $region53: #{tpu_custom_call.1} parent=1 // pred_fallthru
      _
    // Predicated region
    $region54: #{tpu_custom_call.1} parent=1 // pred_check
      _
    $region55: #{tpu_custom_call.1} parent=1 // pred_check_branch
      %155 = sbr.rel (0) target = $region57
    $region56: #{tpu_custom_call.1} parent=1 // pred_region
      _
    $region57: #{tpu_custom_call.1} parent=1 // pred_fallthru
      _
    // Predicated region
    $region58: #{tpu_custom_call.1} parent=1 // pred_check
      _
    $region59: #{tpu_custom_call.1} parent=1 // pred_check_branch
      %157 = sbr.rel (0) target = $region61
    $region60: #{tpu_custom_call.1} parent=1 // pred_region
      %159 = vsyncadd [#allocation19], 0
      %s160 = sshll.u32 %s14, 4
      %s161 = int_to_ptr.hbm [resolvable:$true] %s160
      %s162 = sshll.u32 [#allocation20], 4
      %s163 = int_to_ptr.vmem [resolvable:$true] %s162
      %168 = dma.hbm_to_vmem [thread:$0]  %s161, 16384, %s163, [#allocation19], 256, 256, 16
    $region61: #{tpu_custom_call.1} parent=1 // pred_fallthru
      _
    // Predicated region
    $region62: #{tpu_custom_call.1} parent=1 // pred_check
      _
    $region63: #{tpu_custom_call.1} parent=1 // pred_check_branch
      %170 = sbr.rel (0) target = $region65
    $region64: #{tpu_custom_call.1} parent=1 // pred_region
      _
    $region65: #{tpu_custom_call.1} parent=1 // pred_fallthru
      _
    // Predicated region
    $region66: #{tpu_custom_call.1} parent=1 // pred_check
      _
    $region67: #{tpu_custom_call.1} parent=1 // pred_check_branch
      %172 = sbr.rel (0) target = $region69
    $region68: #{tpu_custom_call.1} parent=1 // pred_region
      %174 = dma.done [#allocation4], 2048
    $region69: #{tpu_custom_call.1} parent=1 // pred_fallthru
      _
    // Predicated region
    $region70: #{tpu_custom_call.1} parent=1 // pred_check
      _
    $region71: #{tpu_custom_call.1} parent=1 // pred_check_branch
      %176 = sbr.rel (0) target = $region73
    $region72: #{tpu_custom_call.1} parent=1 // pred_region
      %178 = dma.done [#allocation7], 128
    $region73: #{tpu_custom_call.1} parent=1 // pred_fallthru
      _
    // Predicated region
    $region74: #{tpu_custom_call.1} parent=1 // pred_check
      _
    $region75: #{tpu_custom_call.1} parent=1 // pred_check_branch
      %180 = sbr.rel (0) target = $region77
    $region76: #{tpu_custom_call.1} parent=1 // pred_region
      %182 = dma.done [#allocation7], 24576
    $region77: #{tpu_custom_call.1} parent=1 // pred_fallthru
      _
    // Predicated region
    $region78: #{tpu_custom_call.1} parent=1 // pred_check
      _
    $region79: #{tpu_custom_call.1} parent=1 // pred_check_branch
      %184 = sbr.rel (0) target = $region81
    $region80: #{tpu_custom_call.1} parent=1 // pred_region
      %186 = dma.done [#allocation10], 96
    $region81: #{tpu_custom_call.1} parent=1 // pred_fallthru
      _
    // Predicated region
    $region82: #{tpu_custom_call.1} parent=1 // pred_check
      _
    $region83: #{tpu_custom_call.1} parent=1 // pred_check_branch
      %188 = sbr.rel (0) target = $region85
    $region84: #{tpu_custom_call.1} parent=1 // pred_region
      %190 = dma.done [#allocation10], 8192
    $region85: #{tpu_custom_call.1} parent=1 // pred_fallthru
      _
    // Predicated region
    $region86: #{tpu_custom_call.1} parent=1 // pred_check
      _
    $region87: #{tpu_custom_call.1} parent=1 // pred_check_branch
      %192 = sbr.rel (0) target = $region89
    $region88: #{tpu_custom_call.1} parent=1 // pred_region
      %194 = dma.done [#allocation13], 32
    $region89: #{tpu_custom_call.1} parent=1 // pred_fallthru
      _
    // Predicated region
    $region90: #{tpu_custom_call.1} parent=1 // pred_check
      _
    $region91: #{tpu_custom_call.1} parent=1 // pred_check_branch
      %196 = sbr.rel (0) target = $region93
    $region92: #{tpu_custom_call.1} parent=1 // pred_region
      %198 = dma.done [#allocation13], 32
    $region93: #{tpu_custom_call.1} parent=1 // pred_fallthru
      _
    // Predicated region
    $region94: #{tpu_custom_call.1} parent=1 // pred_check
      _
    $region95: #{tpu_custom_call.1} parent=1 // pred_check_branch
      %200 = sbr.rel (0) target = $region97
    $region96: #{tpu_custom_call.1} parent=1 // pred_region
      %202 = dma.done [#allocation16], 32
    $region97: #{tpu_custom_call.1} parent=1 // pred_fallthru
      _
    // Predicated region
    $region98: #{tpu_custom_call.1} parent=1 // pred_check
      _
    $region99: #{tpu_custom_call.1} parent=1 // pred_check_branch
      %204 = sbr.rel (0) target = $region101
    $region100: #{tpu_custom_call.1} parent=1 // pred_region
      %206 = dma.done [#allocation16], 32
    $region101: #{tpu_custom_call.1} parent=1 // pred_fallthru
      _
    // Predicated region
    $region102: #{tpu_custom_call.1} parent=1 // pred_check
      _
    $region103: #{tpu_custom_call.1} parent=1 // pred_check_branch
      %208 = sbr.rel (0) target = $region105
    $region104: #{tpu_custom_call.1} parent=1 // pred_region
      %210 = dma.done [#allocation19], 16384
    $region105: #{tpu_custom_call.1} parent=1 // pred_fallthru
      _
    // Predicated region
    $region106: #{tpu_custom_call.1} parent=1 // pred_check
      _
    $region107: #{tpu_custom_call.1} parent=1 // pred_check_branch
      %212 = sbr.rel (0) target = $region109
    $region108: #{tpu_custom_call.1} parent=1 // pred_region
      %214 = dma.done [#allocation19], 16384
    $region109: #{tpu_custom_call.1} parent=1 // pred_fallthru
      _
    %v215 = vld [vmem:[#allocation3] sm:$0xff]
    %v216 = vld [vmem:[#allocation3 + $0x8] sm:$0xff]
    %v217 = vld [vmem:[#allocation3 + $0x10] sm:$0xff]
    %v218 = vld [vmem:[#allocation3 + $0x18] sm:$0xff]
    %v219 = vld [vmem:[#allocation3 + $0x20] sm:$0xff]
    %v220 = vld [vmem:[#allocation3 + $0x28] sm:$0xff]
    %v221 = vld [vmem:[#allocation3 + $0x30] sm:$0xff]
    %v222 = vld [vmem:[#allocation3 + $0x38] sm:$0xff]
    %v223 = vld [vmem:[#allocation3 + $0x40] sm:$0xff]
    %v224 = vld [vmem:[#allocation3 + $0x48] sm:$0xff]
    %v225 = vld [vmem:[#allocation3 + $0x50] sm:$0xff]
    %v226 = vld [vmem:[#allocation3 + $0x58] sm:$0xff]
    %v227 = vld [vmem:[#allocation3 + $0x60] sm:$0xff]
    %v228 = vld [vmem:[#allocation3 + $0x68] sm:$0xff]
    %v229 = vld [vmem:[#allocation3 + $0x70] sm:$0xff]
    %v230 = vld [vmem:[#allocation3 + $0x78] sm:$0xff]
    %v231 = vld [vmem:[#allocation8] sm:$0xff]
    %v232 = vld [vmem:[#allocation8 + $0x8] sm:$0xff]
    %v233 = vld [vmem:[#allocation8 + $0x10] sm:$0xff]
    %v234 = vld [vmem:[#allocation8 + $0x18] sm:$0xff]
    %v235 = vld [vmem:[#allocation8 + $0x20] sm:$0xff]
    %v236 = vld [vmem:[#allocation8 + $0x28] sm:$0xff]
    %v237 = vld [vmem:[#allocation8 + $0x30] sm:$0xff]
    %v238 = vld [vmem:[#allocation8 + $0x38] sm:$0xff]
    %v239 = vld [vmem:[#allocation8 + $0x40] sm:$0xff]
    %v240 = vld [vmem:[#allocation8 + $0x48] sm:$0xff]
    %v241 = vld [vmem:[#allocation8 + $0x50] sm:$0xff]
    %v242 = vld [vmem:[#allocation8 + $0x58] sm:$0xff]
    %v243 = vld [vmem:[#allocation8 + $0x60] sm:$0xff]
    %v244 = vld [vmem:[#allocation8 + $0x68] sm:$0xff]
    %v245 = vld [vmem:[#allocation8 + $0x70] sm:$0xff]
    %v246 = vld [vmem:[#allocation8 + $0x78] sm:$0xff]
    %v247 = vld [vmem:[#allocation8 + $0x80] sm:$0xff]
    %v248 = vld [vmem:[#allocation8 + $0x88] sm:$0xff]
    %v249 = vld [vmem:[#allocation8 + $0x90] sm:$0xff]
    %v250 = vld [vmem:[#allocation8 + $0x98] sm:$0xff]
    %v251 = vld [vmem:[#allocation8 + $0xa0] sm:$0xff]
    %v252 = vld [vmem:[#allocation8 + $0xa8] sm:$0xff]
    %v253 = vld [vmem:[#allocation8 + $0xb0] sm:$0xff]
    %v254 = vld [vmem:[#allocation8 + $0xb8] sm:$0xff]
    %v255 = vld [vmem:[#allocation8 + $0xc0] sm:$0xff]
    %v256 = vld [vmem:[#allocation8 + $0xc8] sm:$0xff]
    %v257 = vld [vmem:[#allocation8 + $0xd0] sm:$0xff]
    %v258 = vld [vmem:[#allocation8 + $0xd8] sm:$0xff]
    %v259 = vld [vmem:[#allocation8 + $0xe0] sm:$0xff]
    %v260 = vld [vmem:[#allocation8 + $0xe8] sm:$0xff]
    %v261 = vld [vmem:[#allocation8 + $0xf0] sm:$0xff]
    %v262 = vld [vmem:[#allocation8 + $0xf8] sm:$0xff]
    %v263 = vld [vmem:[#allocation8 + $0x100] sm:$0xff]
    %v264 = vld [vmem:[#allocation8 + $0x108] sm:$0xff]
    %v265 = vld [vmem:[#allocation8 + $0x110] sm:$0xff]
    %v266 = vld [vmem:[#allocation8 + $0x118] sm:$0xff]
    %v267 = vld [vmem:[#allocation8 + $0x120] sm:$0xff]
    %v268 = vld [vmem:[#allocation8 + $0x128] sm:$0xff]
    %v269 = vld [vmem:[#allocation8 + $0x130] sm:$0xff]
    %v270 = vld [vmem:[#allocation8 + $0x138] sm:$0xff]
    %v271 = vld [vmem:[#allocation8 + $0x140] sm:$0xff]
    %v272 = vld [vmem:[#allocation8 + $0x148] sm:$0xff]
    %v273 = vld [vmem:[#allocation8 + $0x150] sm:$0xff]
    %v274 = vld [vmem:[#allocation8 + $0x158] sm:$0xff]
    %v275 = vld [vmem:[#allocation8 + $0x160] sm:$0xff]
    %v276 = vld [vmem:[#allocation8 + $0x168] sm:$0xff]
    %v277 = vld [vmem:[#allocation8 + $0x170] sm:$0xff]
    %v278 = vld [vmem:[#allocation8 + $0x178] sm:$0xff]
    %v279 = vld [vmem:[#allocation8 + $0x180] sm:$0xff]
    %v280 = vld [vmem:[#allocation8 + $0x188] sm:$0xff]
    %v281 = vld [vmem:[#allocation8 + $0x190] sm:$0xff]
    %v282 = vld [vmem:[#allocation8 + $0x198] sm:$0xff]
    %v283 = vld [vmem:[#allocation8 + $0x1a0] sm:$0xff]
    %v284 = vld [vmem:[#allocation8 + $0x1a8] sm:$0xff]
    %v285 = vld [vmem:[#allocation8 + $0x1b0] sm:$0xff]
    %v286 = vld [vmem:[#allocation8 + $0x1b8] sm:$0xff]
    %v287 = vld [vmem:[#allocation8 + $0x1c0] sm:$0xff]
    %v288 = vld [vmem:[#allocation8 + $0x1c8] sm:$0xff]
    %v289 = vld [vmem:[#allocation8 + $0x1d0] sm:$0xff]
    %v290 = vld [vmem:[#allocation8 + $0x1d8] sm:$0xff]
    %v291 = vld [vmem:[#allocation8 + $0x1e0] sm:$0xff]
    %v292 = vld [vmem:[#allocation8 + $0x1e8] sm:$0xff]
    %v293 = vld [vmem:[#allocation8 + $0x1f0] sm:$0xff]
    %v294 = vld [vmem:[#allocation8 + $0x1f8] sm:$0xff]
    %v295 = vld [vmem:[#allocation8 + $0x200] sm:$0xff]
    %v296 = vld [vmem:[#allocation8 + $0x208] sm:$0xff]
    %v297 = vld [vmem:[#allocation8 + $0x210] sm:$0xff]
    %v298 = vld [vmem:[#allocation8 + $0x218] sm:$0xff]
    %v299 = vld [vmem:[#allocation8 + $0x220] sm:$0xff]
    %v300 = vld [vmem:[#allocation8 + $0x228] sm:$0xff]
    %v301 = vld [vmem:[#allocation8 + $0x230] sm:$0xff]
    %v302 = vld [vmem:[#allocation8 + $0x238] sm:$0xff]
    %v303 = vld [vmem:[#allocation8 + $0x240] sm:$0xff]
    %v304 = vld [vmem:[#allocation8 + $0x248] sm:$0xff]
    %v305 = vld [vmem:[#allocation8 + $0x250] sm:$0xff]
    %v306 = vld [vmem:[#allocation8 + $0x258] sm:$0xff]
    %v307 = vld [vmem:[#allocation8 + $0x260] sm:$0xff]
    %v308 = vld [vmem:[#allocation8 + $0x268] sm:$0xff]
    %v309 = vld [vmem:[#allocation8 + $0x270] sm:$0xff]
    %v310 = vld [vmem:[#allocation8 + $0x278] sm:$0xff]
    %v311 = vld [vmem:[#allocation8 + $0x280] sm:$0xff]
    %v312 = vld [vmem:[#allocation8 + $0x288] sm:$0xff]
    %v313 = vld [vmem:[#allocation8 + $0x290] sm:$0xff]
    %v314 = vld [vmem:[#allocation8 + $0x298] sm:$0xff]
    %v315 = vld [vmem:[#allocation8 + $0x2a0] sm:$0xff]
    %v316 = vld [vmem:[#allocation8 + $0x2a8] sm:$0xff]
    %v317 = vld [vmem:[#allocation8 + $0x2b0] sm:$0xff]
    %v318 = vld [vmem:[#allocation8 + $0x2b8] sm:$0xff]
    %v319 = vld [vmem:[#allocation8 + $0x2c0] sm:$0xff]
    %v320 = vld [vmem:[#allocation8 + $0x2c8] sm:$0xff]
    %v321 = vld [vmem:[#allocation8 + $0x2d0] sm:$0xff]
    %v322 = vld [vmem:[#allocation8 + $0x2d8] sm:$0xff]
    %v323 = vld [vmem:[#allocation8 + $0x2e0] sm:$0xff]
    %v324 = vld [vmem:[#allocation8 + $0x2e8] sm:$0xff]
    %v325 = vld [vmem:[#allocation8 + $0x2f0] sm:$0xff]
    %v326 = vld [vmem:[#allocation8 + $0x2f8] sm:$0xff]
    %v327 = vld [vmem:[#allocation8 + $0x300] sm:$0xff]
    %v328 = vld [vmem:[#allocation8 + $0x308] sm:$0xff]
    %v329 = vld [vmem:[#allocation8 + $0x310] sm:$0xff]
    %v330 = vld [vmem:[#allocation8 + $0x318] sm:$0xff]
    %v331 = vld [vmem:[#allocation8 + $0x320] sm:$0xff]
    %v332 = vld [vmem:[#allocation8 + $0x328] sm:$0xff]
    %v333 = vld [vmem:[#allocation8 + $0x330] sm:$0xff]
    %v334 = vld [vmem:[#allocation8 + $0x338] sm:$0xff]
    %v335 = vld [vmem:[#allocation8 + $0x340] sm:$0xff]
    %v336 = vld [vmem:[#allocation8 + $0x348] sm:$0xff]
    %v337 = vld [vmem:[#allocation8 + $0x350] sm:$0xff]
    %v338 = vld [vmem:[#allocation8 + $0x358] sm:$0xff]
    %v339 = vld [vmem:[#allocation8 + $0x360] sm:$0xff]
    %v340 = vld [vmem:[#allocation8 + $0x368] sm:$0xff]
    %v341 = vld [vmem:[#allocation8 + $0x370] sm:$0xff]
    %v342 = vld [vmem:[#allocation8 + $0x378] sm:$0xff]
    %v343 = vld [vmem:[#allocation8 + $0x380] sm:$0xff]
    %v344 = vld [vmem:[#allocation8 + $0x388] sm:$0xff]
    %v345 = vld [vmem:[#allocation8 + $0x390] sm:$0xff]
    %v346 = vld [vmem:[#allocation8 + $0x398] sm:$0xff]
    %v347 = vld [vmem:[#allocation8 + $0x3a0] sm:$0xff]
    %v348 = vld [vmem:[#allocation8 + $0x3a8] sm:$0xff]
    %v349 = vld [vmem:[#allocation8 + $0x3b0] sm:$0xff]
    %v350 = vld [vmem:[#allocation8 + $0x3b8] sm:$0xff]
    %v351 = vld [vmem:[#allocation8 + $0x3c0] sm:$0xff]
    %v352 = vld [vmem:[#allocation8 + $0x3c8] sm:$0xff]
    %v353 = vld [vmem:[#allocation8 + $0x3d0] sm:$0xff]
    %v354 = vld [vmem:[#allocation8 + $0x3d8] sm:$0xff]
    %v355 = vld [vmem:[#allocation8 + $0x3e0] sm:$0xff]
    %v356 = vld [vmem:[#allocation8 + $0x3e8] sm:$0xff]
    %v357 = vld [vmem:[#allocation8 + $0x3f0] sm:$0xff]
    %v358 = vld [vmem:[#allocation8 + $0x3f8] sm:$0xff]
    %v359 = vld [vmem:[#allocation8 + $0x400] sm:$0xff]
    %v360 = vld [vmem:[#allocation8 + $0x408] sm:$0xff]
    %v361 = vld [vmem:[#allocation8 + $0x410] sm:$0xff]
    %v362 = vld [vmem:[#allocation8 + $0x418] sm:$0xff]
    %v363 = vld [vmem:[#allocation8 + $0x420] sm:$0xff]
    %v364 = vld [vmem:[#allocation8 + $0x428] sm:$0xff]
    %v365 = vld [vmem:[#allocation8 + $0x430] sm:$0xff]
    %v366 = vld [vmem:[#allocation8 + $0x438] sm:$0xff]
    %v367 = vld [vmem:[#allocation8 + $0x440] sm:$0xff]
    %v368 = vld [vmem:[#allocation8 + $0x448] sm:$0xff]
    %v369 = vld [vmem:[#allocation8 + $0x450] sm:$0xff]
    %v370 = vld [vmem:[#allocation8 + $0x458] sm:$0xff]
    %v371 = vld [vmem:[#allocation8 + $0x460] sm:$0xff]
    %v372 = vld [vmem:[#allocation8 + $0x468] sm:$0xff]
    %v373 = vld [vmem:[#allocation8 + $0x470] sm:$0xff]
    %v374 = vld [vmem:[#allocation8 + $0x478] sm:$0xff]
    %v375 = vld [vmem:[#allocation8 + $0x480] sm:$0xff]
    %v376 = vld [vmem:[#allocation8 + $0x488] sm:$0xff]
    %v377 = vld [vmem:[#allocation8 + $0x490] sm:$0xff]
    %v378 = vld [vmem:[#allocation8 + $0x498] sm:$0xff]
    %v379 = vld [vmem:[#allocation8 + $0x4a0] sm:$0xff]
    %v380 = vld [vmem:[#allocation8 + $0x4a8] sm:$0xff]
    %v381 = vld [vmem:[#allocation8 + $0x4b0] sm:$0xff]
    %v382 = vld [vmem:[#allocation8 + $0x4b8] sm:$0xff]
    %v383 = vld [vmem:[#allocation8 + $0x4c0] sm:$0xff]
    %v384 = vld [vmem:[#allocation8 + $0x4c8] sm:$0xff]
    %v385 = vld [vmem:[#allocation8 + $0x4d0] sm:$0xff]
    %v386 = vld [vmem:[#allocation8 + $0x4d8] sm:$0xff]
    %v387 = vld [vmem:[#allocation8 + $0x4e0] sm:$0xff]
    %v388 = vld [vmem:[#allocation8 + $0x4e8] sm:$0xff]
    %v389 = vld [vmem:[#allocation8 + $0x4f0] sm:$0xff]
    %v390 = vld [vmem:[#allocation8 + $0x4f8] sm:$0xff]
    %v391 = vld [vmem:[#allocation8 + $0x500] sm:$0xff]
    %v392 = vld [vmem:[#allocation8 + $0x508] sm:$0xff]
    %v393 = vld [vmem:[#allocation8 + $0x510] sm:$0xff]
    %v394 = vld [vmem:[#allocation8 + $0x518] sm:$0xff]
    %v395 = vld [vmem:[#allocation8 + $0x520] sm:$0xff]
    %v396 = vld [vmem:[#allocation8 + $0x528] sm:$0xff]
    %v397 = vld [vmem:[#allocation8 + $0x530] sm:$0xff]
    %v398 = vld [vmem:[#allocation8 + $0x538] sm:$0xff]
    %v399 = vld [vmem:[#allocation8 + $0x540] sm:$0xff]
    %v400 = vld [vmem:[#allocation8 + $0x548] sm:$0xff]
    %v401 = vld [vmem:[#allocation8 + $0x550] sm:$0xff]
    %v402 = vld [vmem:[#allocation8 + $0x558] sm:$0xff]
    %v403 = vld [vmem:[#allocation8 + $0x560] sm:$0xff]
    %v404 = vld [vmem:[#allocation8 + $0x568] sm:$0xff]
    %v405 = vld [vmem:[#allocation8 + $0x570] sm:$0xff]
    %v406 = vld [vmem:[#allocation8 + $0x578] sm:$0xff]
    %v407 = vld [vmem:[#allocation8 + $0x580] sm:$0xff]
    %v408 = vld [vmem:[#allocation8 + $0x588] sm:$0xff]
    %v409 = vld [vmem:[#allocation8 + $0x590] sm:$0xff]
    %v410 = vld [vmem:[#allocation8 + $0x598] sm:$0xff]
    %v411 = vld [vmem:[#allocation8 + $0x5a0] sm:$0xff]
    %v412 = vld [vmem:[#allocation8 + $0x5a8] sm:$0xff]
    %v413 = vld [vmem:[#allocation8 + $0x5b0] sm:$0xff]
    %v414 = vld [vmem:[#allocation8 + $0x5b8] sm:$0xff]
    %v415 = vld [vmem:[#allocation8 + $0x5c0] sm:$0xff]
    %v416 = vld [vmem:[#allocation8 + $0x5c8] sm:$0xff]
    %v417 = vld [vmem:[#allocation8 + $0x5d0] sm:$0xff]
    %v418 = vld [vmem:[#allocation8 + $0x5d8] sm:$0xff]
    %v419 = vld [vmem:[#allocation8 + $0x5e0] sm:$0xff]
    %v420 = vld [vmem:[#allocation8 + $0x5e8] sm:$0xff]
    %v421 = vld [vmem:[#allocation8 + $0x5f0] sm:$0xff]
    %v422 = vld [vmem:[#allocation8 + $0x5f8] sm:$0xff]
    %v423 = vld [vmem:[#allocation9] sm:$0x3f]
    %v425 = vperm.slane %v423, 0
    %v426 = vperm.slane %v423, 1
    %v427 = vperm.slane %v423, 2
    %v428 = vperm.slane %v423, 3
    %v429 = vperm.slane %v423, 4
    %v430 = vperm.slane %v423, 5
    %437 = vmatpush.msra.mxu0 %v321
    %438 = vmatpush.msra.mxu0 %v315
    %439 = vmatpush.msra.mxu0 %v309
    %440 = vmatpush.msra.mxu0 %v303
    %441 = vmatpush.msra.mxu0 %v297
    %442 = vmatpush.msra.mxu0 %v291
    %443 = vmatpush.msra.mxu0 %v285
    %444 = vmatpush.msra.mxu0 %v279
    %445 = vmatpush.msra.mxu0 %v273
    %446 = vmatpush.msra.mxu0 %v267
    %447 = vmatpush.msra.mxu0 %v261
    %448 = vmatpush.msra.mxu0 %v255
    %449 = vmatpush.msra.mxu0 %v249
    %450 = vmatpush.msra.mxu0 %v243
    %451 = vmatpush.msra.mxu0 %v237
    %452 = vmatpush.msra.mxu0 %v231
    %453 = vmatmul.f32.gmra.mxu0 %v215
    %v454 = vpop.f32.mrf.mxu0
    %v455 = vadd.f32 %v425, %v454
    %456 = vmatmul.f32.gmra.mxu0 %v217
    %v457 = vpop.f32.mrf.mxu0
    %v458 = vadd.f32 %v425, %v457
    %459 = vmatmul.f32.gmra.mxu0 %v219
    %v460 = vpop.f32.mrf.mxu0
    %v461 = vadd.f32 %v425, %v460
    %462 = vmatmul.f32.gmra.mxu0 %v221
    %v463 = vpop.f32.mrf.mxu0
    %v464 = vadd.f32 %v425, %v463
    %465 = vmatmul.f32.gmra.mxu0 %v223
    %v466 = vpop.f32.mrf.mxu0
    %v467 = vadd.f32 %v425, %v466
    %468 = vmatmul.f32.gmra.mxu0 %v225
    %v469 = vpop.f32.mrf.mxu0
    %v470 = vadd.f32 %v425, %v469
    %471 = vmatmul.f32.gmra.mxu0 %v227
    %v472 = vpop.f32.mrf.mxu0
    %v473 = vadd.f32 %v425, %v472
    %474 = vmatmul.f32.gmra.mxu0 %v229
    %v475 = vpop.f32.mrf.mxu0
    %v476 = vadd.f32 %v425, %v475
    %477 = vdwg.mxu0
    %478 = vmatpush.msra.mxu0 %v417
    %479 = vmatpush.msra.mxu0 %v411
    %480 = vmatpush.msra.mxu0 %v405
    %481 = vmatpush.msra.mxu0 %v399
    %482 = vmatpush.msra.mxu0 %v393
    %483 = vmatpush.msra.mxu0 %v387
    %484 = vmatpush.msra.mxu0 %v381
    %485 = vmatpush.msra.mxu0 %v375
    %486 = vmatpush.msra.mxu0 %v369
    %487 = vmatpush.msra.mxu0 %v363
    %488 = vmatpush.msra.mxu0 %v357
    %489 = vmatpush.msra.mxu0 %v351
    %490 = vmatpush.msra.mxu0 %v345
    %491 = vmatpush.msra.mxu0 %v339
    %492 = vmatpush.msra.mxu0 %v333
    %493 = vmatpush.msra.mxu0 %v327
    %494 = vmatmul.f32.gmra.mxu0 %v216
    %v495 = vpop.f32.mrf.mxu0
    %v496 = vadd.f32 %v455, %v495
    %497 = vmatmul.f32.gmra.mxu0 %v218
    %v498 = vpop.f32.mrf.mxu0
    %v499 = vadd.f32 %v458, %v498
    %500 = vmatmul.f32.gmra.mxu0 %v220
    %v501 = vpop.f32.mrf.mxu0
    %v502 = vadd.f32 %v461, %v501
    %503 = vmatmul.f32.gmra.mxu0 %v222
    %v504 = vpop.f32.mrf.mxu0
    %v505 = vadd.f32 %v464, %v504
    %506 = vmatmul.f32.gmra.mxu0 %v224
    %v507 = vpop.f32.mrf.mxu0
    %v508 = vadd.f32 %v467, %v507
    %509 = vmatmul.f32.gmra.mxu0 %v226
    %v510 = vpop.f32.mrf.mxu0
    %v511 = vadd.f32 %v470, %v510
    %512 = vmatmul.f32.gmra.mxu0 %v228
    %v513 = vpop.f32.mrf.mxu0
    %v514 = vadd.f32 %v473, %v513
    %515 = vmatmul.f32.gmra.mxu0 %v230
    %v516 = vpop.f32.mrf.mxu0
    %v517 = vadd.f32 %v476, %v516
    %518 = vdwg.mxu0
    %519 = vmatpush.msra.mxu0 %v322
    %520 = vmatpush.msra.mxu0 %v316
    %521 = vmatpush.msra.mxu0 %v310
    %522 = vmatpush.msra.mxu0 %v304
    %523 = vmatpush.msra.mxu0 %v298
    %524 = vmatpush.msra.mxu0 %v292
    %525 = vmatpush.msra.mxu0 %v286
    %526 = vmatpush.msra.mxu0 %v280
    %527 = vmatpush.msra.mxu0 %v274
    %528 = vmatpush.msra.mxu0 %v268
    %529 = vmatpush.msra.mxu0 %v262
    %530 = vmatpush.msra.mxu0 %v256
    %531 = vmatpush.msra.mxu0 %v250
    %532 = vmatpush.msra.mxu0 %v244
    %533 = vmatpush.msra.mxu0 %v238
    %534 = vmatpush.msra.mxu0 %v232
    %535 = vmatmul.f32.gmra.mxu0 %v215
    %v536 = vpop.f32.mrf.mxu0
    %v537 = vadd.f32 %v426, %v536
    %538 = vmatmul.f32.gmra.mxu0 %v217
    %v539 = vpop.f32.mrf.mxu0
    %v540 = vadd.f32 %v426, %v539
    %541 = vmatmul.f32.gmra.mxu0 %v219
    %v542 = vpop.f32.mrf.mxu0
    %v543 = vadd.f32 %v426, %v542
    %544 = vmatmul.f32.gmra.mxu0 %v221
    %v545 = vpop.f32.mrf.mxu0
    %v546 = vadd.f32 %v426, %v545
    %547 = vmatmul.f32.gmra.mxu0 %v223
    %v548 = vpop.f32.mrf.mxu0
    %v549 = vadd.f32 %v426, %v548
    %550 = vmatmul.f32.gmra.mxu0 %v225
    %v551 = vpop.f32.mrf.mxu0
    %v552 = vadd.f32 %v426, %v551
    %553 = vmatmul.f32.gmra.mxu0 %v227
    %v554 = vpop.f32.mrf.mxu0
    %v555 = vadd.f32 %v426, %v554
    %556 = vmatmul.f32.gmra.mxu0 %v229
    %v557 = vpop.f32.mrf.mxu0
    %v558 = vadd.f32 %v426, %v557
    %559 = vdwg.mxu0
    %560 = vmatpush.msra.mxu0 %v418
    %561 = vmatpush.msra.mxu0 %v412
    %562 = vmatpush.msra.mxu0 %v406
    %563 = vmatpush.msra.mxu0 %v400
    %564 = vmatpush.msra.mxu0 %v394
    %565 = vmatpush.msra.mxu0 %v388
    %566 = vmatpush.msra.mxu0 %v382
    %567 = vmatpush.msra.mxu0 %v376
    %568 = vmatpush.msra.mxu0 %v370
    %569 = vmatpush.msra.mxu0 %v364
    %570 = vmatpush.msra.mxu0 %v358
    %571 = vmatpush.msra.mxu0 %v352
    %572 = vmatpush.msra.mxu0 %v346
    %573 = vmatpush.msra.mxu0 %v340
    %574 = vmatpush.msra.mxu0 %v334
    %575 = vmatpush.msra.mxu0 %v328
    %576 = vmatmul.f32.gmra.mxu0 %v216
    %v577 = vpop.f32.mrf.mxu0
    %v578 = vadd.f32 %v537, %v577
    %579 = vmatmul.f32.gmra.mxu0 %v218
    %v580 = vpop.f32.mrf.mxu0
    %v581 = vadd.f32 %v540, %v580
    %582 = vmatmul.f32.gmra.mxu0 %v220
    %v583 = vpop.f32.mrf.mxu0
    %v584 = vadd.f32 %v543, %v583
    %585 = vmatmul.f32.gmra.mxu0 %v222
    %v586 = vpop.f32.mrf.mxu0
    %v587 = vadd.f32 %v546, %v586
    %588 = vmatmul.f32.gmra.mxu0 %v224
    %v589 = vpop.f32.mrf.mxu0
    %v590 = vadd.f32 %v549, %v589
    %591 = vmatmul.f32.gmra.mxu0 %v226
    %v592 = vpop.f32.mrf.mxu0
    %v593 = vadd.f32 %v552, %v592
    %594 = vmatmul.f32.gmra.mxu0 %v228
    %v595 = vpop.f32.mrf.mxu0
    %v596 = vadd.f32 %v555, %v595
    %597 = vmatmul.f32.gmra.mxu0 %v230
    %v598 = vpop.f32.mrf.mxu0
    %v599 = vadd.f32 %v558, %v598
    %600 = vdwg.mxu0
    %601 = vmatpush.msra.mxu0 %v323
    %602 = vmatpush.msra.mxu0 %v317
    %603 = vmatpush.msra.mxu0 %v311
    %604 = vmatpush.msra.mxu0 %v305
    %605 = vmatpush.msra.mxu0 %v299
    %606 = vmatpush.msra.mxu0 %v293
    %607 = vmatpush.msra.mxu0 %v287
    %608 = vmatpush.msra.mxu0 %v281
    %609 = vmatpush.msra.mxu0 %v275
    %610 = vmatpush.msra.mxu0 %v269
    %611 = vmatpush.msra.mxu0 %v263
    %612 = vmatpush.msra.mxu0 %v257
    %613 = vmatpush.msra.mxu0 %v251
    %614 = vmatpush.msra.mxu0 %v245
    %615 = vmatpush.msra.mxu0 %v239
    %616 = vmatpush.msra.mxu0 %v233
    %617 = vmatmul.f32.gmra.mxu0 %v215
    %v618 = vpop.f32.mrf.mxu0
    %v619 = vadd.f32 %v427, %v618
    %620 = vmatmul.f32.gmra.mxu0 %v217
    %v621 = vpop.f32.mrf.mxu0
    %v622 = vadd.f32 %v427, %v621
    %623 = vmatmul.f32.gmra.mxu0 %v219
    %v624 = vpop.f32.mrf.mxu0
    %v625 = vadd.f32 %v427, %v624
    %626 = vmatmul.f32.gmra.mxu0 %v221
    %v627 = vpop.f32.mrf.mxu0
    %v628 = vadd.f32 %v427, %v627
    %629 = vmatmul.f32.gmra.mxu0 %v223
    %v630 = vpop.f32.mrf.mxu0
    %v631 = vadd.f32 %v427, %v630
    %632 = vmatmul.f32.gmra.mxu0 %v225
    %v633 = vpop.f32.mrf.mxu0
    %v634 = vadd.f32 %v427, %v633
    %635 = vmatmul.f32.gmra.mxu0 %v227
    %v636 = vpop.f32.mrf.mxu0
    %v637 = vadd.f32 %v427, %v636
    %638 = vmatmul.f32.gmra.mxu0 %v229
    %v639 = vpop.f32.mrf.mxu0
    %v640 = vadd.f32 %v427, %v639
    %641 = vdwg.mxu0
    %642 = vmatpush.msra.mxu0 %v419
    %643 = vmatpush.msra.mxu0 %v413
    %644 = vmatpush.msra.mxu0 %v407
    %645 = vmatpush.msra.mxu0 %v401
    %646 = vmatpush.msra.mxu0 %v395
    %647 = vmatpush.msra.mxu0 %v389
    %648 = vmatpush.msra.mxu0 %v383
    %649 = vmatpush.msra.mxu0 %v377
    %650 = vmatpush.msra.mxu0 %v371
    %651 = vmatpush.msra.mxu0 %v365
    %652 = vmatpush.msra.mxu0 %v359
    %653 = vmatpush.msra.mxu0 %v353
    %654 = vmatpush.msra.mxu0 %v347
    %655 = vmatpush.msra.mxu0 %v341
    %656 = vmatpush.msra.mxu0 %v335
    %657 = vmatpush.msra.mxu0 %v329
    %658 = vmatmul.f32.gmra.mxu0 %v216
    %v659 = vpop.f32.mrf.mxu0
    %v660 = vadd.f32 %v619, %v659
    %661 = vmatmul.f32.gmra.mxu0 %v218
    %v662 = vpop.f32.mrf.mxu0
    %v663 = vadd.f32 %v622, %v662
    %664 = vmatmul.f32.gmra.mxu0 %v220
    %v665 = vpop.f32.mrf.mxu0
    %v666 = vadd.f32 %v625, %v665
    %667 = vmatmul.f32.gmra.mxu0 %v222
    %v668 = vpop.f32.mrf.mxu0
    %v669 = vadd.f32 %v628, %v668
    %670 = vmatmul.f32.gmra.mxu0 %v224
    %v671 = vpop.f32.mrf.mxu0
    %v672 = vadd.f32 %v631, %v671
    %673 = vmatmul.f32.gmra.mxu0 %v226
    %v674 = vpop.f32.mrf.mxu0
    %v675 = vadd.f32 %v634, %v674
    %676 = vmatmul.f32.gmra.mxu0 %v228
    %v677 = vpop.f32.mrf.mxu0
    %v678 = vadd.f32 %v637, %v677
    %679 = vmatmul.f32.gmra.mxu0 %v230
    %v680 = vpop.f32.mrf.mxu0
    %v681 = vadd.f32 %v640, %v680
    %682 = vdwg.mxu0
    %683 = vmatpush.msra.mxu0 %v324
    %684 = vmatpush.msra.mxu0 %v318
    %685 = vmatpush.msra.mxu0 %v312
    %686 = vmatpush.msra.mxu0 %v306
    %687 = vmatpush.msra.mxu0 %v300
    %688 = vmatpush.msra.mxu0 %v294
    %689 = vmatpush.msra.mxu0 %v288
    %690 = vmatpush.msra.mxu0 %v282
    %691 = vmatpush.msra.mxu0 %v276
    %692 = vmatpush.msra.mxu0 %v270
    %693 = vmatpush.msra.mxu0 %v264
    %694 = vmatpush.msra.mxu0 %v258
    %695 = vmatpush.msra.mxu0 %v252
    %696 = vmatpush.msra.mxu0 %v246
    %697 = vmatpush.msra.mxu0 %v240
    %698 = vmatpush.msra.mxu0 %v234
    %699 = vmatmul.f32.gmra.mxu0 %v215
    %v700 = vpop.f32.mrf.mxu0
    %v701 = vadd.f32 %v428, %v700
    %702 = vmatmul.f32.gmra.mxu0 %v217
    %v703 = vpop.f32.mrf.mxu0
    %v704 = vadd.f32 %v428, %v703
    %705 = vmatmul.f32.gmra.mxu0 %v219
    %v706 = vpop.f32.mrf.mxu0
    %v707 = vadd.f32 %v428, %v706
    %708 = vmatmul.f32.gmra.mxu0 %v221
    %v709 = vpop.f32.mrf.mxu0
    %v710 = vadd.f32 %v428, %v709
    %711 = vmatmul.f32.gmra.mxu0 %v223
    %v712 = vpop.f32.mrf.mxu0
    %v713 = vadd.f32 %v428, %v712
    %714 = vmatmul.f32.gmra.mxu0 %v225
    %v715 = vpop.f32.mrf.mxu0
    %v716 = vadd.f32 %v428, %v715
    %717 = vmatmul.f32.gmra.mxu0 %v227
    %v718 = vpop.f32.mrf.mxu0
    %v719 = vadd.f32 %v428, %v718
    %720 = vmatmul.f32.gmra.mxu0 %v229
    %v721 = vpop.f32.mrf.mxu0
    %v722 = vadd.f32 %v428, %v721
    %723 = vdwg.mxu0
    %724 = vmatpush.msra.mxu0 %v420
    %725 = vmatpush.msra.mxu0 %v414
    %726 = vmatpush.msra.mxu0 %v408
    %727 = vmatpush.msra.mxu0 %v402
    %728 = vmatpush.msra.mxu0 %v396
    %729 = vmatpush.msra.mxu0 %v390
    %730 = vmatpush.msra.mxu0 %v384
    %731 = vmatpush.msra.mxu0 %v378
    %732 = vmatpush.msra.mxu0 %v372
    %733 = vmatpush.msra.mxu0 %v366
    %734 = vmatpush.msra.mxu0 %v360
    %735 = vmatpush.msra.mxu0 %v354
    %736 = vmatpush.msra.mxu0 %v348
    %737 = vmatpush.msra.mxu0 %v342
    %738 = vmatpush.msra.mxu0 %v336
    %739 = vmatpush.msra.mxu0 %v330
    %740 = vmatmul.f32.gmra.mxu0 %v216
    %v741 = vpop.f32.mrf.mxu0
    %v742 = vadd.f32 %v701, %v741
    %743 = vmatmul.f32.gmra.mxu0 %v218
    %v744 = vpop.f32.mrf.mxu0
    %v745 = vadd.f32 %v704, %v744
    %746 = vmatmul.f32.gmra.mxu0 %v220
    %v747 = vpop.f32.mrf.mxu0
    %v748 = vadd.f32 %v707, %v747
    %749 = vmatmul.f32.gmra.mxu0 %v222
    %v750 = vpop.f32.mrf.mxu0
    %v751 = vadd.f32 %v710, %v750
    %752 = vmatmul.f32.gmra.mxu0 %v224
    %v753 = vpop.f32.mrf.mxu0
    %v754 = vadd.f32 %v713, %v753
    %755 = vmatmul.f32.gmra.mxu0 %v226
    %v756 = vpop.f32.mrf.mxu0
    %v757 = vadd.f32 %v716, %v756
    %758 = vmatmul.f32.gmra.mxu0 %v228
    %v759 = vpop.f32.mrf.mxu0
    %v760 = vadd.f32 %v719, %v759
    %761 = vmatmul.f32.gmra.mxu0 %v230
    %v762 = vpop.f32.mrf.mxu0
    %v763 = vadd.f32 %v722, %v762
    %764 = vdwg.mxu0
    %765 = vmatpush.msra.mxu0 %v325
    %766 = vmatpush.msra.mxu0 %v319
    %767 = vmatpush.msra.mxu0 %v313
    %768 = vmatpush.msra.mxu0 %v307
    %769 = vmatpush.msra.mxu0 %v301
    %770 = vmatpush.msra.mxu0 %v295
    %771 = vmatpush.msra.mxu0 %v289
    %772 = vmatpush.msra.mxu0 %v283
    %773 = vmatpush.msra.mxu0 %v277
    %774 = vmatpush.msra.mxu0 %v271
    %775 = vmatpush.msra.mxu0 %v265
    %776 = vmatpush.msra.mxu0 %v259
    %777 = vmatpush.msra.mxu0 %v253
    %778 = vmatpush.msra.mxu0 %v247
    %779 = vmatpush.msra.mxu0 %v241
    %780 = vmatpush.msra.mxu0 %v235
    %781 = vmatmul.f32.gmra.mxu0 %v215
    %v782 = vpop.f32.mrf.mxu0
    %v783 = vadd.f32 %v429, %v782
    %784 = vmatmul.f32.gmra.mxu0 %v217
    %v785 = vpop.f32.mrf.mxu0
    %v786 = vadd.f32 %v429, %v785
    %787 = vmatmul.f32.gmra.mxu0 %v219
    %v788 = vpop.f32.mrf.mxu0
    %v789 = vadd.f32 %v429, %v788
    %790 = vmatmul.f32.gmra.mxu0 %v221
    %v791 = vpop.f32.mrf.mxu0
    %v792 = vadd.f32 %v429, %v791
    %793 = vmatmul.f32.gmra.mxu0 %v223
    %v794 = vpop.f32.mrf.mxu0
    %v795 = vadd.f32 %v429, %v794
    %796 = vmatmul.f32.gmra.mxu0 %v225
    %v797 = vpop.f32.mrf.mxu0
    %v798 = vadd.f32 %v429, %v797
    %799 = vmatmul.f32.gmra.mxu0 %v227
    %v800 = vpop.f32.mrf.mxu0
    %v801 = vadd.f32 %v429, %v800
    %802 = vmatmul.f32.gmra.mxu0 %v229
    %v803 = vpop.f32.mrf.mxu0
    %v804 = vadd.f32 %v429, %v803
    %805 = vdwg.mxu0
    %806 = vmatpush.msra.mxu0 %v421
    %807 = vmatpush.msra.mxu0 %v415
    %808 = vmatpush.msra.mxu0 %v409
    %809 = vmatpush.msra.mxu0 %v403
    %810 = vmatpush.msra.mxu0 %v397
    %811 = vmatpush.msra.mxu0 %v391
    %812 = vmatpush.msra.mxu0 %v385
    %813 = vmatpush.msra.mxu0 %v379
    %814 = vmatpush.msra.mxu0 %v373
    %815 = vmatpush.msra.mxu0 %v367
    %816 = vmatpush.msra.mxu0 %v361
    %817 = vmatpush.msra.mxu0 %v355
    %818 = vmatpush.msra.mxu0 %v349
    %819 = vmatpush.msra.mxu0 %v343
    %820 = vmatpush.msra.mxu0 %v337
    %821 = vmatpush.msra.mxu0 %v331
    %822 = vmatmul.f32.gmra.mxu0 %v216
    %v823 = vpop.f32.mrf.mxu0
    %v824 = vadd.f32 %v783, %v823
    %825 = vmatmul.f32.gmra.mxu0 %v218
    %v826 = vpop.f32.mrf.mxu0
    %v827 = vadd.f32 %v786, %v826
    %828 = vmatmul.f32.gmra.mxu0 %v220
    %v829 = vpop.f32.mrf.mxu0
    %v830 = vadd.f32 %v789, %v829
    %831 = vmatmul.f32.gmra.mxu0 %v222
    %v832 = vpop.f32.mrf.mxu0
    %v833 = vadd.f32 %v792, %v832
    %834 = vmatmul.f32.gmra.mxu0 %v224
    %v835 = vpop.f32.mrf.mxu0
    %v836 = vadd.f32 %v795, %v835
    %837 = vmatmul.f32.gmra.mxu0 %v226
    %v838 = vpop.f32.mrf.mxu0
    %v839 = vadd.f32 %v798, %v838
    %840 = vmatmul.f32.gmra.mxu0 %v228
    %v841 = vpop.f32.mrf.mxu0
    %v842 = vadd.f32 %v801, %v841
    %843 = vmatmul.f32.gmra.mxu0 %v230
    %v844 = vpop.f32.mrf.mxu0
    %v845 = vadd.f32 %v804, %v844
    %846 = vdwg.mxu0
    %847 = vmatpush.msra.mxu0 %v326
    %848 = vmatpush.msra.mxu0 %v320
    %849 = vmatpush.msra.mxu0 %v314
    %850 = vmatpush.msra.mxu0 %v308
    %851 = vmatpush.msra.mxu0 %v302
    %852 = vmatpush.msra.mxu0 %v296
    %853 = vmatpush.msra.mxu0 %v290
    %854 = vmatpush.msra.mxu0 %v284
    %855 = vmatpush.msra.mxu0 %v278
    %856 = vmatpush.msra.mxu0 %v272
    %857 = vmatpush.msra.mxu0 %v266
    %858 = vmatpush.msra.mxu0 %v260
    %859 = vmatpush.msra.mxu0 %v254
    %860 = vmatpush.msra.mxu0 %v248
    %861 = vmatpush.msra.mxu0 %v242
    %862 = vmatpush.msra.mxu0 %v236
    %863 = vmatmul.f32.gmra.mxu0 %v215
    %v864 = vpop.f32.mrf.mxu0
    %v865 = vadd.f32 %v430, %v864
    %866 = vmatmul.f32.gmra.mxu0 %v217
    %v867 = vpop.f32.mrf.mxu0
    %v868 = vadd.f32 %v430, %v867
    %869 = vmatmul.f32.gmra.mxu0 %v219
    %v870 = vpop.f32.mrf.mxu0
    %v871 = vadd.f32 %v430, %v870
    %872 = vmatmul.f32.gmra.mxu0 %v221
    %v873 = vpop.f32.mrf.mxu0
    %v874 = vadd.f32 %v430, %v873
    %875 = vmatmul.f32.gmra.mxu0 %v223
    %v876 = vpop.f32.mrf.mxu0
    %v877 = vadd.f32 %v430, %v876
    %878 = vmatmul.f32.gmra.mxu0 %v225
    %v879 = vpop.f32.mrf.mxu0
    %v880 = vadd.f32 %v430, %v879
    %881 = vmatmul.f32.gmra.mxu0 %v227
    %v882 = vpop.f32.mrf.mxu0
    %v883 = vadd.f32 %v430, %v882
    %884 = vmatmul.f32.gmra.mxu0 %v229
    %v885 = vpop.f32.mrf.mxu0
    %v886 = vadd.f32 %v430, %v885
    %887 = vdwg.mxu0
    %888 = vmatpush.msra.mxu0 %v422
    %889 = vmatpush.msra.mxu0 %v416
    %890 = vmatpush.msra.mxu0 %v410
    %891 = vmatpush.msra.mxu0 %v404
    %892 = vmatpush.msra.mxu0 %v398
    %893 = vmatpush.msra.mxu0 %v392
    %894 = vmatpush.msra.mxu0 %v386
    %895 = vmatpush.msra.mxu0 %v380
    %896 = vmatpush.msra.mxu0 %v374
    %897 = vmatpush.msra.mxu0 %v368
    %898 = vmatpush.msra.mxu0 %v362
    %899 = vmatpush.msra.mxu0 %v356
    %900 = vmatpush.msra.mxu0 %v350
    %901 = vmatpush.msra.mxu0 %v344
    %902 = vmatpush.msra.mxu0 %v338
    %903 = vmatpush.msra.mxu0 %v332
    %904 = vmatmul.f32.gmra.mxu0 %v216
    %v905 = vpop.f32.mrf.mxu0
    %v906 = vadd.f32 %v865, %v905
    %907 = vmatmul.f32.gmra.mxu0 %v218
    %v908 = vpop.f32.mrf.mxu0
    %v909 = vadd.f32 %v868, %v908
    %910 = vmatmul.f32.gmra.mxu0 %v220
    %v911 = vpop.f32.mrf.mxu0
    %v912 = vadd.f32 %v871, %v911
    %913 = vmatmul.f32.gmra.mxu0 %v222
    %v914 = vpop.f32.mrf.mxu0
    %v915 = vadd.f32 %v874, %v914
    %916 = vmatmul.f32.gmra.mxu0 %v224
    %v917 = vpop.f32.mrf.mxu0
    %v918 = vadd.f32 %v877, %v917
    %919 = vmatmul.f32.gmra.mxu0 %v226
    %v920 = vpop.f32.mrf.mxu0
    %v921 = vadd.f32 %v880, %v920
    %922 = vmatmul.f32.gmra.mxu0 %v228
    %v923 = vpop.f32.mrf.mxu0
    %v924 = vadd.f32 %v883, %v923
    %925 = vmatmul.f32.gmra.mxu0 %v230
    %v926 = vpop.f32.mrf.mxu0
    %v927 = vadd.f32 %v886, %v926
    %928 = vdwg.mxu0
    %929 = vmatpush.xpose.msra.mxu0 0.0
    %930 = vmatpush.xpose.msra.mxu0 0.0
    %931 = vmatpush.xpose.msra.mxu0 0.0
    %932 = vmatpush.xpose.msra.mxu0 0.0
    %933 = vmatpush.xpose.msra.mxu0 0.0
    %934 = vmatpush.xpose.msra.mxu0 0.0
    %935 = vmatpush.xpose.msra.mxu0 0.0
    %936 = vmatpush.xpose.msra.mxu0 0.0
    %937 = vmatpush.xpose.msra.mxu0 0.0
    %938 = vmatpush.xpose.msra.mxu0 0.0
    %939 = vmatpush.xpose.msra.mxu0 0.0
    %940 = vmatpush.xpose.msra.mxu0 0.0
    %941 = vmatpush.xpose.msra.mxu0 0.0
    %942 = vmatpush.xpose.msra.mxu0 0.0
    %943 = vmatpush.xpose.msra.mxu0 %v663
    %944 = vmatpush.xpose.msra.mxu0 %v660
    %945 = vmatmul.f32.gmra.mxu0 %v496
    %v946 = vpop.f32.mrf.mxu0
    %v947 = vadd.f32 0.0, %v946
    %948 = vmatmul.f32.gmra.mxu0 %v499
    %v949 = vpop.f32.mrf.mxu0
    %v950 = vadd.f32 0.0, %v949
    %951 = vdwg.mxu0
    %952 = vmatpush.xpose.msra.mxu0 0.0
    %953 = vmatpush.xpose.msra.mxu0 0.0
    %954 = vmatpush.xpose.msra.mxu0 0.0
    %955 = vmatpush.xpose.msra.mxu0 0.0
    %956 = vmatpush.xpose.msra.mxu0 0.0
    %957 = vmatpush.xpose.msra.mxu0 0.0
    %958 = vmatpush.xpose.msra.mxu0 0.0
    %959 = vmatpush.xpose.msra.mxu0 0.0
    %960 = vmatpush.xpose.msra.mxu0 0.0
    %961 = vmatpush.xpose.msra.mxu0 0.0
    %962 = vmatpush.xpose.msra.mxu0 0.0
    %963 = vmatpush.xpose.msra.mxu0 0.0
    %964 = vmatpush.xpose.msra.mxu0 0.0
    %965 = vmatpush.xpose.msra.mxu0 0.0
    %966 = vmatpush.xpose.msra.mxu0 %v669
    %967 = vmatpush.xpose.msra.mxu0 %v666
    %968 = vmatmul.f32.gmra.mxu0 %v502
    %v969 = vpop.f32.mrf.mxu0
    %v970 = vadd.f32 0.0, %v969
    %971 = vmatmul.f32.gmra.mxu0 %v505
    %v972 = vpop.f32.mrf.mxu0
    %v973 = vadd.f32 0.0, %v972
    %974 = vdwg.mxu0
    %975 = vmatpush.xpose.msra.mxu0 0.0
    %976 = vmatpush.xpose.msra.mxu0 0.0
    %977 = vmatpush.xpose.msra.mxu0 0.0
    %978 = vmatpush.xpose.msra.mxu0 0.0
    %979 = vmatpush.xpose.msra.mxu0 0.0
    %980 = vmatpush.xpose.msra.mxu0 0.0
    %981 = vmatpush.xpose.msra.mxu0 0.0
    %982 = vmatpush.xpose.msra.mxu0 0.0
    %983 = vmatpush.xpose.msra.mxu0 0.0
    %984 = vmatpush.xpose.msra.mxu0 0.0
    %985 = vmatpush.xpose.msra.mxu0 0.0
    %986 = vmatpush.xpose.msra.mxu0 0.0
    %987 = vmatpush.xpose.msra.mxu0 0.0
    %988 = vmatpush.xpose.msra.mxu0 0.0
    %989 = vmatpush.xpose.msra.mxu0 %v675
    %990 = vmatpush.xpose.msra.mxu0 %v672
    %991 = vmatmul.f32.gmra.mxu0 %v508
    %v992 = vpop.f32.mrf.mxu0
    %v993 = vadd.f32 0.0, %v992
    %994 = vmatmul.f32.gmra.mxu0 %v511
    %v995 = vpop.f32.mrf.mxu0
    %v996 = vadd.f32 0.0, %v995
    %997 = vdwg.mxu0
    %998 = vmatpush.xpose.msra.mxu0 0.0
    %999 = vmatpush.xpose.msra.mxu0 0.0
    %1000 = vmatpush.xpose.msra.mxu0 0.0
    %1001 = vmatpush.xpose.msra.mxu0 0.0
    %1002 = vmatpush.xpose.msra.mxu0 0.0
    %1003 = vmatpush.xpose.msra.mxu0 0.0
    %1004 = vmatpush.xpose.msra.mxu0 0.0
    %1005 = vmatpush.xpose.msra.mxu0 0.0
    %1006 = vmatpush.xpose.msra.mxu0 0.0
    %1007 = vmatpush.xpose.msra.mxu0 0.0
    %1008 = vmatpush.xpose.msra.mxu0 0.0
    %1009 = vmatpush.xpose.msra.mxu0 0.0
    %1010 = vmatpush.xpose.msra.mxu0 0.0
    %1011 = vmatpush.xpose.msra.mxu0 0.0
    %1012 = vmatpush.xpose.msra.mxu0 %v681
    %1013 = vmatpush.xpose.msra.mxu0 %v678
    %1014 = vmatmul.f32.gmra.mxu0 %v514
    %v1015 = vpop.f32.mrf.mxu0
    %v1016 = vadd.f32 0.0, %v1015
    %1017 = vmatmul.f32.gmra.mxu0 %v517
    %v1018 = vpop.f32.mrf.mxu0
    %v1019 = vadd.f32 0.0, %v1018
    %1020 = vdwg.mxu0
    %vm1021 = vcmask 130048
    %v1022 = vsel %vm1021, %v947, -inf
    %1023 = vmax.xlane.f32.xlu0 %v1022
    %v1024 = vpop.xlane.xlu0 %1023
    %v1025 = vsel %vm1021, %v950, -inf
    %1026 = vmax.xlane.f32.xlu0 %v1025
    %v1027 = vpop.xlane.xlu0 %1026
    %v1028 = vsel %vm1021, %v970, -inf
    %1029 = vmax.xlane.f32.xlu0 %v1028
    %v1030 = vpop.xlane.xlu0 %1029
    %v1031 = vsel %vm1021, %v973, -inf
    %1032 = vmax.xlane.f32.xlu0 %v1031
    %v1033 = vpop.xlane.xlu0 %1032
    %v1034 = vsel %vm1021, %v993, -inf
    %1035 = vmax.xlane.f32.xlu0 %v1034
    %v1036 = vpop.xlane.xlu0 %1035
    %v1037 = vsel %vm1021, %v996, -inf
    %1038 = vmax.xlane.f32.xlu0 %v1037
    %v1039 = vpop.xlane.xlu0 %1038
    %v1040 = vsel %vm1021, %v1016, -inf
    %1041 = vmax.xlane.f32.xlu0 %v1040
    %v1042 = vpop.xlane.xlu0 %1041
    %v1043 = vsel %vm1021, %v1019, -inf
    %1044 = vmax.xlane.f32.xlu0 %v1043
    %v1045 = vpop.xlane.xlu0 %1044
    %v1046 = vsub.f32 %v947, %v1024
    %v1047 = vsub.f32 %v950, %v1027
    %v1048 = vsub.f32 %v970, %v1030
    %v1049 = vsub.f32 %v973, %v1033
    %v1050 = vsub.f32 %v993, %v1036
    %v1051 = vsub.f32 %v996, %v1039
    %v1052 = vsub.f32 %v1016, %v1042
    %v1053 = vsub.f32 %v1019, %v1045
    %v1054 = vmul.f32 %v1046, 1.442695
    %v1055 = vpow.pop %v1054
    %v1056 = vmul.f32 %v1047, 1.442695
    %v1057 = vpow.pop %v1056
    %v1058 = vmul.f32 %v1048, 1.442695
    %v1059 = vpow.pop %v1058
    %v1060 = vmul.f32 %v1049, 1.442695
    %v1061 = vpow.pop %v1060
    %v1062 = vmul.f32 %v1050, 1.442695
    %v1063 = vpow.pop %v1062
    %v1064 = vmul.f32 %v1051, 1.442695
    %v1065 = vpow.pop %v1064
    %v1066 = vmul.f32 %v1052, 1.442695
    %v1067 = vpow.pop %v1066
    %v1068 = vmul.f32 %v1053, 1.442695
    %v1069 = vpow.pop %v1068
    %v1070 = vsel %vm1021, %v1055, 0.0
    %1071 = vadd.xlane.f32.xlu0 %v1070
    %v1072 = vpop.xlane.xlu0 %1071
    %v1073 = vsel %vm1021, %v1057, 0.0
    %1074 = vadd.xlane.f32.xlu0 %v1073
    %v1075 = vpop.xlane.xlu0 %1074
    %v1076 = vsel %vm1021, %v1059, 0.0
    %1077 = vadd.xlane.f32.xlu0 %v1076
    %v1078 = vpop.xlane.xlu0 %1077
    %v1079 = vsel %vm1021, %v1061, 0.0
    %1080 = vadd.xlane.f32.xlu0 %v1079
    %v1081 = vpop.xlane.xlu0 %1080
    %v1082 = vsel %vm1021, %v1063, 0.0
    %1083 = vadd.xlane.f32.xlu0 %v1082
    %v1084 = vpop.xlane.xlu0 %1083
    %v1085 = vsel %vm1021, %v1065, 0.0
    %1086 = vadd.xlane.f32.xlu0 %v1085
    %v1087 = vpop.xlane.xlu0 %1086
    %v1088 = vsel %vm1021, %v1067, 0.0
    %1089 = vadd.xlane.f32.xlu0 %v1088
    %v1090 = vpop.xlane.xlu0 %1089
    %v1091 = vsel %vm1021, %v1069, 0.0
    %1092 = vadd.xlane.f32.xlu0 %v1091
    %v1093 = vpop.xlane.xlu0 %1092
    %v1094 = vrcp.pop %v1072
    %v1095 = vmul.f32 %v1072, %v1094
    %v1096 = vsub.f32 1.0, %v1095
    %v1097 = vmul.f32 %v1094, %v1096
    %v1098 = vadd.f32 %v1094, %v1097
    %vm1099 = vweird.f32 %v1072
    %vm1100 = vweird.f32 %v1094
    %vm1101 = vmor %vm1099, %vm1100
    %v1102 = vsel %vm1101, %v1094, %v1098
    %v1103 = vand.u32 2147483647, %v1072
    %vm1104 = vcmp.eq.f32.partialorder %v1103, 8.507059e+37
    %v1105 = vand.u32 %v1072, 2147483648
    %v1106 = vor.u32 1.1754944e-38, %v1105
    %v1107 = vsel %vm1104, %v1106, %v1102
    %v1108 = vrcp.pop %v1075
    %v1109 = vmul.f32 %v1075, %v1108
    %v1110 = vsub.f32 1.0, %v1109
    %v1111 = vmul.f32 %v1108, %v1110
    %v1112 = vadd.f32 %v1108, %v1111
    %vm1113 = vweird.f32 %v1075
    %vm1114 = vweird.f32 %v1108
    %vm1115 = vmor %vm1113, %vm1114
    %v1116 = vsel %vm1115, %v1108, %v1112
    %v1117 = vand.u32 2147483647, %v1075
    %vm1118 = vcmp.eq.f32.partialorder %v1117, 8.507059e+37
    %v1119 = vand.u32 %v1075, 2147483648
    %v1120 = vor.u32 1.1754944e-38, %v1119
    %v1121 = vsel %vm1118, %v1120, %v1116
    %v1122 = vrcp.pop %v1078
    %v1123 = vmul.f32 %v1078, %v1122
    %v1124 = vsub.f32 1.0, %v1123
    %v1125 = vmul.f32 %v1122, %v1124
    %v1126 = vadd.f32 %v1122, %v1125
    %vm1127 = vweird.f32 %v1078
    %vm1128 = vweird.f32 %v1122
    %vm1129 = vmor %vm1127, %vm1128
    %v1130 = vsel %vm1129, %v1122, %v1126
    %v1131 = vand.u32 2147483647, %v1078
    %vm1132 = vcmp.eq.f32.partialorder %v1131, 8.507059e+37
    %v1133 = vand.u32 %v1078, 2147483648
    %v1134 = vor.u32 1.1754944e-38, %v1133
    %v1135 = vsel %vm1132, %v1134, %v1130
    %v1136 = vrcp.pop %v1081
    %v1137 = vmul.f32 %v1081, %v1136
    %v1138 = vsub.f32 1.0, %v1137
    %v1139 = vmul.f32 %v1136, %v1138
    %v1140 = vadd.f32 %v1136, %v1139
    %vm1141 = vweird.f32 %v1081
    %vm1142 = vweird.f32 %v1136
    %vm1143 = vmor %vm1141, %vm1142
    %v1144 = vsel %vm1143, %v1136, %v1140
    %v1145 = vand.u32 2147483647, %v1081
    %vm1146 = vcmp.eq.f32.partialorder %v1145, 8.507059e+37
    %v1147 = vand.u32 %v1081, 2147483648
    %v1148 = vor.u32 1.1754944e-38, %v1147
    %v1149 = vsel %vm1146, %v1148, %v1144
    %v1150 = vrcp.pop %v1084
    %v1151 = vmul.f32 %v1084, %v1150
    %v1152 = vsub.f32 1.0, %v1151
    %v1153 = vmul.f32 %v1150, %v1152
    %v1154 = vadd.f32 %v1150, %v1153
    %vm1155 = vweird.f32 %v1084
    %vm1156 = vweird.f32 %v1150
    %vm1157 = vmor %vm1155, %vm1156
    %v1158 = vsel %vm1157, %v1150, %v1154
    %v1159 = vand.u32 2147483647, %v1084
    %vm1160 = vcmp.eq.f32.partialorder %v1159, 8.507059e+37
    %v1161 = vand.u32 %v1084, 2147483648
    %v1162 = vor.u32 1.1754944e-38, %v1161
    %v1163 = vsel %vm1160, %v1162, %v1158
    %v1164 = vrcp.pop %v1087
    %v1165 = vmul.f32 %v1087, %v1164
    %v1166 = vsub.f32 1.0, %v1165
    %v1167 = vmul.f32 %v1164, %v1166
    %v1168 = vadd.f32 %v1164, %v1167
    %vm1169 = vweird.f32 %v1087
    %vm1170 = vweird.f32 %v1164
    %vm1171 = vmor %vm1169, %vm1170
    %v1172 = vsel %vm1171, %v1164, %v1168
    %v1173 = vand.u32 2147483647, %v1087
    %vm1174 = vcmp.eq.f32.partialorder %v1173, 8.507059e+37
    %v1175 = vand.u32 %v1087, 2147483648
    %v1176 = vor.u32 1.1754944e-38, %v1175
    %v1177 = vsel %vm1174, %v1176, %v1172
    %v1178 = vrcp.pop %v1090
    %v1179 = vmul.f32 %v1090, %v1178
    %v1180 = vsub.f32 1.0, %v1179
    %v1181 = vmul.f32 %v1178, %v1180
    %v1182 = vadd.f32 %v1178, %v1181
    %vm1183 = vweird.f32 %v1090
    %vm1184 = vweird.f32 %v1178
    %vm1185 = vmor %vm1183, %vm1184
    %v1186 = vsel %vm1185, %v1178, %v1182
    %v1187 = vand.u32 2147483647, %v1090
    %vm1188 = vcmp.eq.f32.partialorder %v1187, 8.507059e+37
    %v1189 = vand.u32 %v1090, 2147483648
    %v1190 = vor.u32 1.1754944e-38, %v1189
    %v1191 = vsel %vm1188, %v1190, %v1186
    %v1192 = vrcp.pop %v1093
    %v1193 = vmul.f32 %v1093, %v1192
    %v1194 = vsub.f32 1.0, %v1193
    %v1195 = vmul.f32 %v1192, %v1194
    %v1196 = vadd.f32 %v1192, %v1195
    %vm1197 = vweird.f32 %v1093
    %vm1198 = vweird.f32 %v1192
    %vm1199 = vmor %vm1197, %vm1198
    %v1200 = vsel %vm1199, %v1192, %v1196
    %v1201 = vand.u32 2147483647, %v1093
    %vm1202 = vcmp.eq.f32.partialorder %v1201, 8.507059e+37
    %v1203 = vand.u32 %v1093, 2147483648
    %v1204 = vor.u32 1.1754944e-38, %v1203
    %v1205 = vsel %vm1202, %v1204, %v1200
    %v1206 = vmul.f32 %v1055, %v1107
    %v1207 = vmul.f32 %v1057, %v1121
    %v1208 = vmul.f32 %v1059, %v1135
    %v1209 = vmul.f32 %v1061, %v1149
    %v1210 = vmul.f32 %v1063, %v1163
    %v1211 = vmul.f32 %v1065, %v1177
    %v1212 = vmul.f32 %v1067, %v1191
    %v1213 = vmul.f32 %v1069, %v1205
    %v1215 = vsel %vm1021, %v1206, 0
    %v1218 = vsel %vm1021, %v1207, 0
    %1220 = vmatpush.msra.mxu0 0.0
    %1221 = vmatpush.msra.mxu0 0.0
    %1222 = vmatpush.msra.mxu0 0.0
    %1223 = vmatpush.msra.mxu0 0.0
    %1224 = vmatpush.msra.mxu0 0.0
    %1225 = vmatpush.msra.mxu0 0.0
    %1226 = vmatpush.msra.mxu0 0.0
    %1227 = vmatpush.msra.mxu0 0.0
    %1228 = vmatpush.msra.mxu0 0.0
    %1229 = vmatpush.msra.mxu0 0.0
    %1230 = vmatpush.msra.mxu0 0.0
    %1231 = vmatpush.msra.mxu0 0.0
    %1232 = vmatpush.msra.mxu0 0.0
    %1233 = vmatpush.msra.mxu0 0.0
    %1234 = vmatpush.msra.mxu0 %v827
    %1235 = vmatpush.msra.mxu0 %v824
    %1236 = vmatmul.f32.gmra.mxu0 %v1215
    %v1237 = vpop.f32.mrf.mxu0
    %v1238 = vadd.f32 0.0, %v1237
    %1239 = vmatmul.f32.gmra.mxu0 %v1218
    %v1240 = vpop.f32.mrf.mxu0
    %v1241 = vadd.f32 0.0, %v1240
    %1242 = vdwg.mxu0
    %v1244 = vsel %vm1021, %v1208, 0
    %v1247 = vsel %vm1021, %v1209, 0
    %1249 = vmatpush.msra.mxu0 0.0
    %1250 = vmatpush.msra.mxu0 0.0
    %1251 = vmatpush.msra.mxu0 0.0
    %1252 = vmatpush.msra.mxu0 0.0
    %1253 = vmatpush.msra.mxu0 0.0
    %1254 = vmatpush.msra.mxu0 0.0
    %1255 = vmatpush.msra.mxu0 0.0
    %1256 = vmatpush.msra.mxu0 0.0
    %1257 = vmatpush.msra.mxu0 0.0
    %1258 = vmatpush.msra.mxu0 0.0
    %1259 = vmatpush.msra.mxu0 0.0
    %1260 = vmatpush.msra.mxu0 0.0
    %1261 = vmatpush.msra.mxu0 0.0
    %1262 = vmatpush.msra.mxu0 0.0
    %1263 = vmatpush.msra.mxu0 %v833
    %1264 = vmatpush.msra.mxu0 %v830
    %1265 = vmatmul.f32.gmra.mxu0 %v1244
    %v1266 = vpop.f32.mrf.mxu0
    %v1267 = vadd.f32 0.0, %v1266
    %1268 = vmatmul.f32.gmra.mxu0 %v1247
    %v1269 = vpop.f32.mrf.mxu0
    %v1270 = vadd.f32 0.0, %v1269
    %1271 = vdwg.mxu0
    %v1273 = vsel %vm1021, %v1210, 0
    %v1276 = vsel %vm1021, %v1211, 0
    %1278 = vmatpush.msra.mxu0 0.0
    %1279 = vmatpush.msra.mxu0 0.0
    %1280 = vmatpush.msra.mxu0 0.0
    %1281 = vmatpush.msra.mxu0 0.0
    %1282 = vmatpush.msra.mxu0 0.0
    %1283 = vmatpush.msra.mxu0 0.0
    %1284 = vmatpush.msra.mxu0 0.0
    %1285 = vmatpush.msra.mxu0 0.0
    %1286 = vmatpush.msra.mxu0 0.0
    %1287 = vmatpush.msra.mxu0 0.0
    %1288 = vmatpush.msra.mxu0 0.0
    %1289 = vmatpush.msra.mxu0 0.0
    %1290 = vmatpush.msra.mxu0 0.0
    %1291 = vmatpush.msra.mxu0 0.0
    %1292 = vmatpush.msra.mxu0 %v839
    %1293 = vmatpush.msra.mxu0 %v836
    %1294 = vmatmul.f32.gmra.mxu0 %v1273
    %v1295 = vpop.f32.mrf.mxu0
    %v1296 = vadd.f32 0.0, %v1295
    %1297 = vmatmul.f32.gmra.mxu0 %v1276
    %v1298 = vpop.f32.mrf.mxu0
    %v1299 = vadd.f32 0.0, %v1298
    %1300 = vdwg.mxu0
    %v1302 = vsel %vm1021, %v1212, 0
    %v1305 = vsel %vm1021, %v1213, 0
    %1307 = vmatpush.msra.mxu0 0.0
    %1308 = vmatpush.msra.mxu0 0.0
    %1309 = vmatpush.msra.mxu0 0.0
    %1310 = vmatpush.msra.mxu0 0.0
    %1311 = vmatpush.msra.mxu0 0.0
    %1312 = vmatpush.msra.mxu0 0.0
    %1313 = vmatpush.msra.mxu0 0.0
    %1314 = vmatpush.msra.mxu0 0.0
    %1315 = vmatpush.msra.mxu0 0.0
    %1316 = vmatpush.msra.mxu0 0.0
    %1317 = vmatpush.msra.mxu0 0.0
    %1318 = vmatpush.msra.mxu0 0.0
    %1319 = vmatpush.msra.mxu0 0.0
    %1320 = vmatpush.msra.mxu0 0.0
    %1321 = vmatpush.msra.mxu0 %v845
    %1322 = vmatpush.msra.mxu0 %v842
    %1323 = vmatmul.f32.gmra.mxu0 %v1302
    %v1324 = vpop.f32.mrf.mxu0
    %v1325 = vadd.f32 0.0, %v1324
    %1326 = vmatmul.f32.gmra.mxu0 %v1305
    %v1327 = vpop.f32.mrf.mxu0
    %v1328 = vadd.f32 0.0, %v1327
    %1329 = vdwg.mxu0
    %1330 = vst [vmem:[#allocation2] sm:$0xff] %v1238
    %1331 = vst [vmem:[#allocation2 + $0x10] sm:$0xff] %v1241
    %1332 = vst [vmem:[#allocation2 + $0x20] sm:$0xff] %v1267
    %1333 = vst [vmem:[#allocation2 + $0x30] sm:$0xff] %v1270
    %1334 = vst [vmem:[#allocation2 + $0x40] sm:$0xff] %v1296
    %1335 = vst [vmem:[#allocation2 + $0x50] sm:$0xff] %v1299
    %1336 = vst [vmem:[#allocation2 + $0x60] sm:$0xff] %v1325
    %1337 = vst [vmem:[#allocation2 + $0x70] sm:$0xff] %v1328
    %1338 = vmatpush.xpose.msra.mxu0 0.0
    %1339 = vmatpush.xpose.msra.mxu0 0.0
    %1340 = vmatpush.xpose.msra.mxu0 0.0
    %1341 = vmatpush.xpose.msra.mxu0 0.0
    %1342 = vmatpush.xpose.msra.mxu0 0.0
    %1343 = vmatpush.xpose.msra.mxu0 0.0
    %1344 = vmatpush.xpose.msra.mxu0 0.0
    %1345 = vmatpush.xpose.msra.mxu0 0.0
    %1346 = vmatpush.xpose.msra.mxu0 0.0
    %1347 = vmatpush.xpose.msra.mxu0 0.0
    %1348 = vmatpush.xpose.msra.mxu0 0.0
    %1349 = vmatpush.xpose.msra.mxu0 0.0
    %1350 = vmatpush.xpose.msra.mxu0 0.0
    %1351 = vmatpush.xpose.msra.mxu0 0.0
    %1352 = vmatpush.xpose.msra.mxu0 %v745
    %1353 = vmatpush.xpose.msra.mxu0 %v742
    %1354 = vmatmul.f32.gmra.mxu0 %v578
    %v1355 = vpop.f32.mrf.mxu0
    %v1356 = vadd.f32 0.0, %v1355
    %1357 = vmatmul.f32.gmra.mxu0 %v581
    %v1358 = vpop.f32.mrf.mxu0
    %v1359 = vadd.f32 0.0, %v1358
    %1360 = vdwg.mxu0
    %1361 = vmatpush.xpose.msra.mxu0 0.0
    %1362 = vmatpush.xpose.msra.mxu0 0.0
    %1363 = vmatpush.xpose.msra.mxu0 0.0
    %1364 = vmatpush.xpose.msra.mxu0 0.0
    %1365 = vmatpush.xpose.msra.mxu0 0.0
    %1366 = vmatpush.xpose.msra.mxu0 0.0
    %1367 = vmatpush.xpose.msra.mxu0 0.0
    %1368 = vmatpush.xpose.msra.mxu0 0.0
    %1369 = vmatpush.xpose.msra.mxu0 0.0
    %1370 = vmatpush.xpose.msra.mxu0 0.0
    %1371 = vmatpush.xpose.msra.mxu0 0.0
    %1372 = vmatpush.xpose.msra.mxu0 0.0
    %1373 = vmatpush.xpose.msra.mxu0 0.0
    %1374 = vmatpush.xpose.msra.mxu0 0.0
    %1375 = vmatpush.xpose.msra.mxu0 %v751
    %1376 = vmatpush.xpose.msra.mxu0 %v748
    %1377 = vmatmul.f32.gmra.mxu0 %v584
    %v1378 = vpop.f32.mrf.mxu0
    %v1379 = vadd.f32 0.0, %v1378
    %1380 = vmatmul.f32.gmra.mxu0 %v587
    %v1381 = vpop.f32.mrf.mxu0
    %v1382 = vadd.f32 0.0, %v1381
    %1383 = vdwg.mxu0
    %1384 = vmatpush.xpose.msra.mxu0 0.0
    %1385 = vmatpush.xpose.msra.mxu0 0.0
    %1386 = vmatpush.xpose.msra.mxu0 0.0
    %1387 = vmatpush.xpose.msra.mxu0 0.0
    %1388 = vmatpush.xpose.msra.mxu0 0.0
    %1389 = vmatpush.xpose.msra.mxu0 0.0
    %1390 = vmatpush.xpose.msra.mxu0 0.0
    %1391 = vmatpush.xpose.msra.mxu0 0.0
    %1392 = vmatpush.xpose.msra.mxu0 0.0
    %1393 = vmatpush.xpose.msra.mxu0 0.0
    %1394 = vmatpush.xpose.msra.mxu0 0.0
    %1395 = vmatpush.xpose.msra.mxu0 0.0
    %1396 = vmatpush.xpose.msra.mxu0 0.0
    %1397 = vmatpush.xpose.msra.mxu0 0.0
    %1398 = vmatpush.xpose.msra.mxu0 %v757
    %1399 = vmatpush.xpose.msra.mxu0 %v754
    %1400 = vmatmul.f32.gmra.mxu0 %v590
    %v1401 = vpop.f32.mrf.mxu0
    %v1402 = vadd.f32 0.0, %v1401
    %1403 = vmatmul.f32.gmra.mxu0 %v593
    %v1404 = vpop.f32.mrf.mxu0
    %v1405 = vadd.f32 0.0, %v1404
    %1406 = vdwg.mxu0
    %1407 = vmatpush.xpose.msra.mxu0 0.0
    %1408 = vmatpush.xpose.msra.mxu0 0.0
    %1409 = vmatpush.xpose.msra.mxu0 0.0
    %1410 = vmatpush.xpose.msra.mxu0 0.0
    %1411 = vmatpush.xpose.msra.mxu0 0.0
    %1412 = vmatpush.xpose.msra.mxu0 0.0
    %1413 = vmatpush.xpose.msra.mxu0 0.0
    %1414 = vmatpush.xpose.msra.mxu0 0.0
    %1415 = vmatpush.xpose.msra.mxu0 0.0
    %1416 = vmatpush.xpose.msra.mxu0 0.0
    %1417 = vmatpush.xpose.msra.mxu0 0.0
    %1418 = vmatpush.xpose.msra.mxu0 0.0
    %1419 = vmatpush.xpose.msra.mxu0 0.0
    %1420 = vmatpush.xpose.msra.mxu0 0.0
    %1421 = vmatpush.xpose.msra.mxu0 %v763
    %1422 = vmatpush.xpose.msra.mxu0 %v760
    %1423 = vmatmul.f32.gmra.mxu0 %v596
    %v1424 = vpop.f32.mrf.mxu0
    %v1425 = vadd.f32 0.0, %v1424
    %1426 = vmatmul.f32.gmra.mxu0 %v599
    %v1427 = vpop.f32.mrf.mxu0
    %v1428 = vadd.f32 0.0, %v1427
    %1429 = vdwg.mxu0
    %v1430 = vsel %vm1021, %v1356, -inf
    %1431 = vmax.xlane.f32.xlu0 %v1430
    %v1432 = vpop.xlane.xlu0 %1431
    %v1433 = vsel %vm1021, %v1359, -inf
    %1434 = vmax.xlane.f32.xlu0 %v1433
    %v1435 = vpop.xlane.xlu0 %1434
    %v1436 = vsel %vm1021, %v1379, -inf
    %1437 = vmax.xlane.f32.xlu0 %v1436
    %v1438 = vpop.xlane.xlu0 %1437
    %v1439 = vsel %vm1021, %v1382, -inf
    %1440 = vmax.xlane.f32.xlu0 %v1439
    %v1441 = vpop.xlane.xlu0 %1440
    %v1442 = vsel %vm1021, %v1402, -inf
    %1443 = vmax.xlane.f32.xlu0 %v1442
    %v1444 = vpop.xlane.xlu0 %1443
    %v1445 = vsel %vm1021, %v1405, -inf
    %1446 = vmax.xlane.f32.xlu0 %v1445
    %v1447 = vpop.xlane.xlu0 %1446
    %v1448 = vsel %vm1021, %v1425, -inf
    %1449 = vmax.xlane.f32.xlu0 %v1448
    %v1450 = vpop.xlane.xlu0 %1449
    %v1451 = vsel %vm1021, %v1428, -inf
    %1452 = vmax.xlane.f32.xlu0 %v1451
    %v1453 = vpop.xlane.xlu0 %1452
    %v1454 = vsub.f32 %v1356, %v1432
    %v1455 = vsub.f32 %v1359, %v1435
    %v1456 = vsub.f32 %v1379, %v1438
    %v1457 = vsub.f32 %v1382, %v1441
    %v1458 = vsub.f32 %v1402, %v1444
    %v1459 = vsub.f32 %v1405, %v1447
    %v1460 = vsub.f32 %v1425, %v1450
    %v1461 = vsub.f32 %v1428, %v1453
    %v1462 = vmul.f32 %v1454, 1.442695
    %v1463 = vpow.pop %v1462
    %v1464 = vmul.f32 %v1455, 1.442695
    %v1465 = vpow.pop %v1464
    %v1466 = vmul.f32 %v1456, 1.442695
    %v1467 = vpow.pop %v1466
    %v1468 = vmul.f32 %v1457, 1.442695
    %v1469 = vpow.pop %v1468
    %v1470 = vmul.f32 %v1458, 1.442695
    %v1471 = vpow.pop %v1470
    %v1472 = vmul.f32 %v1459, 1.442695
    %v1473 = vpow.pop %v1472
    %v1474 = vmul.f32 %v1460, 1.442695
    %v1475 = vpow.pop %v1474
    %v1476 = vmul.f32 %v1461, 1.442695
    %v1477 = vpow.pop %v1476
    %v1478 = vsel %vm1021, %v1463, 0.0
    %1479 = vadd.xlane.f32.xlu0 %v1478
    %v1480 = vpop.xlane.xlu0 %1479
    %v1481 = vsel %vm1021, %v1465, 0.0
    %1482 = vadd.xlane.f32.xlu0 %v1481
    %v1483 = vpop.xlane.xlu0 %1482
    %v1484 = vsel %vm1021, %v1467, 0.0
    %1485 = vadd.xlane.f32.xlu0 %v1484
    %v1486 = vpop.xlane.xlu0 %1485
    %v1487 = vsel %vm1021, %v1469, 0.0
    %1488 = vadd.xlane.f32.xlu0 %v1487
    %v1489 = vpop.xlane.xlu0 %1488
    %v1490 = vsel %vm1021, %v1471, 0.0
    %1491 = vadd.xlane.f32.xlu0 %v1490
    %v1492 = vpop.xlane.xlu0 %1491
    %v1493 = vsel %vm1021, %v1473, 0.0
    %1494 = vadd.xlane.f32.xlu0 %v1493
    %v1495 = vpop.xlane.xlu0 %1494
    %v1496 = vsel %vm1021, %v1475, 0.0
    %1497 = vadd.xlane.f32.xlu0 %v1496
    %v1498 = vpop.xlane.xlu0 %1497
    %v1499 = vsel %vm1021, %v1477, 0.0
    %1500 = vadd.xlane.f32.xlu0 %v1499
    %v1501 = vpop.xlane.xlu0 %1500
    %v1502 = vrcp.pop %v1480
    %v1503 = vmul.f32 %v1480, %v1502
    %v1504 = vsub.f32 1.0, %v1503
    %v1505 = vmul.f32 %v1502, %v1504
    %v1506 = vadd.f32 %v1502, %v1505
    %vm1507 = vweird.f32 %v1480
    %vm1508 = vweird.f32 %v1502
    %vm1509 = vmor %vm1507, %vm1508
    %v1510 = vsel %vm1509, %v1502, %v1506
    %v1511 = vand.u32 2147483647, %v1480
    %vm1512 = vcmp.eq.f32.partialorder %v1511, 8.507059e+37
    %v1513 = vand.u32 %v1480, 2147483648
    %v1514 = vor.u32 1.1754944e-38, %v1513
    %v1515 = vsel %vm1512, %v1514, %v1510
    %v1516 = vrcp.pop %v1483
    %v1517 = vmul.f32 %v1483, %v1516
    %v1518 = vsub.f32 1.0, %v1517
    %v1519 = vmul.f32 %v1516, %v1518
    %v1520 = vadd.f32 %v1516, %v1519
    %vm1521 = vweird.f32 %v1483
    %vm1522 = vweird.f32 %v1516
    %vm1523 = vmor %vm1521, %vm1522
    %v1524 = vsel %vm1523, %v1516, %v1520
    %v1525 = vand.u32 2147483647, %v1483
    %vm1526 = vcmp.eq.f32.partialorder %v1525, 8.507059e+37
    %v1527 = vand.u32 %v1483, 2147483648
    %v1528 = vor.u32 1.1754944e-38, %v1527
    %v1529 = vsel %vm1526, %v1528, %v1524
    %v1530 = vrcp.pop %v1486
    %v1531 = vmul.f32 %v1486, %v1530
    %v1532 = vsub.f32 1.0, %v1531
    %v1533 = vmul.f32 %v1530, %v1532
    %v1534 = vadd.f32 %v1530, %v1533
    %vm1535 = vweird.f32 %v1486
    %vm1536 = vweird.f32 %v1530
    %vm1537 = vmor %vm1535, %vm1536
    %v1538 = vsel %vm1537, %v1530, %v1534
    %v1539 = vand.u32 2147483647, %v1486
    %vm1540 = vcmp.eq.f32.partialorder %v1539, 8.507059e+37
    %v1541 = vand.u32 %v1486, 2147483648
    %v1542 = vor.u32 1.1754944e-38, %v1541
    %v1543 = vsel %vm1540, %v1542, %v1538
    %v1544 = vrcp.pop %v1489
    %v1545 = vmul.f32 %v1489, %v1544
    %v1546 = vsub.f32 1.0, %v1545
    %v1547 = vmul.f32 %v1544, %v1546
    %v1548 = vadd.f32 %v1544, %v1547
    %vm1549 = vweird.f32 %v1489
    %vm1550 = vweird.f32 %v1544
    %vm1551 = vmor %vm1549, %vm1550
    %v1552 = vsel %vm1551, %v1544, %v1548
    %v1553 = vand.u32 2147483647, %v1489
    %vm1554 = vcmp.eq.f32.partialorder %v1553, 8.507059e+37
    %v1555 = vand.u32 %v1489, 2147483648
    %v1556 = vor.u32 1.1754944e-38, %v1555
    %v1557 = vsel %vm1554, %v1556, %v1552
    %v1558 = vrcp.pop %v1492
    %v1559 = vmul.f32 %v1492, %v1558
    %v1560 = vsub.f32 1.0, %v1559
    %v1561 = vmul.f32 %v1558, %v1560
    %v1562 = vadd.f32 %v1558, %v1561
    %vm1563 = vweird.f32 %v1492
    %vm1564 = vweird.f32 %v1558
    %vm1565 = vmor %vm1563, %vm1564
    %v1566 = vsel %vm1565, %v1558, %v1562
    %v1567 = vand.u32 2147483647, %v1492
    %vm1568 = vcmp.eq.f32.partialorder %v1567, 8.507059e+37
    %v1569 = vand.u32 %v1492, 2147483648
    %v1570 = vor.u32 1.1754944e-38, %v1569
    %v1571 = vsel %vm1568, %v1570, %v1566
    %v1572 = vrcp.pop %v1495
    %v1573 = vmul.f32 %v1495, %v1572
    %v1574 = vsub.f32 1.0, %v1573
    %v1575 = vmul.f32 %v1572, %v1574
    %v1576 = vadd.f32 %v1572, %v1575
    %vm1577 = vweird.f32 %v1495
    %vm1578 = vweird.f32 %v1572
    %vm1579 = vmor %vm1577, %vm1578
    %v1580 = vsel %vm1579, %v1572, %v1576
    %v1581 = vand.u32 2147483647, %v1495
    %vm1582 = vcmp.eq.f32.partialorder %v1581, 8.507059e+37
    %v1583 = vand.u32 %v1495, 2147483648
    %v1584 = vor.u32 1.1754944e-38, %v1583
    %v1585 = vsel %vm1582, %v1584, %v1580
    %v1586 = vrcp.pop %v1498
    %v1587 = vmul.f32 %v1498, %v1586
    %v1588 = vsub.f32 1.0, %v1587
    %v1589 = vmul.f32 %v1586, %v1588
    %v1590 = vadd.f32 %v1586, %v1589
    %vm1591 = vweird.f32 %v1498
    %vm1592 = vweird.f32 %v1586
    %vm1593 = vmor %vm1591, %vm1592
    %v1594 = vsel %vm1593, %v1586, %v1590
    %v1595 = vand.u32 2147483647, %v1498
    %vm1596 = vcmp.eq.f32.partialorder %v1595, 8.507059e+37
    %v1597 = vand.u32 %v1498, 2147483648
    %v1598 = vor.u32 1.1754944e-38, %v1597
    %v1599 = vsel %vm1596, %v1598, %v1594
    %v1600 = vrcp.pop %v1501
    %v1601 = vmul.f32 %v1501, %v1600
    %v1602 = vsub.f32 1.0, %v1601
    %v1603 = vmul.f32 %v1600, %v1602
    %v1604 = vadd.f32 %v1600, %v1603
    %vm1605 = vweird.f32 %v1501
    %vm1606 = vweird.f32 %v1600
    %vm1607 = vmor %vm1605, %vm1606
    %v1608 = vsel %vm1607, %v1600, %v1604
    %v1609 = vand.u32 2147483647, %v1501
    %vm1610 = vcmp.eq.f32.partialorder %v1609, 8.507059e+37
    %v1611 = vand.u32 %v1501, 2147483648
    %v1612 = vor.u32 1.1754944e-38, %v1611
    %v1613 = vsel %vm1610, %v1612, %v1608
    %v1614 = vmul.f32 %v1463, %v1515
    %v1615 = vmul.f32 %v1465, %v1529
    %v1616 = vmul.f32 %v1467, %v1543
    %v1617 = vmul.f32 %v1469, %v1557
    %v1618 = vmul.f32 %v1471, %v1571
    %v1619 = vmul.f32 %v1473, %v1585
    %v1620 = vmul.f32 %v1475, %v1599
    %v1621 = vmul.f32 %v1477, %v1613
    %v1623 = vsel %vm1021, %v1614, 0
    %v1626 = vsel %vm1021, %v1615, 0
    %1628 = vmatpush.msra.mxu0 0.0
    %1629 = vmatpush.msra.mxu0 0.0
    %1630 = vmatpush.msra.mxu0 0.0
    %1631 = vmatpush.msra.mxu0 0.0
    %1632 = vmatpush.msra.mxu0 0.0
    %1633 = vmatpush.msra.mxu0 0.0
    %1634 = vmatpush.msra.mxu0 0.0
    %1635 = vmatpush.msra.mxu0 0.0
    %1636 = vmatpush.msra.mxu0 0.0
    %1637 = vmatpush.msra.mxu0 0.0
    %1638 = vmatpush.msra.mxu0 0.0
    %1639 = vmatpush.msra.mxu0 0.0
    %1640 = vmatpush.msra.mxu0 0.0
    %1641 = vmatpush.msra.mxu0 0.0
    %1642 = vmatpush.msra.mxu0 %v909
    %1643 = vmatpush.msra.mxu0 %v906
    %1644 = vmatmul.f32.gmra.mxu0 %v1623
    %v1645 = vpop.f32.mrf.mxu0
    %v1646 = vadd.f32 0.0, %v1645
    %1647 = vmatmul.f32.gmra.mxu0 %v1626
    %v1648 = vpop.f32.mrf.mxu0
    %v1649 = vadd.f32 0.0, %v1648
    %1650 = vdwg.mxu0
    %v1652 = vsel %vm1021, %v1616, 0
    %v1655 = vsel %vm1021, %v1617, 0
    %1657 = vmatpush.msra.mxu0 0.0
    %1658 = vmatpush.msra.mxu0 0.0
    %1659 = vmatpush.msra.mxu0 0.0
    %1660 = vmatpush.msra.mxu0 0.0
    %1661 = vmatpush.msra.mxu0 0.0
    %1662 = vmatpush.msra.mxu0 0.0
    %1663 = vmatpush.msra.mxu0 0.0
    %1664 = vmatpush.msra.mxu0 0.0
    %1665 = vmatpush.msra.mxu0 0.0
    %1666 = vmatpush.msra.mxu0 0.0
    %1667 = vmatpush.msra.mxu0 0.0
    %1668 = vmatpush.msra.mxu0 0.0
    %1669 = vmatpush.msra.mxu0 0.0
    %1670 = vmatpush.msra.mxu0 0.0
    %1671 = vmatpush.msra.mxu0 %v915
    %1672 = vmatpush.msra.mxu0 %v912
    %1673 = vmatmul.f32.gmra.mxu0 %v1652
    %v1674 = vpop.f32.mrf.mxu0
    %v1675 = vadd.f32 0.0, %v1674
    %1676 = vmatmul.f32.gmra.mxu0 %v1655
    %v1677 = vpop.f32.mrf.mxu0
    %v1678 = vadd.f32 0.0, %v1677
    %1679 = vdwg.mxu0
    %v1681 = vsel %vm1021, %v1618, 0
    %v1684 = vsel %vm1021, %v1619, 0
    %1686 = vmatpush.msra.mxu0 0.0
    %1687 = vmatpush.msra.mxu0 0.0
    %1688 = vmatpush.msra.mxu0 0.0
    %1689 = vmatpush.msra.mxu0 0.0
    %1690 = vmatpush.msra.mxu0 0.0
    %1691 = vmatpush.msra.mxu0 0.0
    %1692 = vmatpush.msra.mxu0 0.0
    %1693 = vmatpush.msra.mxu0 0.0
    %1694 = vmatpush.msra.mxu0 0.0
    %1695 = vmatpush.msra.mxu0 0.0
    %1696 = vmatpush.msra.mxu0 0.0
    %1697 = vmatpush.msra.mxu0 0.0
    %1698 = vmatpush.msra.mxu0 0.0
    %1699 = vmatpush.msra.mxu0 0.0
    %1700 = vmatpush.msra.mxu0 %v921
    %1701 = vmatpush.msra.mxu0 %v918
    %1702 = vmatmul.f32.gmra.mxu0 %v1681
    %v1703 = vpop.f32.mrf.mxu0
    %v1704 = vadd.f32 0.0, %v1703
    %1705 = vmatmul.f32.gmra.mxu0 %v1684
    %v1706 = vpop.f32.mrf.mxu0
    %v1707 = vadd.f32 0.0, %v1706
    %1708 = vdwg.mxu0
    %v1710 = vsel %vm1021, %v1620, 0
    %v1713 = vsel %vm1021, %v1621, 0
    %1715 = vmatpush.msra.mxu0 0.0
    %1716 = vmatpush.msra.mxu0 0.0
    %1717 = vmatpush.msra.mxu0 0.0
    %1718 = vmatpush.msra.mxu0 0.0
    %1719 = vmatpush.msra.mxu0 0.0
    %1720 = vmatpush.msra.mxu0 0.0
    %1721 = vmatpush.msra.mxu0 0.0
    %1722 = vmatpush.msra.mxu0 0.0
    %1723 = vmatpush.msra.mxu0 0.0
    %1724 = vmatpush.msra.mxu0 0.0
    %1725 = vmatpush.msra.mxu0 0.0
    %1726 = vmatpush.msra.mxu0 0.0
    %1727 = vmatpush.msra.mxu0 0.0
    %1728 = vmatpush.msra.mxu0 0.0
    %1729 = vmatpush.msra.mxu0 %v927
    %1730 = vmatpush.msra.mxu0 %v924
    %1731 = vmatmul.f32.gmra.mxu0 %v1710
    %v1732 = vpop.f32.mrf.mxu0
    %v1733 = vadd.f32 0.0, %v1732
    %1734 = vmatmul.f32.gmra.mxu0 %v1713
    %v1735 = vpop.f32.mrf.mxu0
    %v1736 = vadd.f32 0.0, %v1735
    %1737 = vdwg.mxu0
    %1738 = vst [vmem:[#allocation2 + $0x8] sm:$0xff] %v1646
    %1739 = vst [vmem:[#allocation2 + $0x18] sm:$0xff] %v1649
    %1740 = vst [vmem:[#allocation2 + $0x28] sm:$0xff] %v1675
    %1741 = vst [vmem:[#allocation2 + $0x38] sm:$0xff] %v1678
    %1742 = vst [vmem:[#allocation2 + $0x48] sm:$0xff] %v1704
    %1743 = vst [vmem:[#allocation2 + $0x58] sm:$0xff] %v1707
    %1744 = vst [vmem:[#allocation2 + $0x68] sm:$0xff] %v1733
    %1745 = vst [vmem:[#allocation2 + $0x78] sm:$0xff] %v1736
    %v1746 = vld [vmem:[#allocation2] sm:$0xff]
    %v1747 = vld [vmem:[#allocation2 + $0x8] sm:$0xff]
    %v1748 = vld [vmem:[#allocation2 + $0x10] sm:$0xff]
    %v1749 = vld [vmem:[#allocation2 + $0x18] sm:$0xff]
    %v1750 = vld [vmem:[#allocation2 + $0x20] sm:$0xff]
    %v1751 = vld [vmem:[#allocation2 + $0x28] sm:$0xff]
    %v1752 = vld [vmem:[#allocation2 + $0x30] sm:$0xff]
    %v1753 = vld [vmem:[#allocation2 + $0x38] sm:$0xff]
    %v1754 = vld [vmem:[#allocation2 + $0x40] sm:$0xff]
    %v1755 = vld [vmem:[#allocation2 + $0x48] sm:$0xff]
    %v1756 = vld [vmem:[#allocation2 + $0x50] sm:$0xff]
    %v1757 = vld [vmem:[#allocation2 + $0x58] sm:$0xff]
    %v1758 = vld [vmem:[#allocation2 + $0x60] sm:$0xff]
    %v1759 = vld [vmem:[#allocation2 + $0x68] sm:$0xff]
    %v1760 = vld [vmem:[#allocation2 + $0x70] sm:$0xff]
    %v1761 = vld [vmem:[#allocation2 + $0x78] sm:$0xff]
    %v1762 = vld [vmem:[#allocation11] sm:$0xff]
    %v1763 = vld [vmem:[#allocation11 + $0x8] sm:$0xff]
    %v1764 = vld [vmem:[#allocation11 + $0x10] sm:$0xff]
    %v1765 = vld [vmem:[#allocation11 + $0x18] sm:$0xff]
    %v1766 = vld [vmem:[#allocation11 + $0x20] sm:$0xff]
    %v1767 = vld [vmem:[#allocation11 + $0x28] sm:$0xff]
    %v1768 = vld [vmem:[#allocation11 + $0x30] sm:$0xff]
    %v1769 = vld [vmem:[#allocation11 + $0x38] sm:$0xff]
    %v1770 = vld [vmem:[#allocation11 + $0x40] sm:$0xff]
    %v1771 = vld [vmem:[#allocation11 + $0x48] sm:$0xff]
    %v1772 = vld [vmem:[#allocation11 + $0x50] sm:$0xff]
    %v1773 = vld [vmem:[#allocation11 + $0x58] sm:$0xff]
    %v1774 = vld [vmem:[#allocation11 + $0x60] sm:$0xff]
    %v1775 = vld [vmem:[#allocation11 + $0x68] sm:$0xff]
    %v1776 = vld [vmem:[#allocation11 + $0x70] sm:$0xff]
    %v1777 = vld [vmem:[#allocation11 + $0x78] sm:$0xff]
    %v1778 = vld [vmem:[#allocation11 + $0x80] sm:$0xff]
    %v1779 = vld [vmem:[#allocation11 + $0x88] sm:$0xff]
    %v1780 = vld [vmem:[#allocation11 + $0x90] sm:$0xff]
    %v1781 = vld [vmem:[#allocation11 + $0x98] sm:$0xff]
    %v1782 = vld [vmem:[#allocation11 + $0xa0] sm:$0xff]
    %v1783 = vld [vmem:[#allocation11 + $0xa8] sm:$0xff]
    %v1784 = vld [vmem:[#allocation11 + $0xb0] sm:$0xff]
    %v1785 = vld [vmem:[#allocation11 + $0xb8] sm:$0xff]
    %v1786 = vld [vmem:[#allocation11 + $0xc0] sm:$0xff]
    %v1787 = vld [vmem:[#allocation11 + $0xc8] sm:$0xff]
    %v1788 = vld [vmem:[#allocation11 + $0xd0] sm:$0xff]
    %v1789 = vld [vmem:[#allocation11 + $0xd8] sm:$0xff]
    %v1790 = vld [vmem:[#allocation11 + $0xe0] sm:$0xff]
    %v1791 = vld [vmem:[#allocation11 + $0xe8] sm:$0xff]
    %v1792 = vld [vmem:[#allocation11 + $0xf0] sm:$0xff]
    %v1793 = vld [vmem:[#allocation11 + $0xf8] sm:$0xff]
    %v1794 = vld [vmem:[#allocation11 + $0x100] sm:$0xff]
    %v1795 = vld [vmem:[#allocation11 + $0x108] sm:$0xff]
    %v1796 = vld [vmem:[#allocation11 + $0x110] sm:$0xff]
    %v1797 = vld [vmem:[#allocation11 + $0x118] sm:$0xff]
    %v1798 = vld [vmem:[#allocation11 + $0x120] sm:$0xff]
    %v1799 = vld [vmem:[#allocation11 + $0x128] sm:$0xff]
    %v1800 = vld [vmem:[#allocation11 + $0x130] sm:$0xff]
    %v1801 = vld [vmem:[#allocation11 + $0x138] sm:$0xff]
    %v1802 = vld [vmem:[#allocation11 + $0x140] sm:$0xff]
    %v1803 = vld [vmem:[#allocation11 + $0x148] sm:$0xff]
    %v1804 = vld [vmem:[#allocation11 + $0x150] sm:$0xff]
    %v1805 = vld [vmem:[#allocation11 + $0x158] sm:$0xff]
    %v1806 = vld [vmem:[#allocation11 + $0x160] sm:$0xff]
    %v1807 = vld [vmem:[#allocation11 + $0x168] sm:$0xff]
    %v1808 = vld [vmem:[#allocation11 + $0x170] sm:$0xff]
    %v1809 = vld [vmem:[#allocation11 + $0x178] sm:$0xff]
    %v1810 = vld [vmem:[#allocation11 + $0x180] sm:$0xff]
    %v1811 = vld [vmem:[#allocation11 + $0x188] sm:$0xff]
    %v1812 = vld [vmem:[#allocation11 + $0x190] sm:$0xff]
    %v1813 = vld [vmem:[#allocation11 + $0x198] sm:$0xff]
    %v1814 = vld [vmem:[#allocation11 + $0x1a0] sm:$0xff]
    %v1815 = vld [vmem:[#allocation11 + $0x1a8] sm:$0xff]
    %v1816 = vld [vmem:[#allocation11 + $0x1b0] sm:$0xff]
    %v1817 = vld [vmem:[#allocation11 + $0x1b8] sm:$0xff]
    %v1818 = vld [vmem:[#allocation11 + $0x1c0] sm:$0xff]
    %v1819 = vld [vmem:[#allocation11 + $0x1c8] sm:$0xff]
    %v1820 = vld [vmem:[#allocation11 + $0x1d0] sm:$0xff]
    %v1821 = vld [vmem:[#allocation11 + $0x1d8] sm:$0xff]
    %v1822 = vld [vmem:[#allocation11 + $0x1e0] sm:$0xff]
    %v1823 = vld [vmem:[#allocation11 + $0x1e8] sm:$0xff]
    %v1824 = vld [vmem:[#allocation11 + $0x1f0] sm:$0xff]
    %v1825 = vld [vmem:[#allocation11 + $0x1f8] sm:$0xff]
    %v1826 = vld [vmem:[%s5] sm:$0x3]
    %v1828 = vperm.slane %v1826, 0
    %v1829 = vperm.slane %v1826, 1
    %1832 = vmatpush.msra.mxu0 %v1792
    %1833 = vmatpush.msra.mxu0 %v1790
    %1834 = vmatpush.msra.mxu0 %v1788
    %1835 = vmatpush.msra.mxu0 %v1786
    %1836 = vmatpush.msra.mxu0 %v1784
    %1837 = vmatpush.msra.mxu0 %v1782
    %1838 = vmatpush.msra.mxu0 %v1780
    %1839 = vmatpush.msra.mxu0 %v1778
    %1840 = vmatpush.msra.mxu0 %v1776
    %1841 = vmatpush.msra.mxu0 %v1774
    %1842 = vmatpush.msra.mxu0 %v1772
    %1843 = vmatpush.msra.mxu0 %v1770
    %1844 = vmatpush.msra.mxu0 %v1768
    %1845 = vmatpush.msra.mxu0 %v1766
    %1846 = vmatpush.msra.mxu0 %v1764
    %1847 = vmatpush.msra.mxu0 %v1762
    %1848 = vmatmul.f32.gmra.mxu0 %v1746
    %v1849 = vpop.f32.mrf.mxu0
    %v1850 = vadd.f32 %v1828, %v1849
    %1851 = vmatmul.f32.gmra.mxu0 %v1748
    %v1852 = vpop.f32.mrf.mxu0
    %v1853 = vadd.f32 %v1828, %v1852
    %1854 = vmatmul.f32.gmra.mxu0 %v1750
    %v1855 = vpop.f32.mrf.mxu0
    %v1856 = vadd.f32 %v1828, %v1855
    %1857 = vmatmul.f32.gmra.mxu0 %v1752
    %v1858 = vpop.f32.mrf.mxu0
    %v1859 = vadd.f32 %v1828, %v1858
    %1860 = vmatmul.f32.gmra.mxu0 %v1754
    %v1861 = vpop.f32.mrf.mxu0
    %v1862 = vadd.f32 %v1828, %v1861
    %1863 = vmatmul.f32.gmra.mxu0 %v1756
    %v1864 = vpop.f32.mrf.mxu0
    %v1865 = vadd.f32 %v1828, %v1864
    %1866 = vmatmul.f32.gmra.mxu0 %v1758
    %v1867 = vpop.f32.mrf.mxu0
    %v1868 = vadd.f32 %v1828, %v1867
    %1869 = vmatmul.f32.gmra.mxu0 %v1760
    %v1870 = vpop.f32.mrf.mxu0
    %v1871 = vadd.f32 %v1828, %v1870
    %1872 = vdwg.mxu0
    %1873 = vmatpush.msra.mxu0 %v1824
    %1874 = vmatpush.msra.mxu0 %v1822
    %1875 = vmatpush.msra.mxu0 %v1820
    %1876 = vmatpush.msra.mxu0 %v1818
    %1877 = vmatpush.msra.mxu0 %v1816
    %1878 = vmatpush.msra.mxu0 %v1814
    %1879 = vmatpush.msra.mxu0 %v1812
    %1880 = vmatpush.msra.mxu0 %v1810
    %1881 = vmatpush.msra.mxu0 %v1808
    %1882 = vmatpush.msra.mxu0 %v1806
    %1883 = vmatpush.msra.mxu0 %v1804
    %1884 = vmatpush.msra.mxu0 %v1802
    %1885 = vmatpush.msra.mxu0 %v1800
    %1886 = vmatpush.msra.mxu0 %v1798
    %1887 = vmatpush.msra.mxu0 %v1796
    %1888 = vmatpush.msra.mxu0 %v1794
    %1889 = vmatmul.f32.gmra.mxu0 %v1747
    %v1890 = vpop.f32.mrf.mxu0
    %v1891 = vadd.f32 %v1850, %v1890
    %1892 = vmatmul.f32.gmra.mxu0 %v1749
    %v1893 = vpop.f32.mrf.mxu0
    %v1894 = vadd.f32 %v1853, %v1893
    %1895 = vmatmul.f32.gmra.mxu0 %v1751
    %v1896 = vpop.f32.mrf.mxu0
    %v1897 = vadd.f32 %v1856, %v1896
    %1898 = vmatmul.f32.gmra.mxu0 %v1753
    %v1899 = vpop.f32.mrf.mxu0
    %v1900 = vadd.f32 %v1859, %v1899
    %1901 = vmatmul.f32.gmra.mxu0 %v1755
    %v1902 = vpop.f32.mrf.mxu0
    %v1903 = vadd.f32 %v1862, %v1902
    %1904 = vmatmul.f32.gmra.mxu0 %v1757
    %v1905 = vpop.f32.mrf.mxu0
    %v1906 = vadd.f32 %v1865, %v1905
    %1907 = vmatmul.f32.gmra.mxu0 %v1759
    %v1908 = vpop.f32.mrf.mxu0
    %v1909 = vadd.f32 %v1868, %v1908
    %1910 = vmatmul.f32.gmra.mxu0 %v1761
    %v1911 = vpop.f32.mrf.mxu0
    %v1912 = vadd.f32 %v1871, %v1911
    %1913 = vdwg.mxu0
    %1914 = vmatpush.msra.mxu0 %v1793
    %1915 = vmatpush.msra.mxu0 %v1791
    %1916 = vmatpush.msra.mxu0 %v1789
    %1917 = vmatpush.msra.mxu0 %v1787
    %1918 = vmatpush.msra.mxu0 %v1785
    %1919 = vmatpush.msra.mxu0 %v1783
    %1920 = vmatpush.msra.mxu0 %v1781
    %1921 = vmatpush.msra.mxu0 %v1779
    %1922 = vmatpush.msra.mxu0 %v1777
    %1923 = vmatpush.msra.mxu0 %v1775
    %1924 = vmatpush.msra.mxu0 %v1773
    %1925 = vmatpush.msra.mxu0 %v1771
    %1926 = vmatpush.msra.mxu0 %v1769
    %1927 = vmatpush.msra.mxu0 %v1767
    %1928 = vmatpush.msra.mxu0 %v1765
    %1929 = vmatpush.msra.mxu0 %v1763
    %1930 = vmatmul.f32.gmra.mxu0 %v1746
    %v1931 = vpop.f32.mrf.mxu0
    %v1932 = vadd.f32 %v1829, %v1931
    %1933 = vmatmul.f32.gmra.mxu0 %v1748
    %v1934 = vpop.f32.mrf.mxu0
    %v1935 = vadd.f32 %v1829, %v1934
    %1936 = vmatmul.f32.gmra.mxu0 %v1750
    %v1937 = vpop.f32.mrf.mxu0
    %v1938 = vadd.f32 %v1829, %v1937
    %1939 = vmatmul.f32.gmra.mxu0 %v1752
    %v1940 = vpop.f32.mrf.mxu0
    %v1941 = vadd.f32 %v1829, %v1940
    %1942 = vmatmul.f32.gmra.mxu0 %v1754
    %v1943 = vpop.f32.mrf.mxu0
    %v1944 = vadd.f32 %v1829, %v1943
    %1945 = vmatmul.f32.gmra.mxu0 %v1756
    %v1946 = vpop.f32.mrf.mxu0
    %v1947 = vadd.f32 %v1829, %v1946
    %1948 = vmatmul.f32.gmra.mxu0 %v1758
    %v1949 = vpop.f32.mrf.mxu0
    %v1950 = vadd.f32 %v1829, %v1949
    %1951 = vmatmul.f32.gmra.mxu0 %v1760
    %v1952 = vpop.f32.mrf.mxu0
    %v1953 = vadd.f32 %v1829, %v1952
    %1954 = vdwg.mxu0
    %1955 = vmatpush.msra.mxu0 %v1825
    %1956 = vmatpush.msra.mxu0 %v1823
    %1957 = vmatpush.msra.mxu0 %v1821
    %1958 = vmatpush.msra.mxu0 %v1819
    %1959 = vmatpush.msra.mxu0 %v1817
    %1960 = vmatpush.msra.mxu0 %v1815
    %1961 = vmatpush.msra.mxu0 %v1813
    %1962 = vmatpush.msra.mxu0 %v1811
    %1963 = vmatpush.msra.mxu0 %v1809
    %1964 = vmatpush.msra.mxu0 %v1807
    %1965 = vmatpush.msra.mxu0 %v1805
    %1966 = vmatpush.msra.mxu0 %v1803
    %1967 = vmatpush.msra.mxu0 %v1801
    %1968 = vmatpush.msra.mxu0 %v1799
    %1969 = vmatpush.msra.mxu0 %v1797
    %1970 = vmatpush.msra.mxu0 %v1795
    %1971 = vmatmul.f32.gmra.mxu0 %v1747
    %v1972 = vpop.f32.mrf.mxu0
    %v1973 = vadd.f32 %v1932, %v1972
    %1974 = vmatmul.f32.gmra.mxu0 %v1749
    %v1975 = vpop.f32.mrf.mxu0
    %v1976 = vadd.f32 %v1935, %v1975
    %1977 = vmatmul.f32.gmra.mxu0 %v1751
    %v1978 = vpop.f32.mrf.mxu0
    %v1979 = vadd.f32 %v1938, %v1978
    %1980 = vmatmul.f32.gmra.mxu0 %v1753
    %v1981 = vpop.f32.mrf.mxu0
    %v1982 = vadd.f32 %v1941, %v1981
    %1983 = vmatmul.f32.gmra.mxu0 %v1755
    %v1984 = vpop.f32.mrf.mxu0
    %v1985 = vadd.f32 %v1944, %v1984
    %1986 = vmatmul.f32.gmra.mxu0 %v1757
    %v1987 = vpop.f32.mrf.mxu0
    %v1988 = vadd.f32 %v1947, %v1987
    %1989 = vmatmul.f32.gmra.mxu0 %v1759
    %v1990 = vpop.f32.mrf.mxu0
    %v1991 = vadd.f32 %v1950, %v1990
    %1992 = vmatmul.f32.gmra.mxu0 %v1761
    %v1993 = vpop.f32.mrf.mxu0
    %v1994 = vadd.f32 %v1953, %v1993
    %1995 = vdwg.mxu0
    %v1996 = vadd.f32 %v215, %v1891
    %v1997 = vadd.f32 %v216, %v1973
    %v1998 = vadd.f32 %v217, %v1894
    %v1999 = vadd.f32 %v218, %v1976
    %v2000 = vadd.f32 %v219, %v1897
    %v2001 = vadd.f32 %v220, %v1979
    %v2002 = vadd.f32 %v221, %v1900
    %v2003 = vadd.f32 %v222, %v1982
    %v2004 = vadd.f32 %v223, %v1903
    %v2005 = vadd.f32 %v224, %v1985
    %v2006 = vadd.f32 %v225, %v1906
    %v2007 = vadd.f32 %v226, %v1988
    %v2008 = vadd.f32 %v227, %v1909
    %v2009 = vadd.f32 %v228, %v1991
    %v2010 = vadd.f32 %v229, %v1912
    %v2011 = vadd.f32 %v230, %v1994
    %v2012 = vld [vmem:[#allocation12] sm:$0x3]
    %v2013 = vld [vmem:[#allocation14] sm:$0x3]
    %v2014 = vadd.f32 %v1996, %v1997
    %2015 = vadd.xlane.f32.xlu0 %v2014
    %v2016 = vpop.xlane.xlu0 %2015
    %v2017 = vadd.f32 %v1998, %v1999
    %2018 = vadd.xlane.f32.xlu0 %v2017
    %v2019 = vpop.xlane.xlu0 %2018
    %v2020 = vadd.f32 %v2000, %v2001
    %2021 = vadd.xlane.f32.xlu0 %v2020
    %v2022 = vpop.xlane.xlu0 %2021
    %v2023 = vadd.f32 %v2002, %v2003
    %2024 = vadd.xlane.f32.xlu0 %v2023
    %v2025 = vpop.xlane.xlu0 %2024
    %v2026 = vadd.f32 %v2004, %v2005
    %2027 = vadd.xlane.f32.xlu0 %v2026
    %v2028 = vpop.xlane.xlu0 %2027
    %v2029 = vadd.f32 %v2006, %v2007
    %2030 = vadd.xlane.f32.xlu0 %v2029
    %v2031 = vpop.xlane.xlu0 %2030
    %v2032 = vadd.f32 %v2008, %v2009
    %2033 = vadd.xlane.f32.xlu0 %v2032
    %v2034 = vpop.xlane.xlu0 %2033
    %v2035 = vadd.f32 %v2010, %v2011
    %2036 = vadd.xlane.f32.xlu0 %v2035
    %v2037 = vpop.xlane.xlu0 %2036
    %v2038 = vrcp.pop 256.0
    %v2039 = vmul.f32 256.0, %v2038
    %v2040 = vsub.f32 1.0, %v2039
    %v2041 = vmul.f32 %v2038, %v2040
    %v2042 = vadd.f32 %v2038, %v2041
    %vm2043 = vweird.f32 %v2038
    %v2044 = vsel %vm2043, %v2038, %v2042
    %v2045 = vmul.f32 %v2016, %v2044
    %v2046 = vmul.f32 %v2019, %v2044
    %v2047 = vmul.f32 %v2022, %v2044
    %v2048 = vmul.f32 %v2025, %v2044
    %v2049 = vmul.f32 %v2028, %v2044
    %v2050 = vmul.f32 %v2031, %v2044
    %v2051 = vmul.f32 %v2034, %v2044
    %v2052 = vmul.f32 %v2037, %v2044
    %v2053 = vsub.f32 %v1996, %v2045
    %v2054 = vsub.f32 %v1997, %v2045
    %v2055 = vsub.f32 %v1998, %v2046
    %v2056 = vsub.f32 %v1999, %v2046
    %v2057 = vsub.f32 %v2000, %v2047
    %v2058 = vsub.f32 %v2001, %v2047
    %v2059 = vsub.f32 %v2002, %v2048
    %v2060 = vsub.f32 %v2003, %v2048
    %v2061 = vsub.f32 %v2004, %v2049
    %v2062 = vsub.f32 %v2005, %v2049
    %v2063 = vsub.f32 %v2006, %v2050
    %v2064 = vsub.f32 %v2007, %v2050
    %v2065 = vsub.f32 %v2008, %v2051
    %v2066 = vsub.f32 %v2009, %v2051
    %v2067 = vsub.f32 %v2010, %v2052
    %v2068 = vsub.f32 %v2011, %v2052
    %v2069 = vmul.f32 %v2053, %v2053
    %v2070 = vmul.f32 %v2054, %v2054
    %v2071 = vmul.f32 %v2055, %v2055
    %v2072 = vmul.f32 %v2056, %v2056
    %v2073 = vmul.f32 %v2057, %v2057
    %v2074 = vmul.f32 %v2058, %v2058
    %v2075 = vmul.f32 %v2059, %v2059
    %v2076 = vmul.f32 %v2060, %v2060
    %v2077 = vmul.f32 %v2061, %v2061
    %v2078 = vmul.f32 %v2062, %v2062
    %v2079 = vmul.f32 %v2063, %v2063
    %v2080 = vmul.f32 %v2064, %v2064
    %v2081 = vmul.f32 %v2065, %v2065
    %v2082 = vmul.f32 %v2066, %v2066
    %v2083 = vmul.f32 %v2067, %v2067
    %v2084 = vmul.f32 %v2068, %v2068
    %v2085 = vadd.f32 %v2069, %v2070
    %2086 = vadd.xlane.f32.xlu0 %v2085
    %v2087 = vpop.xlane.xlu0 %2086
    %v2088 = vadd.f32 %v2071, %v2072
    %2089 = vadd.xlane.f32.xlu0 %v2088
    %v2090 = vpop.xlane.xlu0 %2089
    %v2091 = vadd.f32 %v2073, %v2074
    %2092 = vadd.xlane.f32.xlu0 %v2091
    %v2093 = vpop.xlane.xlu0 %2092
    %v2094 = vadd.f32 %v2075, %v2076
    %2095 = vadd.xlane.f32.xlu0 %v2094
    %v2096 = vpop.xlane.xlu0 %2095
    %v2097 = vadd.f32 %v2077, %v2078
    %2098 = vadd.xlane.f32.xlu0 %v2097
    %v2099 = vpop.xlane.xlu0 %2098
    %v2100 = vadd.f32 %v2079, %v2080
    %2101 = vadd.xlane.f32.xlu0 %v2100
    %v2102 = vpop.xlane.xlu0 %2101
    %v2103 = vadd.f32 %v2081, %v2082
    %2104 = vadd.xlane.f32.xlu0 %v2103
    %v2105 = vpop.xlane.xlu0 %2104
    %v2106 = vadd.f32 %v2083, %v2084
    %2107 = vadd.xlane.f32.xlu0 %v2106
    %v2108 = vpop.xlane.xlu0 %2107
    %v2109 = vmul.f32 %v2087, %v2044
    %v2110 = vmul.f32 %v2090, %v2044
    %v2111 = vmul.f32 %v2093, %v2044
    %v2112 = vmul.f32 %v2096, %v2044
    %v2113 = vmul.f32 %v2099, %v2044
    %v2114 = vmul.f32 %v2102, %v2044
    %v2115 = vmul.f32 %v2105, %v2044
    %v2116 = vmul.f32 %v2108, %v2044
    %v2117 = vadd.f32 %v2109, 1e-05
    %v2118 = vadd.f32 %v2110, 1e-05
    %v2119 = vadd.f32 %v2111, 1e-05
    %v2120 = vadd.f32 %v2112, 1e-05
    %v2121 = vadd.f32 %v2113, 1e-05
    %v2122 = vadd.f32 %v2114, 1e-05
    %v2123 = vadd.f32 %v2115, 1e-05
    %v2124 = vadd.f32 %v2116, 1e-05
    %v2125 = vrsqrt.pop %v2117
    %v2126 = vmul.f32 %v2125, %v2117
    %v2127 = vmul.f32 %v2126, %v2125
    %v2128 = vmul.f32 0.5, %v2127
    %v2129 = vsub.f32 1.5, %v2128
    %v2130 = vmul.f32 %v2125, %v2129
    %vm2131 = vweird.f32 %v2117
    %vm2132 = vweird.f32 %v2125
    %vm2133 = vmor %vm2131, %vm2132
    %v2134 = vsel %vm2133, %v2125, %v2130
    %v2135 = vrsqrt.pop %v2118
    %v2136 = vmul.f32 %v2135, %v2118
    %v2137 = vmul.f32 %v2136, %v2135
    %v2138 = vmul.f32 0.5, %v2137
    %v2139 = vsub.f32 1.5, %v2138
    %v2140 = vmul.f32 %v2135, %v2139
    %vm2141 = vweird.f32 %v2118
    %vm2142 = vweird.f32 %v2135
    %vm2143 = vmor %vm2141, %vm2142
    %v2144 = vsel %vm2143, %v2135, %v2140
    %v2145 = vrsqrt.pop %v2119
    %v2146 = vmul.f32 %v2145, %v2119
    %v2147 = vmul.f32 %v2146, %v2145
    %v2148 = vmul.f32 0.5, %v2147
    %v2149 = vsub.f32 1.5, %v2148
    %v2150 = vmul.f32 %v2145, %v2149
    %vm2151 = vweird.f32 %v2119
    %vm2152 = vweird.f32 %v2145
    %vm2153 = vmor %vm2151, %vm2152
    %v2154 = vsel %vm2153, %v2145, %v2150
    %v2155 = vrsqrt.pop %v2120
    %v2156 = vmul.f32 %v2155, %v2120
    %v2157 = vmul.f32 %v2156, %v2155
    %v2158 = vmul.f32 0.5, %v2157
    %v2159 = vsub.f32 1.5, %v2158
    %v2160 = vmul.f32 %v2155, %v2159
    %vm2161 = vweird.f32 %v2120
    %vm2162 = vweird.f32 %v2155
    %vm2163 = vmor %vm2161, %vm2162
    %v2164 = vsel %vm2163, %v2155, %v2160
    %v2165 = vrsqrt.pop %v2121
    %v2166 = vmul.f32 %v2165, %v2121
    %v2167 = vmul.f32 %v2166, %v2165
    %v2168 = vmul.f32 0.5, %v2167
    %v2169 = vsub.f32 1.5, %v2168
    %v2170 = vmul.f32 %v2165, %v2169
    %vm2171 = vweird.f32 %v2121
    %vm2172 = vweird.f32 %v2165
    %vm2173 = vmor %vm2171, %vm2172
    %v2174 = vsel %vm2173, %v2165, %v2170
    %v2175 = vrsqrt.pop %v2122
    %v2176 = vmul.f32 %v2175, %v2122
    %v2177 = vmul.f32 %v2176, %v2175
    %v2178 = vmul.f32 0.5, %v2177
    %v2179 = vsub.f32 1.5, %v2178
    %v2180 = vmul.f32 %v2175, %v2179
    %vm2181 = vweird.f32 %v2122
    %vm2182 = vweird.f32 %v2175
    %vm2183 = vmor %vm2181, %vm2182
    %v2184 = vsel %vm2183, %v2175, %v2180
    %v2185 = vrsqrt.pop %v2123
    %v2186 = vmul.f32 %v2185, %v2123
    %v2187 = vmul.f32 %v2186, %v2185
    %v2188 = vmul.f32 0.5, %v2187
    %v2189 = vsub.f32 1.5, %v2188
    %v2190 = vmul.f32 %v2185, %v2189
    %vm2191 = vweird.f32 %v2123
    %vm2192 = vweird.f32 %v2185
    %vm2193 = vmor %vm2191, %vm2192
    %v2194 = vsel %vm2193, %v2185, %v2190
    %v2195 = vrsqrt.pop %v2124
    %v2196 = vmul.f32 %v2195, %v2124
    %v2197 = vmul.f32 %v2196, %v2195
    %v2198 = vmul.f32 0.5, %v2197
    %v2199 = vsub.f32 1.5, %v2198
    %v2200 = vmul.f32 %v2195, %v2199
    %vm2201 = vweird.f32 %v2124
    %vm2202 = vweird.f32 %v2195
    %vm2203 = vmor %vm2201, %vm2202
    %v2204 = vsel %vm2203, %v2195, %v2200
    %v2205 = vmul.f32 %v2053, %v2134
    %v2206 = vmul.f32 %v2054, %v2134
    %v2207 = vmul.f32 %v2055, %v2144
    %v2208 = vmul.f32 %v2056, %v2144
    %v2209 = vmul.f32 %v2057, %v2154
    %v2210 = vmul.f32 %v2058, %v2154
    %v2211 = vmul.f32 %v2059, %v2164
    %v2212 = vmul.f32 %v2060, %v2164
    %v2213 = vmul.f32 %v2061, %v2174
    %v2214 = vmul.f32 %v2062, %v2174
    %v2215 = vmul.f32 %v2063, %v2184
    %v2216 = vmul.f32 %v2064, %v2184
    %v2217 = vmul.f32 %v2065, %v2194
    %v2218 = vmul.f32 %v2066, %v2194
    %v2219 = vmul.f32 %v2067, %v2204
    %v2220 = vmul.f32 %v2068, %v2204
    %v2222 = vperm.slane %v2012, 0
    %v2223 = vperm.slane %v2012, 1
    %v2226 = vmul.f32 %v2205, %v2222
    %v2227 = vmul.f32 %v2206, %v2223
    %v2228 = vmul.f32 %v2207, %v2222
    %v2229 = vmul.f32 %v2208, %v2223
    %v2230 = vmul.f32 %v2209, %v2222
    %v2231 = vmul.f32 %v2210, %v2223
    %v2232 = vmul.f32 %v2211, %v2222
    %v2233 = vmul.f32 %v2212, %v2223
    %v2234 = vmul.f32 %v2213, %v2222
    %v2235 = vmul.f32 %v2214, %v2223
    %v2236 = vmul.f32 %v2215, %v2222
    %v2237 = vmul.f32 %v2216, %v2223
    %v2238 = vmul.f32 %v2217, %v2222
    %v2239 = vmul.f32 %v2218, %v2223
    %v2240 = vmul.f32 %v2219, %v2222
    %v2241 = vmul.f32 %v2220, %v2223
    %v2243 = vperm.slane %v2013, 0
    %v2244 = vperm.slane %v2013, 1
    %v2247 = vadd.f32 %v2226, %v2243
    %v2248 = vadd.f32 %v2227, %v2244
    %v2249 = vadd.f32 %v2228, %v2243
    %v2250 = vadd.f32 %v2229, %v2244
    %v2251 = vadd.f32 %v2230, %v2243
    %v2252 = vadd.f32 %v2231, %v2244
    %v2253 = vadd.f32 %v2232, %v2243
    %v2254 = vadd.f32 %v2233, %v2244
    %v2255 = vadd.f32 %v2234, %v2243
    %v2256 = vadd.f32 %v2235, %v2244
    %v2257 = vadd.f32 %v2236, %v2243
    %v2258 = vadd.f32 %v2237, %v2244
    %v2259 = vadd.f32 %v2238, %v2243
    %v2260 = vadd.f32 %v2239, %v2244
    %v2261 = vadd.f32 %v2240, %v2243
    %v2262 = vadd.f32 %v2241, %v2244
    %v2263 = vld [vmem:[#allocation6] sm:$0x3]
    %v2264 = vld [vmem:[#allocation6 + $0x2] sm:$0x3]
    %v2265 = vld [vmem:[#allocation6 + $0x4] sm:$0x3]
    %v2266 = vld [vmem:[#allocation6 + $0x6] sm:$0x3]
    %v2271 = vperm.slane %v2263, 0
    %v2272 = vperm.slane %v2263, 1
    %v2273 = vperm.slane %v2264, 0
    %v2274 = vperm.slane %v2264, 1
    %v2275 = vperm.slane %v2265, 0
    %v2276 = vperm.slane %v2265, 1
    %v2277 = vperm.slane %v2266, 0
    %v2278 = vperm.slane %v2266, 1
    %v2287 = vadd.f32 %v2247, %v2271
    %v2288 = vadd.f32 %v2248, %v2272
    %v2289 = vadd.f32 %v2249, %v2271
    %v2290 = vadd.f32 %v2250, %v2272
    %v2291 = vadd.f32 %v2251, %v2273
    %v2292 = vadd.f32 %v2252, %v2274
    %v2293 = vadd.f32 %v2253, %v2273
    %v2294 = vadd.f32 %v2254, %v2274
    %v2295 = vadd.f32 %v2255, %v2275
    %v2296 = vadd.f32 %v2256, %v2276
    %v2297 = vadd.f32 %v2257, %v2275
    %v2298 = vadd.f32 %v2258, %v2276
    %v2299 = vadd.f32 %v2259, %v2277
    %v2300 = vadd.f32 %v2260, %v2278
    %v2301 = vadd.f32 %v2261, %v2277
    %v2302 = vadd.f32 %v2262, %v2278
    %v2303 = vld [vmem:[#allocation15] sm:$0x3]
    %v2304 = vld [vmem:[%s9] sm:$0x3]
    %v2305 = vadd.f32 %v2287, %v2288
    %2306 = vadd.xlane.f32.xlu0 %v2305
    %v2307 = vpop.xlane.xlu0 %2306
    %v2308 = vadd.f32 %v2289, %v2290
    %2309 = vadd.xlane.f32.xlu0 %v2308
    %v2310 = vpop.xlane.xlu0 %2309
    %v2311 = vadd.f32 %v2291, %v2292
    %2312 = vadd.xlane.f32.xlu0 %v2311
    %v2313 = vpop.xlane.xlu0 %2312
    %v2314 = vadd.f32 %v2293, %v2294
    %2315 = vadd.xlane.f32.xlu0 %v2314
    %v2316 = vpop.xlane.xlu0 %2315
    %v2317 = vadd.f32 %v2295, %v2296
    %2318 = vadd.xlane.f32.xlu0 %v2317
    %v2319 = vpop.xlane.xlu0 %2318
    %v2320 = vadd.f32 %v2297, %v2298
    %2321 = vadd.xlane.f32.xlu0 %v2320
    %v2322 = vpop.xlane.xlu0 %2321
    %v2323 = vadd.f32 %v2299, %v2300
    %2324 = vadd.xlane.f32.xlu0 %v2323
    %v2325 = vpop.xlane.xlu0 %2324
    %v2326 = vadd.f32 %v2301, %v2302
    %2327 = vadd.xlane.f32.xlu0 %v2326
    %v2328 = vpop.xlane.xlu0 %2327
    %v2329 = vmul.f32 %v2307, %v2044
    %v2330 = vmul.f32 %v2310, %v2044
    %v2331 = vmul.f32 %v2313, %v2044
    %v2332 = vmul.f32 %v2316, %v2044
    %v2333 = vmul.f32 %v2319, %v2044
    %v2334 = vmul.f32 %v2322, %v2044
    %v2335 = vmul.f32 %v2325, %v2044
    %v2336 = vmul.f32 %v2328, %v2044
    %v2337 = vsub.f32 %v2287, %v2329
    %v2338 = vsub.f32 %v2288, %v2329
    %v2339 = vsub.f32 %v2289, %v2330
    %v2340 = vsub.f32 %v2290, %v2330
    %v2341 = vsub.f32 %v2291, %v2331
    %v2342 = vsub.f32 %v2292, %v2331
    %v2343 = vsub.f32 %v2293, %v2332
    %v2344 = vsub.f32 %v2294, %v2332
    %v2345 = vsub.f32 %v2295, %v2333
    %v2346 = vsub.f32 %v2296, %v2333
    %v2347 = vsub.f32 %v2297, %v2334
    %v2348 = vsub.f32 %v2298, %v2334
    %v2349 = vsub.f32 %v2299, %v2335
    %v2350 = vsub.f32 %v2300, %v2335
    %v2351 = vsub.f32 %v2301, %v2336
    %v2352 = vsub.f32 %v2302, %v2336
    %v2353 = vmul.f32 %v2337, %v2337
    %v2354 = vmul.f32 %v2338, %v2338
    %v2355 = vmul.f32 %v2339, %v2339
    %v2356 = vmul.f32 %v2340, %v2340
    %v2357 = vmul.f32 %v2341, %v2341
    %v2358 = vmul.f32 %v2342, %v2342
    %v2359 = vmul.f32 %v2343, %v2343
    %v2360 = vmul.f32 %v2344, %v2344
    %v2361 = vmul.f32 %v2345, %v2345
    %v2362 = vmul.f32 %v2346, %v2346
    %v2363 = vmul.f32 %v2347, %v2347
    %v2364 = vmul.f32 %v2348, %v2348
    %v2365 = vmul.f32 %v2349, %v2349
    %v2366 = vmul.f32 %v2350, %v2350
    %v2367 = vmul.f32 %v2351, %v2351
    %v2368 = vmul.f32 %v2352, %v2352
    %v2369 = vadd.f32 %v2353, %v2354
    %2370 = vadd.xlane.f32.xlu0 %v2369
    %v2371 = vpop.xlane.xlu0 %2370
    %v2372 = vadd.f32 %v2355, %v2356
    %2373 = vadd.xlane.f32.xlu0 %v2372
    %v2374 = vpop.xlane.xlu0 %2373
    %v2375 = vadd.f32 %v2357, %v2358
    %2376 = vadd.xlane.f32.xlu0 %v2375
    %v2377 = vpop.xlane.xlu0 %2376
    %v2378 = vadd.f32 %v2359, %v2360
    %2379 = vadd.xlane.f32.xlu0 %v2378
    %v2380 = vpop.xlane.xlu0 %2379
    %v2381 = vadd.f32 %v2361, %v2362
    %2382 = vadd.xlane.f32.xlu0 %v2381
    %v2383 = vpop.xlane.xlu0 %2382
    %v2384 = vadd.f32 %v2363, %v2364
    %2385 = vadd.xlane.f32.xlu0 %v2384
    %v2386 = vpop.xlane.xlu0 %2385
    %v2387 = vadd.f32 %v2365, %v2366
    %2388 = vadd.xlane.f32.xlu0 %v2387
    %v2389 = vpop.xlane.xlu0 %2388
    %v2390 = vadd.f32 %v2367, %v2368
    %2391 = vadd.xlane.f32.xlu0 %v2390
    %v2392 = vpop.xlane.xlu0 %2391
    %v2393 = vmul.f32 %v2371, %v2044
    %v2394 = vmul.f32 %v2374, %v2044
    %v2395 = vmul.f32 %v2377, %v2044
    %v2396 = vmul.f32 %v2380, %v2044
    %v2397 = vmul.f32 %v2383, %v2044
    %v2398 = vmul.f32 %v2386, %v2044
    %v2399 = vmul.f32 %v2389, %v2044
    %v2400 = vmul.f32 %v2392, %v2044
    %v2401 = vadd.f32 %v2393, 1e-05
    %v2402 = vadd.f32 %v2394, 1e-05
    %v2403 = vadd.f32 %v2395, 1e-05
    %v2404 = vadd.f32 %v2396, 1e-05
    %v2405 = vadd.f32 %v2397, 1e-05
    %v2406 = vadd.f32 %v2398, 1e-05
    %v2407 = vadd.f32 %v2399, 1e-05
    %v2408 = vadd.f32 %v2400, 1e-05
    %v2409 = vrsqrt.pop %v2401
    %v2410 = vmul.f32 %v2409, %v2401
    %v2411 = vmul.f32 %v2410, %v2409
    %v2412 = vmul.f32 0.5, %v2411
    %v2413 = vsub.f32 1.5, %v2412
    %v2414 = vmul.f32 %v2409, %v2413
    %vm2415 = vweird.f32 %v2401
    %vm2416 = vweird.f32 %v2409
    %vm2417 = vmor %vm2415, %vm2416
    %v2418 = vsel %vm2417, %v2409, %v2414
    %v2419 = vrsqrt.pop %v2402
    %v2420 = vmul.f32 %v2419, %v2402
    %v2421 = vmul.f32 %v2420, %v2419
    %v2422 = vmul.f32 0.5, %v2421
    %v2423 = vsub.f32 1.5, %v2422
    %v2424 = vmul.f32 %v2419, %v2423
    %vm2425 = vweird.f32 %v2402
    %vm2426 = vweird.f32 %v2419
    %vm2427 = vmor %vm2425, %vm2426
    %v2428 = vsel %vm2427, %v2419, %v2424
    %v2429 = vrsqrt.pop %v2403
    %v2430 = vmul.f32 %v2429, %v2403
    %v2431 = vmul.f32 %v2430, %v2429
    %v2432 = vmul.f32 0.5, %v2431
    %v2433 = vsub.f32 1.5, %v2432
    %v2434 = vmul.f32 %v2429, %v2433
    %vm2435 = vweird.f32 %v2403
    %vm2436 = vweird.f32 %v2429
    %vm2437 = vmor %vm2435, %vm2436
    %v2438 = vsel %vm2437, %v2429, %v2434
    %v2439 = vrsqrt.pop %v2404
    %v2440 = vmul.f32 %v2439, %v2404
    %v2441 = vmul.f32 %v2440, %v2439
    %v2442 = vmul.f32 0.5, %v2441
    %v2443 = vsub.f32 1.5, %v2442
    %v2444 = vmul.f32 %v2439, %v2443
    %vm2445 = vweird.f32 %v2404
    %vm2446 = vweird.f32 %v2439
    %vm2447 = vmor %vm2445, %vm2446
    %v2448 = vsel %vm2447, %v2439, %v2444
    %v2449 = vrsqrt.pop %v2405
    %v2450 = vmul.f32 %v2449, %v2405
    %v2451 = vmul.f32 %v2450, %v2449
    %v2452 = vmul.f32 0.5, %v2451
    %v2453 = vsub.f32 1.5, %v2452
    %v2454 = vmul.f32 %v2449, %v2453
    %vm2455 = vweird.f32 %v2405
    %vm2456 = vweird.f32 %v2449
    %vm2457 = vmor %vm2455, %vm2456
    %v2458 = vsel %vm2457, %v2449, %v2454
    %v2459 = vrsqrt.pop %v2406
    %v2460 = vmul.f32 %v2459, %v2406
    %v2461 = vmul.f32 %v2460, %v2459
    %v2462 = vmul.f32 0.5, %v2461
    %v2463 = vsub.f32 1.5, %v2462
    %v2464 = vmul.f32 %v2459, %v2463
    %vm2465 = vweird.f32 %v2406
    %vm2466 = vweird.f32 %v2459
    %vm2467 = vmor %vm2465, %vm2466
    %v2468 = vsel %vm2467, %v2459, %v2464
    %v2469 = vrsqrt.pop %v2407
    %v2470 = vmul.f32 %v2469, %v2407
    %v2471 = vmul.f32 %v2470, %v2469
    %v2472 = vmul.f32 0.5, %v2471
    %v2473 = vsub.f32 1.5, %v2472
    %v2474 = vmul.f32 %v2469, %v2473
    %vm2475 = vweird.f32 %v2407
    %vm2476 = vweird.f32 %v2469
    %vm2477 = vmor %vm2475, %vm2476
    %v2478 = vsel %vm2477, %v2469, %v2474
    %v2479 = vrsqrt.pop %v2408
    %v2480 = vmul.f32 %v2479, %v2408
    %v2481 = vmul.f32 %v2480, %v2479
    %v2482 = vmul.f32 0.5, %v2481
    %v2483 = vsub.f32 1.5, %v2482
    %v2484 = vmul.f32 %v2479, %v2483
    %vm2485 = vweird.f32 %v2408
    %vm2486 = vweird.f32 %v2479
    %vm2487 = vmor %vm2485, %vm2486
    %v2488 = vsel %vm2487, %v2479, %v2484
    %v2489 = vmul.f32 %v2337, %v2418
    %v2490 = vmul.f32 %v2338, %v2418
    %v2491 = vmul.f32 %v2339, %v2428
    %v2492 = vmul.f32 %v2340, %v2428
    %v2493 = vmul.f32 %v2341, %v2438
    %v2494 = vmul.f32 %v2342, %v2438
    %v2495 = vmul.f32 %v2343, %v2448
    %v2496 = vmul.f32 %v2344, %v2448
    %v2497 = vmul.f32 %v2345, %v2458
    %v2498 = vmul.f32 %v2346, %v2458
    %v2499 = vmul.f32 %v2347, %v2468
    %v2500 = vmul.f32 %v2348, %v2468
    %v2501 = vmul.f32 %v2349, %v2478
    %v2502 = vmul.f32 %v2350, %v2478
    %v2503 = vmul.f32 %v2351, %v2488
    %v2504 = vmul.f32 %v2352, %v2488
    %v2506 = vperm.slane %v2303, 0
    %v2507 = vperm.slane %v2303, 1
    %v2510 = vmul.f32 %v2489, %v2506
    %v2511 = vmul.f32 %v2490, %v2507
    %v2512 = vmul.f32 %v2491, %v2506
    %v2513 = vmul.f32 %v2492, %v2507
    %v2514 = vmul.f32 %v2493, %v2506
    %v2515 = vmul.f32 %v2494, %v2507
    %v2516 = vmul.f32 %v2495, %v2506
    %v2517 = vmul.f32 %v2496, %v2507
    %v2518 = vmul.f32 %v2497, %v2506
    %v2519 = vmul.f32 %v2498, %v2507
    %v2520 = vmul.f32 %v2499, %v2506
    %v2521 = vmul.f32 %v2500, %v2507
    %v2522 = vmul.f32 %v2501, %v2506
    %v2523 = vmul.f32 %v2502, %v2507
    %v2524 = vmul.f32 %v2503, %v2506
    %v2525 = vmul.f32 %v2504, %v2507
    %v2527 = vperm.slane %v2304, 0
    %v2528 = vperm.slane %v2304, 1
    %v2531 = vadd.f32 %v2510, %v2527
    %v2532 = vadd.f32 %v2511, %v2528
    %v2533 = vadd.f32 %v2512, %v2527
    %v2534 = vadd.f32 %v2513, %v2528
    %v2535 = vadd.f32 %v2514, %v2527
    %v2536 = vadd.f32 %v2515, %v2528
    %v2537 = vadd.f32 %v2516, %v2527
    %v2538 = vadd.f32 %v2517, %v2528
    %v2539 = vadd.f32 %v2518, %v2527
    %v2540 = vadd.f32 %v2519, %v2528
    %v2541 = vadd.f32 %v2520, %v2527
    %v2542 = vadd.f32 %v2521, %v2528
    %v2543 = vadd.f32 %v2522, %v2527
    %v2544 = vadd.f32 %v2523, %v2528
    %v2545 = vadd.f32 %v2524, %v2527
    %v2546 = vadd.f32 %v2525, %v2528
    %v2547 = vld [vmem:[#allocation18] sm:$0xff]
    %v2548 = vld [vmem:[#allocation18 + $0x8] sm:$0xff]
    %v2549 = vld [vmem:[#allocation18 + $0x10] sm:$0xff]
    %v2550 = vld [vmem:[#allocation18 + $0x18] sm:$0xff]
    %v2551 = vld [vmem:[#allocation18 + $0x20] sm:$0xff]
    %v2552 = vld [vmem:[#allocation18 + $0x28] sm:$0xff]
    %v2553 = vld [vmem:[#allocation18 + $0x30] sm:$0xff]
    %v2554 = vld [vmem:[#allocation18 + $0x38] sm:$0xff]
    %v2555 = vld [vmem:[#allocation18 + $0x40] sm:$0xff]
    %v2556 = vld [vmem:[#allocation18 + $0x48] sm:$0xff]
    %v2557 = vld [vmem:[#allocation18 + $0x50] sm:$0xff]
    %v2558 = vld [vmem:[#allocation18 + $0x58] sm:$0xff]
    %v2559 = vld [vmem:[#allocation18 + $0x60] sm:$0xff]
    %v2560 = vld [vmem:[#allocation18 + $0x68] sm:$0xff]
    %v2561 = vld [vmem:[#allocation18 + $0x70] sm:$0xff]
    %v2562 = vld [vmem:[#allocation18 + $0x78] sm:$0xff]
    %v2563 = vld [vmem:[#allocation18 + $0x80] sm:$0xff]
    %v2564 = vld [vmem:[#allocation18 + $0x88] sm:$0xff]
    %v2565 = vld [vmem:[#allocation18 + $0x90] sm:$0xff]
    %v2566 = vld [vmem:[#allocation18 + $0x98] sm:$0xff]
    %v2567 = vld [vmem:[#allocation18 + $0xa0] sm:$0xff]
    %v2568 = vld [vmem:[#allocation18 + $0xa8] sm:$0xff]
    %v2569 = vld [vmem:[#allocation18 + $0xb0] sm:$0xff]
    %v2570 = vld [vmem:[#allocation18 + $0xb8] sm:$0xff]
    %v2571 = vld [vmem:[#allocation18 + $0xc0] sm:$0xff]
    %v2572 = vld [vmem:[#allocation18 + $0xc8] sm:$0xff]
    %v2573 = vld [vmem:[#allocation18 + $0xd0] sm:$0xff]
    %v2574 = vld [vmem:[#allocation18 + $0xd8] sm:$0xff]
    %v2575 = vld [vmem:[#allocation18 + $0xe0] sm:$0xff]
    %v2576 = vld [vmem:[#allocation18 + $0xe8] sm:$0xff]
    %v2577 = vld [vmem:[#allocation18 + $0xf0] sm:$0xff]
    %v2578 = vld [vmem:[#allocation18 + $0xf8] sm:$0xff]
    %v2579 = vld [vmem:[#allocation18 + $0x100] sm:$0xff]
    %v2580 = vld [vmem:[#allocation18 + $0x108] sm:$0xff]
    %v2581 = vld [vmem:[#allocation18 + $0x110] sm:$0xff]
    %v2582 = vld [vmem:[#allocation18 + $0x118] sm:$0xff]
    %v2583 = vld [vmem:[#allocation18 + $0x120] sm:$0xff]
    %v2584 = vld [vmem:[#allocation18 + $0x128] sm:$0xff]
    %v2585 = vld [vmem:[#allocation18 + $0x130] sm:$0xff]
    %v2586 = vld [vmem:[#allocation18 + $0x138] sm:$0xff]
    %v2587 = vld [vmem:[#allocation18 + $0x140] sm:$0xff]
    %v2588 = vld [vmem:[#allocation18 + $0x148] sm:$0xff]
    %v2589 = vld [vmem:[#allocation18 + $0x150] sm:$0xff]
    %v2590 = vld [vmem:[#allocation18 + $0x158] sm:$0xff]
    %v2591 = vld [vmem:[#allocation18 + $0x160] sm:$0xff]
    %v2592 = vld [vmem:[#allocation18 + $0x168] sm:$0xff]
    %v2593 = vld [vmem:[#allocation18 + $0x170] sm:$0xff]
    %v2594 = vld [vmem:[#allocation18 + $0x178] sm:$0xff]
    %v2595 = vld [vmem:[#allocation18 + $0x180] sm:$0xff]
    %v2596 = vld [vmem:[#allocation18 + $0x188] sm:$0xff]
    %v2597 = vld [vmem:[#allocation18 + $0x190] sm:$0xff]
    %v2598 = vld [vmem:[#allocation18 + $0x198] sm:$0xff]
    %v2599 = vld [vmem:[#allocation18 + $0x1a0] sm:$0xff]
    %v2600 = vld [vmem:[#allocation18 + $0x1a8] sm:$0xff]
    %v2601 = vld [vmem:[#allocation18 + $0x1b0] sm:$0xff]
    %v2602 = vld [vmem:[#allocation18 + $0x1b8] sm:$0xff]
    %v2603 = vld [vmem:[#allocation18 + $0x1c0] sm:$0xff]
    %v2604 = vld [vmem:[#allocation18 + $0x1c8] sm:$0xff]
    %v2605 = vld [vmem:[#allocation18 + $0x1d0] sm:$0xff]
    %v2606 = vld [vmem:[#allocation18 + $0x1d8] sm:$0xff]
    %v2607 = vld [vmem:[#allocation18 + $0x1e0] sm:$0xff]
    %v2608 = vld [vmem:[#allocation18 + $0x1e8] sm:$0xff]
    %v2609 = vld [vmem:[#allocation18 + $0x1f0] sm:$0xff]
    %v2610 = vld [vmem:[#allocation18 + $0x1f8] sm:$0xff]
    %v2611 = vld [vmem:[#allocation18 + $0x200] sm:$0xff]
    %v2612 = vld [vmem:[#allocation18 + $0x208] sm:$0xff]
    %v2613 = vld [vmem:[#allocation18 + $0x210] sm:$0xff]
    %v2614 = vld [vmem:[#allocation18 + $0x218] sm:$0xff]
    %v2615 = vld [vmem:[#allocation18 + $0x220] sm:$0xff]
    %v2616 = vld [vmem:[#allocation18 + $0x228] sm:$0xff]
    %v2617 = vld [vmem:[#allocation18 + $0x230] sm:$0xff]
    %v2618 = vld [vmem:[#allocation18 + $0x238] sm:$0xff]
    %v2619 = vld [vmem:[#allocation18 + $0x240] sm:$0xff]
    %v2620 = vld [vmem:[#allocation18 + $0x248] sm:$0xff]
    %v2621 = vld [vmem:[#allocation18 + $0x250] sm:$0xff]
    %v2622 = vld [vmem:[#allocation18 + $0x258] sm:$0xff]
    %v2623 = vld [vmem:[#allocation18 + $0x260] sm:$0xff]
    %v2624 = vld [vmem:[#allocation18 + $0x268] sm:$0xff]
    %v2625 = vld [vmem:[#allocation18 + $0x270] sm:$0xff]
    %v2626 = vld [vmem:[#allocation18 + $0x278] sm:$0xff]
    %v2627 = vld [vmem:[#allocation18 + $0x280] sm:$0xff]
    %v2628 = vld [vmem:[#allocation18 + $0x288] sm:$0xff]
    %v2629 = vld [vmem:[#allocation18 + $0x290] sm:$0xff]
    %v2630 = vld [vmem:[#allocation18 + $0x298] sm:$0xff]
    %v2631 = vld [vmem:[#allocation18 + $0x2a0] sm:$0xff]
    %v2632 = vld [vmem:[#allocation18 + $0x2a8] sm:$0xff]
    %v2633 = vld [vmem:[#allocation18 + $0x2b0] sm:$0xff]
    %v2634 = vld [vmem:[#allocation18 + $0x2b8] sm:$0xff]
    %v2635 = vld [vmem:[#allocation18 + $0x2c0] sm:$0xff]
    %v2636 = vld [vmem:[#allocation18 + $0x2c8] sm:$0xff]
    %v2637 = vld [vmem:[#allocation18 + $0x2d0] sm:$0xff]
    %v2638 = vld [vmem:[#allocation18 + $0x2d8] sm:$0xff]
    %v2639 = vld [vmem:[#allocation18 + $0x2e0] sm:$0xff]
    %v2640 = vld [vmem:[#allocation18 + $0x2e8] sm:$0xff]
    %v2641 = vld [vmem:[#allocation18 + $0x2f0] sm:$0xff]
    %v2642 = vld [vmem:[#allocation18 + $0x2f8] sm:$0xff]
    %v2643 = vld [vmem:[#allocation18 + $0x300] sm:$0xff]
    %v2644 = vld [vmem:[#allocation18 + $0x308] sm:$0xff]
    %v2645 = vld [vmem:[#allocation18 + $0x310] sm:$0xff]
    %v2646 = vld [vmem:[#allocation18 + $0x318] sm:$0xff]
    %v2647 = vld [vmem:[#allocation18 + $0x320] sm:$0xff]
    %v2648 = vld [vmem:[#allocation18 + $0x328] sm:$0xff]
    %v2649 = vld [vmem:[#allocation18 + $0x330] sm:$0xff]
    %v2650 = vld [vmem:[#allocation18 + $0x338] sm:$0xff]
    %v2651 = vld [vmem:[#allocation18 + $0x340] sm:$0xff]
    %v2652 = vld [vmem:[#allocation18 + $0x348] sm:$0xff]
    %v2653 = vld [vmem:[#allocation18 + $0x350] sm:$0xff]
    %v2654 = vld [vmem:[#allocation18 + $0x358] sm:$0xff]
    %v2655 = vld [vmem:[#allocation18 + $0x360] sm:$0xff]
    %v2656 = vld [vmem:[#allocation18 + $0x368] sm:$0xff]
    %v2657 = vld [vmem:[#allocation18 + $0x370] sm:$0xff]
    %v2658 = vld [vmem:[#allocation18 + $0x378] sm:$0xff]
    %v2659 = vld [vmem:[#allocation18 + $0x380] sm:$0xff]
    %v2660 = vld [vmem:[#allocation18 + $0x388] sm:$0xff]
    %v2661 = vld [vmem:[#allocation18 + $0x390] sm:$0xff]
    %v2662 = vld [vmem:[#allocation18 + $0x398] sm:$0xff]
    %v2663 = vld [vmem:[#allocation18 + $0x3a0] sm:$0xff]
    %v2664 = vld [vmem:[#allocation18 + $0x3a8] sm:$0xff]
    %v2665 = vld [vmem:[#allocation18 + $0x3b0] sm:$0xff]
    %v2666 = vld [vmem:[#allocation18 + $0x3b8] sm:$0xff]
    %v2667 = vld [vmem:[#allocation18 + $0x3c0] sm:$0xff]
    %v2668 = vld [vmem:[#allocation18 + $0x3c8] sm:$0xff]
    %v2669 = vld [vmem:[#allocation18 + $0x3d0] sm:$0xff]
    %v2670 = vld [vmem:[#allocation18 + $0x3d8] sm:$0xff]
    %v2671 = vld [vmem:[#allocation18 + $0x3e0] sm:$0xff]
    %v2672 = vld [vmem:[#allocation18 + $0x3e8] sm:$0xff]
    %v2673 = vld [vmem:[#allocation18 + $0x3f0] sm:$0xff]
    %v2674 = vld [vmem:[#allocation18 + $0x3f8] sm:$0xff]
    %v2675 = vld [vmem:[%s13] sm:$0xf]
    %v2677 = vperm.slane %v2675, 0
    %v2678 = vperm.slane %v2675, 1
    %v2679 = vperm.slane %v2675, 2
    %v2680 = vperm.slane %v2675, 3
    %2685 = vmatpush.msra.mxu0 %v2607
    %2686 = vmatpush.msra.mxu0 %v2603
    %2687 = vmatpush.msra.mxu0 %v2599
    %2688 = vmatpush.msra.mxu0 %v2595
    %2689 = vmatpush.msra.mxu0 %v2591
    %2690 = vmatpush.msra.mxu0 %v2587
    %2691 = vmatpush.msra.mxu0 %v2583
    %2692 = vmatpush.msra.mxu0 %v2579
    %2693 = vmatpush.msra.mxu0 %v2575
    %2694 = vmatpush.msra.mxu0 %v2571
    %2695 = vmatpush.msra.mxu0 %v2567
    %2696 = vmatpush.msra.mxu0 %v2563
    %2697 = vmatpush.msra.mxu0 %v2559
    %2698 = vmatpush.msra.mxu0 %v2555
    %2699 = vmatpush.msra.mxu0 %v2551
    %2700 = vmatpush.msra.mxu0 %v2547
    %2701 = vmatmul.f32.gmra.mxu0 %v2531
    %v2702 = vpop.f32.mrf.mxu0
    %v2703 = vadd.f32 %v2677, %v2702
    %2704 = vmatmul.f32.gmra.mxu0 %v2533
    %v2705 = vpop.f32.mrf.mxu0
    %v2706 = vadd.f32 %v2677, %v2705
    %2707 = vmatmul.f32.gmra.mxu0 %v2535
    %v2708 = vpop.f32.mrf.mxu0
    %v2709 = vadd.f32 %v2677, %v2708
    %2710 = vmatmul.f32.gmra.mxu0 %v2537
    %v2711 = vpop.f32.mrf.mxu0
    %v2712 = vadd.f32 %v2677, %v2711
    %2713 = vmatmul.f32.gmra.mxu0 %v2539
    %v2714 = vpop.f32.mrf.mxu0
    %v2715 = vadd.f32 %v2677, %v2714
    %2716 = vmatmul.f32.gmra.mxu0 %v2541
    %v2717 = vpop.f32.mrf.mxu0
    %v2718 = vadd.f32 %v2677, %v2717
    %2719 = vmatmul.f32.gmra.mxu0 %v2543
    %v2720 = vpop.f32.mrf.mxu0
    %v2721 = vadd.f32 %v2677, %v2720
    %2722 = vmatmul.f32.gmra.mxu0 %v2545
    %v2723 = vpop.f32.mrf.mxu0
    %v2724 = vadd.f32 %v2677, %v2723
    %2725 = vdwg.mxu0
    %2726 = vmatpush.msra.mxu0 %v2671
    %2727 = vmatpush.msra.mxu0 %v2667
    %2728 = vmatpush.msra.mxu0 %v2663
    %2729 = vmatpush.msra.mxu0 %v2659
    %2730 = vmatpush.msra.mxu0 %v2655
    %2731 = vmatpush.msra.mxu0 %v2651
    %2732 = vmatpush.msra.mxu0 %v2647
    %2733 = vmatpush.msra.mxu0 %v2643
    %2734 = vmatpush.msra.mxu0 %v2639
    %2735 = vmatpush.msra.mxu0 %v2635
    %2736 = vmatpush.msra.mxu0 %v2631
    %2737 = vmatpush.msra.mxu0 %v2627
    %2738 = vmatpush.msra.mxu0 %v2623
    %2739 = vmatpush.msra.mxu0 %v2619
    %2740 = vmatpush.msra.mxu0 %v2615
    %2741 = vmatpush.msra.mxu0 %v2611
    %2742 = vmatmul.f32.gmra.mxu0 %v2532
    %v2743 = vpop.f32.mrf.mxu0
    %v2744 = vadd.f32 %v2703, %v2743
    %2745 = vmatmul.f32.gmra.mxu0 %v2534
    %v2746 = vpop.f32.mrf.mxu0
    %v2747 = vadd.f32 %v2706, %v2746
    %2748 = vmatmul.f32.gmra.mxu0 %v2536
    %v2749 = vpop.f32.mrf.mxu0
    %v2750 = vadd.f32 %v2709, %v2749
    %2751 = vmatmul.f32.gmra.mxu0 %v2538
    %v2752 = vpop.f32.mrf.mxu0
    %v2753 = vadd.f32 %v2712, %v2752
    %2754 = vmatmul.f32.gmra.mxu0 %v2540
    %v2755 = vpop.f32.mrf.mxu0
    %v2756 = vadd.f32 %v2715, %v2755
    %2757 = vmatmul.f32.gmra.mxu0 %v2542
    %v2758 = vpop.f32.mrf.mxu0
    %v2759 = vadd.f32 %v2718, %v2758
    %2760 = vmatmul.f32.gmra.mxu0 %v2544
    %v2761 = vpop.f32.mrf.mxu0
    %v2762 = vadd.f32 %v2721, %v2761
    %2763 = vmatmul.f32.gmra.mxu0 %v2546
    %v2764 = vpop.f32.mrf.mxu0
    %v2765 = vadd.f32 %v2724, %v2764
    %2766 = vdwg.mxu0
    %2767 = vmatpush.msra.mxu0 %v2608
    %2768 = vmatpush.msra.mxu0 %v2604
    %2769 = vmatpush.msra.mxu0 %v2600
    %2770 = vmatpush.msra.mxu0 %v2596
    %2771 = vmatpush.msra.mxu0 %v2592
    %2772 = vmatpush.msra.mxu0 %v2588
    %2773 = vmatpush.msra.mxu0 %v2584
    %2774 = vmatpush.msra.mxu0 %v2580
    %2775 = vmatpush.msra.mxu0 %v2576
    %2776 = vmatpush.msra.mxu0 %v2572
    %2777 = vmatpush.msra.mxu0 %v2568
    %2778 = vmatpush.msra.mxu0 %v2564
    %2779 = vmatpush.msra.mxu0 %v2560
    %2780 = vmatpush.msra.mxu0 %v2556
    %2781 = vmatpush.msra.mxu0 %v2552
    %2782 = vmatpush.msra.mxu0 %v2548
    %2783 = vmatmul.f32.gmra.mxu0 %v2531
    %v2784 = vpop.f32.mrf.mxu0
    %v2785 = vadd.f32 %v2678, %v2784
    %2786 = vmatmul.f32.gmra.mxu0 %v2533
    %v2787 = vpop.f32.mrf.mxu0
    %v2788 = vadd.f32 %v2678, %v2787
    %2789 = vmatmul.f32.gmra.mxu0 %v2535
    %v2790 = vpop.f32.mrf.mxu0
    %v2791 = vadd.f32 %v2678, %v2790
    %2792 = vmatmul.f32.gmra.mxu0 %v2537
    %v2793 = vpop.f32.mrf.mxu0
    %v2794 = vadd.f32 %v2678, %v2793
    %2795 = vmatmul.f32.gmra.mxu0 %v2539
    %v2796 = vpop.f32.mrf.mxu0
    %v2797 = vadd.f32 %v2678, %v2796
    %2798 = vmatmul.f32.gmra.mxu0 %v2541
    %v2799 = vpop.f32.mrf.mxu0
    %v2800 = vadd.f32 %v2678, %v2799
    %2801 = vmatmul.f32.gmra.mxu0 %v2543
    %v2802 = vpop.f32.mrf.mxu0
    %v2803 = vadd.f32 %v2678, %v2802
    %2804 = vmatmul.f32.gmra.mxu0 %v2545
    %v2805 = vpop.f32.mrf.mxu0
    %v2806 = vadd.f32 %v2678, %v2805
    %2807 = vdwg.mxu0
    %2808 = vmatpush.msra.mxu0 %v2672
    %2809 = vmatpush.msra.mxu0 %v2668
    %2810 = vmatpush.msra.mxu0 %v2664
    %2811 = vmatpush.msra.mxu0 %v2660
    %2812 = vmatpush.msra.mxu0 %v2656
    %2813 = vmatpush.msra.mxu0 %v2652
    %2814 = vmatpush.msra.mxu0 %v2648
    %2815 = vmatpush.msra.mxu0 %v2644
    %2816 = vmatpush.msra.mxu0 %v2640
    %2817 = vmatpush.msra.mxu0 %v2636
    %2818 = vmatpush.msra.mxu0 %v2632
    %2819 = vmatpush.msra.mxu0 %v2628
    %2820 = vmatpush.msra.mxu0 %v2624
    %2821 = vmatpush.msra.mxu0 %v2620
    %2822 = vmatpush.msra.mxu0 %v2616
    %2823 = vmatpush.msra.mxu0 %v2612
    %2824 = vmatmul.f32.gmra.mxu0 %v2532
    %v2825 = vpop.f32.mrf.mxu0
    %v2826 = vadd.f32 %v2785, %v2825
    %2827 = vmatmul.f32.gmra.mxu0 %v2534
    %v2828 = vpop.f32.mrf.mxu0
    %v2829 = vadd.f32 %v2788, %v2828
    %2830 = vmatmul.f32.gmra.mxu0 %v2536
    %v2831 = vpop.f32.mrf.mxu0
    %v2832 = vadd.f32 %v2791, %v2831
    %2833 = vmatmul.f32.gmra.mxu0 %v2538
    %v2834 = vpop.f32.mrf.mxu0
    %v2835 = vadd.f32 %v2794, %v2834
    %2836 = vmatmul.f32.gmra.mxu0 %v2540
    %v2837 = vpop.f32.mrf.mxu0
    %v2838 = vadd.f32 %v2797, %v2837
    %2839 = vmatmul.f32.gmra.mxu0 %v2542
    %v2840 = vpop.f32.mrf.mxu0
    %v2841 = vadd.f32 %v2800, %v2840
    %2842 = vmatmul.f32.gmra.mxu0 %v2544
    %v2843 = vpop.f32.mrf.mxu0
    %v2844 = vadd.f32 %v2803, %v2843
    %2845 = vmatmul.f32.gmra.mxu0 %v2546
    %v2846 = vpop.f32.mrf.mxu0
    %v2847 = vadd.f32 %v2806, %v2846
    %2848 = vdwg.mxu0
    %2849 = vmatpush.msra.mxu0 %v2609
    %2850 = vmatpush.msra.mxu0 %v2605
    %2851 = vmatpush.msra.mxu0 %v2601
    %2852 = vmatpush.msra.mxu0 %v2597
    %2853 = vmatpush.msra.mxu0 %v2593
    %2854 = vmatpush.msra.mxu0 %v2589
    %2855 = vmatpush.msra.mxu0 %v2585
    %2856 = vmatpush.msra.mxu0 %v2581
    %2857 = vmatpush.msra.mxu0 %v2577
    %2858 = vmatpush.msra.mxu0 %v2573
    %2859 = vmatpush.msra.mxu0 %v2569
    %2860 = vmatpush.msra.mxu0 %v2565
    %2861 = vmatpush.msra.mxu0 %v2561
    %2862 = vmatpush.msra.mxu0 %v2557
    %2863 = vmatpush.msra.mxu0 %v2553
    %2864 = vmatpush.msra.mxu0 %v2549
    %2865 = vmatmul.f32.gmra.mxu0 %v2531
    %v2866 = vpop.f32.mrf.mxu0
    %v2867 = vadd.f32 %v2679, %v2866
    %2868 = vmatmul.f32.gmra.mxu0 %v2533
    %v2869 = vpop.f32.mrf.mxu0
    %v2870 = vadd.f32 %v2679, %v2869
    %2871 = vmatmul.f32.gmra.mxu0 %v2535
    %v2872 = vpop.f32.mrf.mxu0
    %v2873 = vadd.f32 %v2679, %v2872
    %2874 = vmatmul.f32.gmra.mxu0 %v2537
    %v2875 = vpop.f32.mrf.mxu0
    %v2876 = vadd.f32 %v2679, %v2875
    %2877 = vmatmul.f32.gmra.mxu0 %v2539
    %v2878 = vpop.f32.mrf.mxu0
    %v2879 = vadd.f32 %v2679, %v2878
    %2880 = vmatmul.f32.gmra.mxu0 %v2541
    %v2881 = vpop.f32.mrf.mxu0
    %v2882 = vadd.f32 %v2679, %v2881
    %2883 = vmatmul.f32.gmra.mxu0 %v2543
    %v2884 = vpop.f32.mrf.mxu0
    %v2885 = vadd.f32 %v2679, %v2884
    %2886 = vmatmul.f32.gmra.mxu0 %v2545
    %v2887 = vpop.f32.mrf.mxu0
    %v2888 = vadd.f32 %v2679, %v2887
    %2889 = vdwg.mxu0
    %2890 = vmatpush.msra.mxu0 %v2673
    %2891 = vmatpush.msra.mxu0 %v2669
    %2892 = vmatpush.msra.mxu0 %v2665
    %2893 = vmatpush.msra.mxu0 %v2661
    %2894 = vmatpush.msra.mxu0 %v2657
    %2895 = vmatpush.msra.mxu0 %v2653
    %2896 = vmatpush.msra.mxu0 %v2649
    %2897 = vmatpush.msra.mxu0 %v2645
    %2898 = vmatpush.msra.mxu0 %v2641
    %2899 = vmatpush.msra.mxu0 %v2637
    %2900 = vmatpush.msra.mxu0 %v2633
    %2901 = vmatpush.msra.mxu0 %v2629
    %2902 = vmatpush.msra.mxu0 %v2625
    %2903 = vmatpush.msra.mxu0 %v2621
    %2904 = vmatpush.msra.mxu0 %v2617
    %2905 = vmatpush.msra.mxu0 %v2613
    %2906 = vmatmul.f32.gmra.mxu0 %v2532
    %v2907 = vpop.f32.mrf.mxu0
    %v2908 = vadd.f32 %v2867, %v2907
    %2909 = vmatmul.f32.gmra.mxu0 %v2534
    %v2910 = vpop.f32.mrf.mxu0
    %v2911 = vadd.f32 %v2870, %v2910
    %2912 = vmatmul.f32.gmra.mxu0 %v2536
    %v2913 = vpop.f32.mrf.mxu0
    %v2914 = vadd.f32 %v2873, %v2913
    %2915 = vmatmul.f32.gmra.mxu0 %v2538
    %v2916 = vpop.f32.mrf.mxu0
    %v2917 = vadd.f32 %v2876, %v2916
    %2918 = vmatmul.f32.gmra.mxu0 %v2540
    %v2919 = vpop.f32.mrf.mxu0
    %v2920 = vadd.f32 %v2879, %v2919
    %2921 = vmatmul.f32.gmra.mxu0 %v2542
    %v2922 = vpop.f32.mrf.mxu0
    %v2923 = vadd.f32 %v2882, %v2922
    %2924 = vmatmul.f32.gmra.mxu0 %v2544
    %v2925 = vpop.f32.mrf.mxu0
    %v2926 = vadd.f32 %v2885, %v2925
    %2927 = vmatmul.f32.gmra.mxu0 %v2546
    %v2928 = vpop.f32.mrf.mxu0
    %v2929 = vadd.f32 %v2888, %v2928
    %2930 = vdwg.mxu0
    %2931 = vmatpush.msra.mxu0 %v2610
    %2932 = vmatpush.msra.mxu0 %v2606
    %2933 = vmatpush.msra.mxu0 %v2602
    %2934 = vmatpush.msra.mxu0 %v2598
    %2935 = vmatpush.msra.mxu0 %v2594
    %2936 = vmatpush.msra.mxu0 %v2590
    %2937 = vmatpush.msra.mxu0 %v2586
    %2938 = vmatpush.msra.mxu0 %v2582
    %2939 = vmatpush.msra.mxu0 %v2578
    %2940 = vmatpush.msra.mxu0 %v2574
    %2941 = vmatpush.msra.mxu0 %v2570
    %2942 = vmatpush.msra.mxu0 %v2566
    %2943 = vmatpush.msra.mxu0 %v2562
    %2944 = vmatpush.msra.mxu0 %v2558
    %2945 = vmatpush.msra.mxu0 %v2554
    %2946 = vmatpush.msra.mxu0 %v2550
    %2947 = vmatmul.f32.gmra.mxu0 %v2531
    %v2948 = vpop.f32.mrf.mxu0
    %v2949 = vadd.f32 %v2680, %v2948
    %2950 = vmatmul.f32.gmra.mxu0 %v2533
    %v2951 = vpop.f32.mrf.mxu0
    %v2952 = vadd.f32 %v2680, %v2951
    %2953 = vmatmul.f32.gmra.mxu0 %v2535
    %v2954 = vpop.f32.mrf.mxu0
    %v2955 = vadd.f32 %v2680, %v2954
    %2956 = vmatmul.f32.gmra.mxu0 %v2537
    %v2957 = vpop.f32.mrf.mxu0
    %v2958 = vadd.f32 %v2680, %v2957
    %2959 = vmatmul.f32.gmra.mxu0 %v2539
    %v2960 = vpop.f32.mrf.mxu0
    %v2961 = vadd.f32 %v2680, %v2960
    %2962 = vmatmul.f32.gmra.mxu0 %v2541
    %v2963 = vpop.f32.mrf.mxu0
    %v2964 = vadd.f32 %v2680, %v2963
    %2965 = vmatmul.f32.gmra.mxu0 %v2543
    %v2966 = vpop.f32.mrf.mxu0
    %v2967 = vadd.f32 %v2680, %v2966
    %2968 = vmatmul.f32.gmra.mxu0 %v2545
    %v2969 = vpop.f32.mrf.mxu0
    %v2970 = vadd.f32 %v2680, %v2969
    %2971 = vdwg.mxu0
    %2972 = vmatpush.msra.mxu0 %v2674
    %2973 = vmatpush.msra.mxu0 %v2670
    %2974 = vmatpush.msra.mxu0 %v2666
    %2975 = vmatpush.msra.mxu0 %v2662
    %2976 = vmatpush.msra.mxu0 %v2658
    %2977 = vmatpush.msra.mxu0 %v2654
    %2978 = vmatpush.msra.mxu0 %v2650
    %2979 = vmatpush.msra.mxu0 %v2646
    %2980 = vmatpush.msra.mxu0 %v2642
    %2981 = vmatpush.msra.mxu0 %v2638
    %2982 = vmatpush.msra.mxu0 %v2634
    %2983 = vmatpush.msra.mxu0 %v2630
    %2984 = vmatpush.msra.mxu0 %v2626
    %2985 = vmatpush.msra.mxu0 %v2622
    %2986 = vmatpush.msra.mxu0 %v2618
    %2987 = vmatpush.msra.mxu0 %v2614
    %2988 = vmatmul.f32.gmra.mxu0 %v2532
    %v2989 = vpop.f32.mrf.mxu0
    %v2990 = vadd.f32 %v2949, %v2989
    %2991 = vmatmul.f32.gmra.mxu0 %v2534
    %v2992 = vpop.f32.mrf.mxu0
    %v2993 = vadd.f32 %v2952, %v2992
    %2994 = vmatmul.f32.gmra.mxu0 %v2536
    %v2995 = vpop.f32.mrf.mxu0
    %v2996 = vadd.f32 %v2955, %v2995
    %2997 = vmatmul.f32.gmra.mxu0 %v2538
    %v2998 = vpop.f32.mrf.mxu0
    %v2999 = vadd.f32 %v2958, %v2998
    %3000 = vmatmul.f32.gmra.mxu0 %v2540
    %v3001 = vpop.f32.mrf.mxu0
    %v3002 = vadd.f32 %v2961, %v3001
    %3003 = vmatmul.f32.gmra.mxu0 %v2542
    %v3004 = vpop.f32.mrf.mxu0
    %v3005 = vadd.f32 %v2964, %v3004
    %3006 = vmatmul.f32.gmra.mxu0 %v2544
    %v3007 = vpop.f32.mrf.mxu0
    %v3008 = vadd.f32 %v2967, %v3007
    %3009 = vmatmul.f32.gmra.mxu0 %v2546
    %v3010 = vpop.f32.mrf.mxu0
    %v3011 = vadd.f32 %v2970, %v3010
    %3012 = vdwg.mxu0
    %v3013 = vmax.f32 %v2744, 0.0
    %v3014 = vmax.f32 %v2826, 0.0
    %v3015 = vmax.f32 %v2908, 0.0
    %v3016 = vmax.f32 %v2990, 0.0
    %v3017 = vmax.f32 %v2747, 0.0
    %v3018 = vmax.f32 %v2829, 0.0
    %v3019 = vmax.f32 %v2911, 0.0
    %v3020 = vmax.f32 %v2993, 0.0
    %v3021 = vmax.f32 %v2750, 0.0
    %v3022 = vmax.f32 %v2832, 0.0
    %v3023 = vmax.f32 %v2914, 0.0
    %v3024 = vmax.f32 %v2996, 0.0
    %v3025 = vmax.f32 %v2753, 0.0
    %v3026 = vmax.f32 %v2835, 0.0
    %v3027 = vmax.f32 %v2917, 0.0
    %v3028 = vmax.f32 %v2999, 0.0
    %v3029 = vmax.f32 %v2756, 0.0
    %v3030 = vmax.f32 %v2838, 0.0
    %v3031 = vmax.f32 %v2920, 0.0
    %v3032 = vmax.f32 %v3002, 0.0
    %v3033 = vmax.f32 %v2759, 0.0
    %v3034 = vmax.f32 %v2841, 0.0
    %v3035 = vmax.f32 %v2923, 0.0
    %v3036 = vmax.f32 %v3005, 0.0
    %v3037 = vmax.f32 %v2762, 0.0
    %v3038 = vmax.f32 %v2844, 0.0
    %v3039 = vmax.f32 %v2926, 0.0
    %v3040 = vmax.f32 %v3008, 0.0
    %v3041 = vmax.f32 %v2765, 0.0
    %v3042 = vmax.f32 %v2847, 0.0
    %v3043 = vmax.f32 %v2929, 0.0
    %v3044 = vmax.f32 %v3011, 0.0
    %v3045 = vld [vmem:[#allocation20] sm:$0xff]
    %v3046 = vld [vmem:[#allocation20 + $0x8] sm:$0xff]
    %v3047 = vld [vmem:[#allocation20 + $0x10] sm:$0xff]
    %v3048 = vld [vmem:[#allocation20 + $0x18] sm:$0xff]
    %v3049 = vld [vmem:[#allocation20 + $0x20] sm:$0xff]
    %v3050 = vld [vmem:[#allocation20 + $0x28] sm:$0xff]
    %v3051 = vld [vmem:[#allocation20 + $0x30] sm:$0xff]
    %v3052 = vld [vmem:[#allocation20 + $0x38] sm:$0xff]
    %v3053 = vld [vmem:[#allocation20 + $0x40] sm:$0xff]
    %v3054 = vld [vmem:[#allocation20 + $0x48] sm:$0xff]
    %v3055 = vld [vmem:[#allocation20 + $0x50] sm:$0xff]
    %v3056 = vld [vmem:[#allocation20 + $0x58] sm:$0xff]
    %v3057 = vld [vmem:[#allocation20 + $0x60] sm:$0xff]
    %v3058 = vld [vmem:[#allocation20 + $0x68] sm:$0xff]
    %v3059 = vld [vmem:[#allocation20 + $0x70] sm:$0xff]
    %v3060 = vld [vmem:[#allocation20 + $0x78] sm:$0xff]
    %v3061 = vld [vmem:[#allocation20 + $0x80] sm:$0xff]
    %v3062 = vld [vmem:[#allocation20 + $0x88] sm:$0xff]
    %v3063 = vld [vmem:[#allocation20 + $0x90] sm:$0xff]
    %v3064 = vld [vmem:[#allocation20 + $0x98] sm:$0xff]
    %v3065 = vld [vmem:[#allocation20 + $0xa0] sm:$0xff]
    %v3066 = vld [vmem:[#allocation20 + $0xa8] sm:$0xff]
    %v3067 = vld [vmem:[#allocation20 + $0xb0] sm:$0xff]
    %v3068 = vld [vmem:[#allocation20 + $0xb8] sm:$0xff]
    %v3069 = vld [vmem:[#allocation20 + $0xc0] sm:$0xff]
    %v3070 = vld [vmem:[#allocation20 + $0xc8] sm:$0xff]
    %v3071 = vld [vmem:[#allocation20 + $0xd0] sm:$0xff]
    %v3072 = vld [vmem:[#allocation20 + $0xd8] sm:$0xff]
    %v3073 = vld [vmem:[#allocation20 + $0xe0] sm:$0xff]
    %v3074 = vld [vmem:[#allocation20 + $0xe8] sm:$0xff]
    %v3075 = vld [vmem:[#allocation20 + $0xf0] sm:$0xff]
    %v3076 = vld [vmem:[#allocation20 + $0xf8] sm:$0xff]
    %v3077 = vld [vmem:[#allocation20 + $0x100] sm:$0xff]
    %v3078 = vld [vmem:[#allocation20 + $0x108] sm:$0xff]
    %v3079 = vld [vmem:[#allocation20 + $0x110] sm:$0xff]
    %v3080 = vld [vmem:[#allocation20 + $0x118] sm:$0xff]
    %v3081 = vld [vmem:[#allocation20 + $0x120] sm:$0xff]
    %v3082 = vld [vmem:[#allocation20 + $0x128] sm:$0xff]
    %v3083 = vld [vmem:[#allocation20 + $0x130] sm:$0xff]
    %v3084 = vld [vmem:[#allocation20 + $0x138] sm:$0xff]
    %v3085 = vld [vmem:[#allocation20 + $0x140] sm:$0xff]
    %v3086 = vld [vmem:[#allocation20 + $0x148] sm:$0xff]
    %v3087 = vld [vmem:[#allocation20 + $0x150] sm:$0xff]
    %v3088 = vld [vmem:[#allocation20 + $0x158] sm:$0xff]
    %v3089 = vld [vmem:[#allocation20 + $0x160] sm:$0xff]
    %v3090 = vld [vmem:[#allocation20 + $0x168] sm:$0xff]
    %v3091 = vld [vmem:[#allocation20 + $0x170] sm:$0xff]
    %v3092 = vld [vmem:[#allocation20 + $0x178] sm:$0xff]
    %v3093 = vld [vmem:[#allocation20 + $0x180] sm:$0xff]
    %v3094 = vld [vmem:[#allocation20 + $0x188] sm:$0xff]
    %v3095 = vld [vmem:[#allocation20 + $0x190] sm:$0xff]
    %v3096 = vld [vmem:[#allocation20 + $0x198] sm:$0xff]
    %v3097 = vld [vmem:[#allocation20 + $0x1a0] sm:$0xff]
    %v3098 = vld [vmem:[#allocation20 + $0x1a8] sm:$0xff]
    %v3099 = vld [vmem:[#allocation20 + $0x1b0] sm:$0xff]
    %v3100 = vld [vmem:[#allocation20 + $0x1b8] sm:$0xff]
    %v3101 = vld [vmem:[#allocation20 + $0x1c0] sm:$0xff]
    %v3102 = vld [vmem:[#allocation20 + $0x1c8] sm:$0xff]
    %v3103 = vld [vmem:[#allocation20 + $0x1d0] sm:$0xff]
    %v3104 = vld [vmem:[#allocation20 + $0x1d8] sm:$0xff]
    %v3105 = vld [vmem:[#allocation20 + $0x1e0] sm:$0xff]
    %v3106 = vld [vmem:[#allocation20 + $0x1e8] sm:$0xff]
    %v3107 = vld [vmem:[#allocation20 + $0x1f0] sm:$0xff]
    %v3108 = vld [vmem:[#allocation20 + $0x1f8] sm:$0xff]
    %v3109 = vld [vmem:[#allocation20 + $0x200] sm:$0xff]
    %v3110 = vld [vmem:[#allocation20 + $0x208] sm:$0xff]
    %v3111 = vld [vmem:[#allocation20 + $0x210] sm:$0xff]
    %v3112 = vld [vmem:[#allocation20 + $0x218] sm:$0xff]
    %v3113 = vld [vmem:[#allocation20 + $0x220] sm:$0xff]
    %v3114 = vld [vmem:[#allocation20 + $0x228] sm:$0xff]
    %v3115 = vld [vmem:[#allocation20 + $0x230] sm:$0xff]
    %v3116 = vld [vmem:[#allocation20 + $0x238] sm:$0xff]
    %v3117 = vld [vmem:[#allocation20 + $0x240] sm:$0xff]
    %v3118 = vld [vmem:[#allocation20 + $0x248] sm:$0xff]
    %v3119 = vld [vmem:[#allocation20 + $0x250] sm:$0xff]
    %v3120 = vld [vmem:[#allocation20 + $0x258] sm:$0xff]
    %v3121 = vld [vmem:[#allocation20 + $0x260] sm:$0xff]
    %v3122 = vld [vmem:[#allocation20 + $0x268] sm:$0xff]
    %v3123 = vld [vmem:[#allocation20 + $0x270] sm:$0xff]
    %v3124 = vld [vmem:[#allocation20 + $0x278] sm:$0xff]
    %v3125 = vld [vmem:[#allocation20 + $0x280] sm:$0xff]
    %v3126 = vld [vmem:[#allocation20 + $0x288] sm:$0xff]
    %v3127 = vld [vmem:[#allocation20 + $0x290] sm:$0xff]
    %v3128 = vld [vmem:[#allocation20 + $0x298] sm:$0xff]
    %v3129 = vld [vmem:[#allocation20 + $0x2a0] sm:$0xff]
    %v3130 = vld [vmem:[#allocation20 + $0x2a8] sm:$0xff]
    %v3131 = vld [vmem:[#allocation20 + $0x2b0] sm:$0xff]
    %v3132 = vld [vmem:[#allocation20 + $0x2b8] sm:$0xff]
    %v3133 = vld [vmem:[#allocation20 + $0x2c0] sm:$0xff]
    %v3134 = vld [vmem:[#allocation20 + $0x2c8] sm:$0xff]
    %v3135 = vld [vmem:[#allocation20 + $0x2d0] sm:$0xff]
    %v3136 = vld [vmem:[#allocation20 + $0x2d8] sm:$0xff]
    %v3137 = vld [vmem:[#allocation20 + $0x2e0] sm:$0xff]
    %v3138 = vld [vmem:[#allocation20 + $0x2e8] sm:$0xff]
    %v3139 = vld [vmem:[#allocation20 + $0x2f0] sm:$0xff]
    %v3140 = vld [vmem:[#allocation20 + $0x2f8] sm:$0xff]
    %v3141 = vld [vmem:[#allocation20 + $0x300] sm:$0xff]
    %v3142 = vld [vmem:[#allocation20 + $0x308] sm:$0xff]
    %v3143 = vld [vmem:[#allocation20 + $0x310] sm:$0xff]
    %v3144 = vld [vmem:[#allocation20 + $0x318] sm:$0xff]
    %v3145 = vld [vmem:[#allocation20 + $0x320] sm:$0xff]
    %v3146 = vld [vmem:[#allocation20 + $0x328] sm:$0xff]
    %v3147 = vld [vmem:[#allocation20 + $0x330] sm:$0xff]
    %v3148 = vld [vmem:[#allocation20 + $0x338] sm:$0xff]
    %v3149 = vld [vmem:[#allocation20 + $0x340] sm:$0xff]
    %v3150 = vld [vmem:[#allocation20 + $0x348] sm:$0xff]
    %v3151 = vld [vmem:[#allocation20 + $0x350] sm:$0xff]
    %v3152 = vld [vmem:[#allocation20 + $0x358] sm:$0xff]
    %v3153 = vld [vmem:[#allocation20 + $0x360] sm:$0xff]
    %v3154 = vld [vmem:[#allocation20 + $0x368] sm:$0xff]
    %v3155 = vld [vmem:[#allocation20 + $0x370] sm:$0xff]
    %v3156 = vld [vmem:[#allocation20 + $0x378] sm:$0xff]
    %v3157 = vld [vmem:[#allocation20 + $0x380] sm:$0xff]
    %v3158 = vld [vmem:[#allocation20 + $0x388] sm:$0xff]
    %v3159 = vld [vmem:[#allocation20 + $0x390] sm:$0xff]
    %v3160 = vld [vmem:[#allocation20 + $0x398] sm:$0xff]
    %v3161 = vld [vmem:[#allocation20 + $0x3a0] sm:$0xff]
    %v3162 = vld [vmem:[#allocation20 + $0x3a8] sm:$0xff]
    %v3163 = vld [vmem:[#allocation20 + $0x3b0] sm:$0xff]
    %v3164 = vld [vmem:[#allocation20 + $0x3b8] sm:$0xff]
    %v3165 = vld [vmem:[#allocation20 + $0x3c0] sm:$0xff]
    %v3166 = vld [vmem:[#allocation20 + $0x3c8] sm:$0xff]
    %v3167 = vld [vmem:[#allocation20 + $0x3d0] sm:$0xff]
    %v3168 = vld [vmem:[#allocation20 + $0x3d8] sm:$0xff]
    %v3169 = vld [vmem:[#allocation20 + $0x3e0] sm:$0xff]
    %v3170 = vld [vmem:[#allocation20 + $0x3e8] sm:$0xff]
    %v3171 = vld [vmem:[#allocation20 + $0x3f0] sm:$0xff]
    %v3172 = vld [vmem:[#allocation20 + $0x3f8] sm:$0xff]
    %v3173 = vld [vmem:[%s15] sm:$0x3]
    %v3175 = vperm.slane %v3173, 0
    %v3176 = vperm.slane %v3173, 1
    %3179 = vmatpush.msra.mxu0 %v3075
    %3180 = vmatpush.msra.mxu0 %v3073
    %3181 = vmatpush.msra.mxu0 %v3071
    %3182 = vmatpush.msra.mxu0 %v3069
    %3183 = vmatpush.msra.mxu0 %v3067
    %3184 = vmatpush.msra.mxu0 %v3065
    %3185 = vmatpush.msra.mxu0 %v3063
    %3186 = vmatpush.msra.mxu0 %v3061
    %3187 = vmatpush.msra.mxu0 %v3059
    %3188 = vmatpush.msra.mxu0 %v3057
    %3189 = vmatpush.msra.mxu0 %v3055
    %3190 = vmatpush.msra.mxu0 %v3053
    %3191 = vmatpush.msra.mxu0 %v3051
    %3192 = vmatpush.msra.mxu0 %v3049
    %3193 = vmatpush.msra.mxu0 %v3047
    %3194 = vmatpush.msra.mxu0 %v3045
    %3195 = vmatmul.f32.gmra.mxu0 %v3013
    %v3196 = vpop.f32.mrf.mxu0
    %v3197 = vadd.f32 %v3175, %v3196
    %3198 = vmatmul.f32.gmra.mxu0 %v3017
    %v3199 = vpop.f32.mrf.mxu0
    %v3200 = vadd.f32 %v3175, %v3199
    %3201 = vmatmul.f32.gmra.mxu0 %v3021
    %v3202 = vpop.f32.mrf.mxu0
    %v3203 = vadd.f32 %v3175, %v3202
    %3204 = vmatmul.f32.gmra.mxu0 %v3025
    %v3205 = vpop.f32.mrf.mxu0
    %v3206 = vadd.f32 %v3175, %v3205
    %3207 = vmatmul.f32.gmra.mxu0 %v3029
    %v3208 = vpop.f32.mrf.mxu0
    %v3209 = vadd.f32 %v3175, %v3208
    %3210 = vmatmul.f32.gmra.mxu0 %v3033
    %v3211 = vpop.f32.mrf.mxu0
    %v3212 = vadd.f32 %v3175, %v3211
    %3213 = vmatmul.f32.gmra.mxu0 %v3037
    %v3214 = vpop.f32.mrf.mxu0
    %v3215 = vadd.f32 %v3175, %v3214
    %3216 = vmatmul.f32.gmra.mxu0 %v3041
    %v3217 = vpop.f32.mrf.mxu0
    %v3218 = vadd.f32 %v3175, %v3217
    %3219 = vdwg.mxu0
    %3220 = vmatpush.msra.mxu0 %v3107
    %3221 = vmatpush.msra.mxu0 %v3105
    %3222 = vmatpush.msra.mxu0 %v3103
    %3223 = vmatpush.msra.mxu0 %v3101
    %3224 = vmatpush.msra.mxu0 %v3099
    %3225 = vmatpush.msra.mxu0 %v3097
    %3226 = vmatpush.msra.mxu0 %v3095
    %3227 = vmatpush.msra.mxu0 %v3093
    %3228 = vmatpush.msra.mxu0 %v3091
    %3229 = vmatpush.msra.mxu0 %v3089
    %3230 = vmatpush.msra.mxu0 %v3087
    %3231 = vmatpush.msra.mxu0 %v3085
    %3232 = vmatpush.msra.mxu0 %v3083
    %3233 = vmatpush.msra.mxu0 %v3081
    %3234 = vmatpush.msra.mxu0 %v3079
    %3235 = vmatpush.msra.mxu0 %v3077
    %3236 = vmatmul.f32.gmra.mxu0 %v3014
    %v3237 = vpop.f32.mrf.mxu0
    %v3238 = vadd.f32 %v3197, %v3237
    %3239 = vmatmul.f32.gmra.mxu0 %v3018
    %v3240 = vpop.f32.mrf.mxu0
    %v3241 = vadd.f32 %v3200, %v3240
    %3242 = vmatmul.f32.gmra.mxu0 %v3022
    %v3243 = vpop.f32.mrf.mxu0
    %v3244 = vadd.f32 %v3203, %v3243
    %3245 = vmatmul.f32.gmra.mxu0 %v3026
    %v3246 = vpop.f32.mrf.mxu0
    %v3247 = vadd.f32 %v3206, %v3246
    %3248 = vmatmul.f32.gmra.mxu0 %v3030
    %v3249 = vpop.f32.mrf.mxu0
    %v3250 = vadd.f32 %v3209, %v3249
    %3251 = vmatmul.f32.gmra.mxu0 %v3034
    %v3252 = vpop.f32.mrf.mxu0
    %v3253 = vadd.f32 %v3212, %v3252
    %3254 = vmatmul.f32.gmra.mxu0 %v3038
    %v3255 = vpop.f32.mrf.mxu0
    %v3256 = vadd.f32 %v3215, %v3255
    %3257 = vmatmul.f32.gmra.mxu0 %v3042
    %v3258 = vpop.f32.mrf.mxu0
    %v3259 = vadd.f32 %v3218, %v3258
    %3260 = vdwg.mxu0
    %3261 = vmatpush.msra.mxu0 %v3139
    %3262 = vmatpush.msra.mxu0 %v3137
    %3263 = vmatpush.msra.mxu0 %v3135
    %3264 = vmatpush.msra.mxu0 %v3133
    %3265 = vmatpush.msra.mxu0 %v3131
    %3266 = vmatpush.msra.mxu0 %v3129
    %3267 = vmatpush.msra.mxu0 %v3127
    %3268 = vmatpush.msra.mxu0 %v3125
    %3269 = vmatpush.msra.mxu0 %v3123
    %3270 = vmatpush.msra.mxu0 %v3121
    %3271 = vmatpush.msra.mxu0 %v3119
    %3272 = vmatpush.msra.mxu0 %v3117
    %3273 = vmatpush.msra.mxu0 %v3115
    %3274 = vmatpush.msra.mxu0 %v3113
    %3275 = vmatpush.msra.mxu0 %v3111
    %3276 = vmatpush.msra.mxu0 %v3109
    %3277 = vmatmul.f32.gmra.mxu0 %v3015
    %v3278 = vpop.f32.mrf.mxu0
    %v3279 = vadd.f32 %v3238, %v3278
    %3280 = vmatmul.f32.gmra.mxu0 %v3019
    %v3281 = vpop.f32.mrf.mxu0
    %v3282 = vadd.f32 %v3241, %v3281
    %3283 = vmatmul.f32.gmra.mxu0 %v3023
    %v3284 = vpop.f32.mrf.mxu0
    %v3285 = vadd.f32 %v3244, %v3284
    %3286 = vmatmul.f32.gmra.mxu0 %v3027
    %v3287 = vpop.f32.mrf.mxu0
    %v3288 = vadd.f32 %v3247, %v3287
    %3289 = vmatmul.f32.gmra.mxu0 %v3031
    %v3290 = vpop.f32.mrf.mxu0
    %v3291 = vadd.f32 %v3250, %v3290
    %3292 = vmatmul.f32.gmra.mxu0 %v3035
    %v3293 = vpop.f32.mrf.mxu0
    %v3294 = vadd.f32 %v3253, %v3293
    %3295 = vmatmul.f32.gmra.mxu0 %v3039
    %v3296 = vpop.f32.mrf.mxu0
    %v3297 = vadd.f32 %v3256, %v3296
    %3298 = vmatmul.f32.gmra.mxu0 %v3043
    %v3299 = vpop.f32.mrf.mxu0
    %v3300 = vadd.f32 %v3259, %v3299
    %3301 = vdwg.mxu0
    %3302 = vmatpush.msra.mxu0 %v3171
    %3303 = vmatpush.msra.mxu0 %v3169
    %3304 = vmatpush.msra.mxu0 %v3167
    %3305 = vmatpush.msra.mxu0 %v3165
    %3306 = vmatpush.msra.mxu0 %v3163
    %3307 = vmatpush.msra.mxu0 %v3161
    %3308 = vmatpush.msra.mxu0 %v3159
    %3309 = vmatpush.msra.mxu0 %v3157
    %3310 = vmatpush.msra.mxu0 %v3155
    %3311 = vmatpush.msra.mxu0 %v3153
    %3312 = vmatpush.msra.mxu0 %v3151
    %3313 = vmatpush.msra.mxu0 %v3149
    %3314 = vmatpush.msra.mxu0 %v3147
    %3315 = vmatpush.msra.mxu0 %v3145
    %3316 = vmatpush.msra.mxu0 %v3143
    %3317 = vmatpush.msra.mxu0 %v3141
    %3318 = vmatmul.f32.gmra.mxu0 %v3016
    %v3319 = vpop.f32.mrf.mxu0
    %v3320 = vadd.f32 %v3279, %v3319
    %3321 = vmatmul.f32.gmra.mxu0 %v3020
    %v3322 = vpop.f32.mrf.mxu0
    %v3323 = vadd.f32 %v3282, %v3322
    %3324 = vmatmul.f32.gmra.mxu0 %v3024
    %v3325 = vpop.f32.mrf.mxu0
    %v3326 = vadd.f32 %v3285, %v3325
    %3327 = vmatmul.f32.gmra.mxu0 %v3028
    %v3328 = vpop.f32.mrf.mxu0
    %v3329 = vadd.f32 %v3288, %v3328
    %3330 = vmatmul.f32.gmra.mxu0 %v3032
    %v3331 = vpop.f32.mrf.mxu0
    %v3332 = vadd.f32 %v3291, %v3331
    %3333 = vmatmul.f32.gmra.mxu0 %v3036
    %v3334 = vpop.f32.mrf.mxu0
    %v3335 = vadd.f32 %v3294, %v3334
    %3336 = vmatmul.f32.gmra.mxu0 %v3040
    %v3337 = vpop.f32.mrf.mxu0
    %v3338 = vadd.f32 %v3297, %v3337
    %3339 = vmatmul.f32.gmra.mxu0 %v3044
    %v3340 = vpop.f32.mrf.mxu0
    %v3341 = vadd.f32 %v3300, %v3340
    %3342 = vdwg.mxu0
    %3343 = vmatpush.msra.mxu0 %v3076
    %3344 = vmatpush.msra.mxu0 %v3074
    %3345 = vmatpush.msra.mxu0 %v3072
    %3346 = vmatpush.msra.mxu0 %v3070
    %3347 = vmatpush.msra.mxu0 %v3068
    %3348 = vmatpush.msra.mxu0 %v3066
    %3349 = vmatpush.msra.mxu0 %v3064
    %3350 = vmatpush.msra.mxu0 %v3062
    %3351 = vmatpush.msra.mxu0 %v3060
    %3352 = vmatpush.msra.mxu0 %v3058
    %3353 = vmatpush.msra.mxu0 %v3056
    %3354 = vmatpush.msra.mxu0 %v3054
    %3355 = vmatpush.msra.mxu0 %v3052
    %3356 = vmatpush.msra.mxu0 %v3050
    %3357 = vmatpush.msra.mxu0 %v3048
    %3358 = vmatpush.msra.mxu0 %v3046
    %3359 = vmatmul.f32.gmra.mxu0 %v3013
    %v3360 = vpop.f32.mrf.mxu0
    %v3361 = vadd.f32 %v3176, %v3360
    %3362 = vmatmul.f32.gmra.mxu0 %v3017
    %v3363 = vpop.f32.mrf.mxu0
    %v3364 = vadd.f32 %v3176, %v3363
    %3365 = vmatmul.f32.gmra.mxu0 %v3021
    %v3366 = vpop.f32.mrf.mxu0
    %v3367 = vadd.f32 %v3176, %v3366
    %3368 = vmatmul.f32.gmra.mxu0 %v3025
    %v3369 = vpop.f32.mrf.mxu0
    %v3370 = vadd.f32 %v3176, %v3369
    %3371 = vmatmul.f32.gmra.mxu0 %v3029
    %v3372 = vpop.f32.mrf.mxu0
    %v3373 = vadd.f32 %v3176, %v3372
    %3374 = vmatmul.f32.gmra.mxu0 %v3033
    %v3375 = vpop.f32.mrf.mxu0
    %v3376 = vadd.f32 %v3176, %v3375
    %3377 = vmatmul.f32.gmra.mxu0 %v3037
    %v3378 = vpop.f32.mrf.mxu0
    %v3379 = vadd.f32 %v3176, %v3378
    %3380 = vmatmul.f32.gmra.mxu0 %v3041
    %v3381 = vpop.f32.mrf.mxu0
    %v3382 = vadd.f32 %v3176, %v3381
    %3383 = vdwg.mxu0
    %3384 = vmatpush.msra.mxu0 %v3108
    %3385 = vmatpush.msra.mxu0 %v3106
    %3386 = vmatpush.msra.mxu0 %v3104
    %3387 = vmatpush.msra.mxu0 %v3102
    %3388 = vmatpush.msra.mxu0 %v3100
    %3389 = vmatpush.msra.mxu0 %v3098
    %3390 = vmatpush.msra.mxu0 %v3096
    %3391 = vmatpush.msra.mxu0 %v3094
    %3392 = vmatpush.msra.mxu0 %v3092
    %3393 = vmatpush.msra.mxu0 %v3090
    %3394 = vmatpush.msra.mxu0 %v3088
    %3395 = vmatpush.msra.mxu0 %v3086
    %3396 = vmatpush.msra.mxu0 %v3084
    %3397 = vmatpush.msra.mxu0 %v3082
    %3398 = vmatpush.msra.mxu0 %v3080
    %3399 = vmatpush.msra.mxu0 %v3078
    %3400 = vmatmul.f32.gmra.mxu0 %v3014
    %v3401 = vpop.f32.mrf.mxu0
    %v3402 = vadd.f32 %v3361, %v3401
    %3403 = vmatmul.f32.gmra.mxu0 %v3018
    %v3404 = vpop.f32.mrf.mxu0
    %v3405 = vadd.f32 %v3364, %v3404
    %3406 = vmatmul.f32.gmra.mxu0 %v3022
    %v3407 = vpop.f32.mrf.mxu0
    %v3408 = vadd.f32 %v3367, %v3407
    %3409 = vmatmul.f32.gmra.mxu0 %v3026
    %v3410 = vpop.f32.mrf.mxu0
    %v3411 = vadd.f32 %v3370, %v3410
    %3412 = vmatmul.f32.gmra.mxu0 %v3030
    %v3413 = vpop.f32.mrf.mxu0
    %v3414 = vadd.f32 %v3373, %v3413
    %3415 = vmatmul.f32.gmra.mxu0 %v3034
    %v3416 = vpop.f32.mrf.mxu0
    %v3417 = vadd.f32 %v3376, %v3416
    %3418 = vmatmul.f32.gmra.mxu0 %v3038
    %v3419 = vpop.f32.mrf.mxu0
    %v3420 = vadd.f32 %v3379, %v3419
    %3421 = vmatmul.f32.gmra.mxu0 %v3042
    %v3422 = vpop.f32.mrf.mxu0
    %v3423 = vadd.f32 %v3382, %v3422
    %3424 = vdwg.mxu0
    %3425 = vmatpush.msra.mxu0 %v3140
    %3426 = vmatpush.msra.mxu0 %v3138
    %3427 = vmatpush.msra.mxu0 %v3136
    %3428 = vmatpush.msra.mxu0 %v3134
    %3429 = vmatpush.msra.mxu0 %v3132
    %3430 = vmatpush.msra.mxu0 %v3130
    %3431 = vmatpush.msra.mxu0 %v3128
    %3432 = vmatpush.msra.mxu0 %v3126
    %3433 = vmatpush.msra.mxu0 %v3124
    %3434 = vmatpush.msra.mxu0 %v3122
    %3435 = vmatpush.msra.mxu0 %v3120
    %3436 = vmatpush.msra.mxu0 %v3118
    %3437 = vmatpush.msra.mxu0 %v3116
    %3438 = vmatpush.msra.mxu0 %v3114
    %3439 = vmatpush.msra.mxu0 %v3112
    %3440 = vmatpush.msra.mxu0 %v3110
    %3441 = vmatmul.f32.gmra.mxu0 %v3015
    %v3442 = vpop.f32.mrf.mxu0
    %v3443 = vadd.f32 %v3402, %v3442
    %3444 = vmatmul.f32.gmra.mxu0 %v3019
    %v3445 = vpop.f32.mrf.mxu0
    %v3446 = vadd.f32 %v3405, %v3445
    %3447 = vmatmul.f32.gmra.mxu0 %v3023
    %v3448 = vpop.f32.mrf.mxu0
    %v3449 = vadd.f32 %v3408, %v3448
    %3450 = vmatmul.f32.gmra.mxu0 %v3027
    %v3451 = vpop.f32.mrf.mxu0
    %v3452 = vadd.f32 %v3411, %v3451
    %3453 = vmatmul.f32.gmra.mxu0 %v3031
    %v3454 = vpop.f32.mrf.mxu0
    %v3455 = vadd.f32 %v3414, %v3454
    %3456 = vmatmul.f32.gmra.mxu0 %v3035
    %v3457 = vpop.f32.mrf.mxu0
    %v3458 = vadd.f32 %v3417, %v3457
    %3459 = vmatmul.f32.gmra.mxu0 %v3039
    %v3460 = vpop.f32.mrf.mxu0
    %v3461 = vadd.f32 %v3420, %v3460
    %3462 = vmatmul.f32.gmra.mxu0 %v3043
    %v3463 = vpop.f32.mrf.mxu0
    %v3464 = vadd.f32 %v3423, %v3463
    %3465 = vdwg.mxu0
    %3466 = vmatpush.msra.mxu0 %v3172
    %3467 = vmatpush.msra.mxu0 %v3170
    %3468 = vmatpush.msra.mxu0 %v3168
    %3469 = vmatpush.msra.mxu0 %v3166
    %3470 = vmatpush.msra.mxu0 %v3164
    %3471 = vmatpush.msra.mxu0 %v3162
    %3472 = vmatpush.msra.mxu0 %v3160
    %3473 = vmatpush.msra.mxu0 %v3158
    %3474 = vmatpush.msra.mxu0 %v3156
    %3475 = vmatpush.msra.mxu0 %v3154
    %3476 = vmatpush.msra.mxu0 %v3152
    %3477 = vmatpush.msra.mxu0 %v3150
    %3478 = vmatpush.msra.mxu0 %v3148
    %3479 = vmatpush.msra.mxu0 %v3146
    %3480 = vmatpush.msra.mxu0 %v3144
    %3481 = vmatpush.msra.mxu0 %v3142
    %3482 = vmatmul.f32.gmra.mxu0 %v3016
    %v3483 = vpop.f32.mrf.mxu0
    %v3484 = vadd.f32 %v3443, %v3483
    %3485 = vmatmul.f32.gmra.mxu0 %v3020
    %v3486 = vpop.f32.mrf.mxu0
    %v3487 = vadd.f32 %v3446, %v3486
    %3488 = vmatmul.f32.gmra.mxu0 %v3024
    %v3489 = vpop.f32.mrf.mxu0
    %v3490 = vadd.f32 %v3449, %v3489
    %3491 = vmatmul.f32.gmra.mxu0 %v3028
    %v3492 = vpop.f32.mrf.mxu0
    %v3493 = vadd.f32 %v3452, %v3492
    %3494 = vmatmul.f32.gmra.mxu0 %v3032
    %v3495 = vpop.f32.mrf.mxu0
    %v3496 = vadd.f32 %v3455, %v3495
    %3497 = vmatmul.f32.gmra.mxu0 %v3036
    %v3498 = vpop.f32.mrf.mxu0
    %v3499 = vadd.f32 %v3458, %v3498
    %3500 = vmatmul.f32.gmra.mxu0 %v3040
    %v3501 = vpop.f32.mrf.mxu0
    %v3502 = vadd.f32 %v3461, %v3501
    %3503 = vmatmul.f32.gmra.mxu0 %v3044
    %v3504 = vpop.f32.mrf.mxu0
    %v3505 = vadd.f32 %v3464, %v3504
    %3506 = vdwg.mxu0
    %v3507 = vadd.f32 %v2531, %v3320
    %v3508 = vadd.f32 %v2532, %v3484
    %v3509 = vadd.f32 %v2533, %v3323
    %v3510 = vadd.f32 %v2534, %v3487
    %v3511 = vadd.f32 %v2535, %v3326
    %v3512 = vadd.f32 %v2536, %v3490
    %v3513 = vadd.f32 %v2537, %v3329
    %v3514 = vadd.f32 %v2538, %v3493
    %v3515 = vadd.f32 %v2539, %v3332
    %v3516 = vadd.f32 %v2540, %v3496
    %v3517 = vadd.f32 %v2541, %v3335
    %v3518 = vadd.f32 %v2542, %v3499
    %v3519 = vadd.f32 %v2543, %v3338
    %v3520 = vadd.f32 %v2544, %v3502
    %v3521 = vadd.f32 %v2545, %v3341
    %v3522 = vadd.f32 %v2546, %v3505
    %v3523 = vld [vmem:[#allocation17] sm:$0x3]
    %v3524 = vld [vmem:[%s11] sm:$0x3]
    %v3525 = vadd.f32 %v3507, %v3508
    %3526 = vadd.xlane.f32.xlu0 %v3525
    %v3527 = vpop.xlane.xlu0 %3526
    %v3528 = vadd.f32 %v3509, %v3510
    %3529 = vadd.xlane.f32.xlu0 %v3528
    %v3530 = vpop.xlane.xlu0 %3529
    %v3531 = vadd.f32 %v3511, %v3512
    %3532 = vadd.xlane.f32.xlu0 %v3531
    %v3533 = vpop.xlane.xlu0 %3532
    %v3534 = vadd.f32 %v3513, %v3514
    %3535 = vadd.xlane.f32.xlu0 %v3534
    %v3536 = vpop.xlane.xlu0 %3535
    %v3537 = vadd.f32 %v3515, %v3516
    %3538 = vadd.xlane.f32.xlu0 %v3537
    %v3539 = vpop.xlane.xlu0 %3538
    %v3540 = vadd.f32 %v3517, %v3518
    %3541 = vadd.xlane.f32.xlu0 %v3540
    %v3542 = vpop.xlane.xlu0 %3541
    %v3543 = vadd.f32 %v3519, %v3520
    %3544 = vadd.xlane.f32.xlu0 %v3543
    %v3545 = vpop.xlane.xlu0 %3544
    %v3546 = vadd.f32 %v3521, %v3522
    %3547 = vadd.xlane.f32.xlu0 %v3546
    %v3548 = vpop.xlane.xlu0 %3547
    %v3549 = vmul.f32 %v3527, %v2044
    %v3550 = vmul.f32 %v3530, %v2044
    %v3551 = vmul.f32 %v3533, %v2044
    %v3552 = vmul.f32 %v3536, %v2044
    %v3553 = vmul.f32 %v3539, %v2044
    %v3554 = vmul.f32 %v3542, %v2044
    %v3555 = vmul.f32 %v3545, %v2044
    %v3556 = vmul.f32 %v3548, %v2044
    %v3557 = vsub.f32 %v3507, %v3549
    %v3558 = vsub.f32 %v3508, %v3549
    %v3559 = vsub.f32 %v3509, %v3550
    %v3560 = vsub.f32 %v3510, %v3550
    %v3561 = vsub.f32 %v3511, %v3551
    %v3562 = vsub.f32 %v3512, %v3551
    %v3563 = vsub.f32 %v3513, %v3552
    %v3564 = vsub.f32 %v3514, %v3552
    %v3565 = vsub.f32 %v3515, %v3553
    %v3566 = vsub.f32 %v3516, %v3553
    %v3567 = vsub.f32 %v3517, %v3554
    %v3568 = vsub.f32 %v3518, %v3554
    %v3569 = vsub.f32 %v3519, %v3555
    %v3570 = vsub.f32 %v3520, %v3555
    %v3571 = vsub.f32 %v3521, %v3556
    %v3572 = vsub.f32 %v3522, %v3556
    %v3573 = vmul.f32 %v3557, %v3557
    %v3574 = vmul.f32 %v3558, %v3558
    %v3575 = vmul.f32 %v3559, %v3559
    %v3576 = vmul.f32 %v3560, %v3560
    %v3577 = vmul.f32 %v3561, %v3561
    %v3578 = vmul.f32 %v3562, %v3562
    %v3579 = vmul.f32 %v3563, %v3563
    %v3580 = vmul.f32 %v3564, %v3564
    %v3581 = vmul.f32 %v3565, %v3565
    %v3582 = vmul.f32 %v3566, %v3566
    %v3583 = vmul.f32 %v3567, %v3567
    %v3584 = vmul.f32 %v3568, %v3568
    %v3585 = vmul.f32 %v3569, %v3569
    %v3586 = vmul.f32 %v3570, %v3570
    %v3587 = vmul.f32 %v3571, %v3571
    %v3588 = vmul.f32 %v3572, %v3572
    %v3589 = vadd.f32 %v3573, %v3574
    %3590 = vadd.xlane.f32.xlu0 %v3589
    %v3591 = vpop.xlane.xlu0 %3590
    %v3592 = vadd.f32 %v3575, %v3576
    %3593 = vadd.xlane.f32.xlu0 %v3592
    %v3594 = vpop.xlane.xlu0 %3593
    %v3595 = vadd.f32 %v3577, %v3578
    %3596 = vadd.xlane.f32.xlu0 %v3595
    %v3597 = vpop.xlane.xlu0 %3596
    %v3598 = vadd.f32 %v3579, %v3580
    %3599 = vadd.xlane.f32.xlu0 %v3598
    %v3600 = vpop.xlane.xlu0 %3599
    %v3601 = vadd.f32 %v3581, %v3582
    %3602 = vadd.xlane.f32.xlu0 %v3601
    %v3603 = vpop.xlane.xlu0 %3602
    %v3604 = vadd.f32 %v3583, %v3584
    %3605 = vadd.xlane.f32.xlu0 %v3604
    %v3606 = vpop.xlane.xlu0 %3605
    %v3607 = vadd.f32 %v3585, %v3586
    %3608 = vadd.xlane.f32.xlu0 %v3607
    %v3609 = vpop.xlane.xlu0 %3608
    %v3610 = vadd.f32 %v3587, %v3588
    %3611 = vadd.xlane.f32.xlu0 %v3610
    %v3612 = vpop.xlane.xlu0 %3611
    %v3613 = vmul.f32 %v3591, %v2044
    %v3614 = vmul.f32 %v3594, %v2044
    %v3615 = vmul.f32 %v3597, %v2044
    %v3616 = vmul.f32 %v3600, %v2044
    %v3617 = vmul.f32 %v3603, %v2044
    %v3618 = vmul.f32 %v3606, %v2044
    %v3619 = vmul.f32 %v3609, %v2044
    %v3620 = vmul.f32 %v3612, %v2044
    %v3621 = vadd.f32 %v3613, 1e-05
    %v3622 = vadd.f32 %v3614, 1e-05
    %v3623 = vadd.f32 %v3615, 1e-05
    %v3624 = vadd.f32 %v3616, 1e-05
    %v3625 = vadd.f32 %v3617, 1e-05
    %v3626 = vadd.f32 %v3618, 1e-05
    %v3627 = vadd.f32 %v3619, 1e-05
    %v3628 = vadd.f32 %v3620, 1e-05
    %v3629 = vrsqrt.pop %v3621
    %v3630 = vmul.f32 %v3629, %v3621
    %v3631 = vmul.f32 %v3630, %v3629
    %v3632 = vmul.f32 0.5, %v3631
    %v3633 = vsub.f32 1.5, %v3632
    %v3634 = vmul.f32 %v3629, %v3633
    %vm3635 = vweird.f32 %v3621
    %vm3636 = vweird.f32 %v3629
    %vm3637 = vmor %vm3635, %vm3636
    %v3638 = vsel %vm3637, %v3629, %v3634
    %v3639 = vrsqrt.pop %v3622
    %v3640 = vmul.f32 %v3639, %v3622
    %v3641 = vmul.f32 %v3640, %v3639
    %v3642 = vmul.f32 0.5, %v3641
    %v3643 = vsub.f32 1.5, %v3642
    %v3644 = vmul.f32 %v3639, %v3643
    %vm3645 = vweird.f32 %v3622
    %vm3646 = vweird.f32 %v3639
    %vm3647 = vmor %vm3645, %vm3646
    %v3648 = vsel %vm3647, %v3639, %v3644
    %v3649 = vrsqrt.pop %v3623
    %v3650 = vmul.f32 %v3649, %v3623
    %v3651 = vmul.f32 %v3650, %v3649
    %v3652 = vmul.f32 0.5, %v3651
    %v3653 = vsub.f32 1.5, %v3652
    %v3654 = vmul.f32 %v3649, %v3653
    %vm3655 = vweird.f32 %v3623
    %vm3656 = vweird.f32 %v3649
    %vm3657 = vmor %vm3655, %vm3656
    %v3658 = vsel %vm3657, %v3649, %v3654
    %v3659 = vrsqrt.pop %v3624
    %v3660 = vmul.f32 %v3659, %v3624
    %v3661 = vmul.f32 %v3660, %v3659
    %v3662 = vmul.f32 0.5, %v3661
    %v3663 = vsub.f32 1.5, %v3662
    %v3664 = vmul.f32 %v3659, %v3663
    %vm3665 = vweird.f32 %v3624
    %vm3666 = vweird.f32 %v3659
    %vm3667 = vmor %vm3665, %vm3666
    %v3668 = vsel %vm3667, %v3659, %v3664
    %v3669 = vrsqrt.pop %v3625
    %v3670 = vmul.f32 %v3669, %v3625
    %v3671 = vmul.f32 %v3670, %v3669
    %v3672 = vmul.f32 0.5, %v3671
    %v3673 = vsub.f32 1.5, %v3672
    %v3674 = vmul.f32 %v3669, %v3673
    %vm3675 = vweird.f32 %v3625
    %vm3676 = vweird.f32 %v3669
    %vm3677 = vmor %vm3675, %vm3676
    %v3678 = vsel %vm3677, %v3669, %v3674
    %v3679 = vrsqrt.pop %v3626
    %v3680 = vmul.f32 %v3679, %v3626
    %v3681 = vmul.f32 %v3680, %v3679
    %v3682 = vmul.f32 0.5, %v3681
    %v3683 = vsub.f32 1.5, %v3682
    %v3684 = vmul.f32 %v3679, %v3683
    %vm3685 = vweird.f32 %v3626
    %vm3686 = vweird.f32 %v3679
    %vm3687 = vmor %vm3685, %vm3686
    %v3688 = vsel %vm3687, %v3679, %v3684
    %v3689 = vrsqrt.pop %v3627
    %v3690 = vmul.f32 %v3689, %v3627
    %v3691 = vmul.f32 %v3690, %v3689
    %v3692 = vmul.f32 0.5, %v3691
    %v3693 = vsub.f32 1.5, %v3692
    %v3694 = vmul.f32 %v3689, %v3693
    %vm3695 = vweird.f32 %v3627
    %vm3696 = vweird.f32 %v3689
    %vm3697 = vmor %vm3695, %vm3696
    %v3698 = vsel %vm3697, %v3689, %v3694
    %v3699 = vrsqrt.pop %v3628
    %v3700 = vmul.f32 %v3699, %v3628
    %v3701 = vmul.f32 %v3700, %v3699
    %v3702 = vmul.f32 0.5, %v3701
    %v3703 = vsub.f32 1.5, %v3702
    %v3704 = vmul.f32 %v3699, %v3703
    %vm3705 = vweird.f32 %v3628
    %vm3706 = vweird.f32 %v3699
    %vm3707 = vmor %vm3705, %vm3706
    %v3708 = vsel %vm3707, %v3699, %v3704
    %v3709 = vmul.f32 %v3557, %v3638
    %v3710 = vmul.f32 %v3558, %v3638
    %v3711 = vmul.f32 %v3559, %v3648
    %v3712 = vmul.f32 %v3560, %v3648
    %v3713 = vmul.f32 %v3561, %v3658
    %v3714 = vmul.f32 %v3562, %v3658
    %v3715 = vmul.f32 %v3563, %v3668
    %v3716 = vmul.f32 %v3564, %v3668
    %v3717 = vmul.f32 %v3565, %v3678
    %v3718 = vmul.f32 %v3566, %v3678
    %v3719 = vmul.f32 %v3567, %v3688
    %v3720 = vmul.f32 %v3568, %v3688
    %v3721 = vmul.f32 %v3569, %v3698
    %v3722 = vmul.f32 %v3570, %v3698
    %v3723 = vmul.f32 %v3571, %v3708
    %v3724 = vmul.f32 %v3572, %v3708
    %v3726 = vperm.slane %v3523, 0
    %v3727 = vperm.slane %v3523, 1
    %v3730 = vmul.f32 %v3709, %v3726
    %v3731 = vmul.f32 %v3710, %v3727
    %v3732 = vmul.f32 %v3711, %v3726
    %v3733 = vmul.f32 %v3712, %v3727
    %v3734 = vmul.f32 %v3713, %v3726
    %v3735 = vmul.f32 %v3714, %v3727
    %v3736 = vmul.f32 %v3715, %v3726
    %v3737 = vmul.f32 %v3716, %v3727
    %v3738 = vmul.f32 %v3717, %v3726
    %v3739 = vmul.f32 %v3718, %v3727
    %v3740 = vmul.f32 %v3719, %v3726
    %v3741 = vmul.f32 %v3720, %v3727
    %v3742 = vmul.f32 %v3721, %v3726
    %v3743 = vmul.f32 %v3722, %v3727
    %v3744 = vmul.f32 %v3723, %v3726
    %v3745 = vmul.f32 %v3724, %v3727
    %v3747 = vperm.slane %v3524, 0
    %v3748 = vperm.slane %v3524, 1
    %v3751 = vadd.f32 %v3730, %v3747
    %v3752 = vadd.f32 %v3731, %v3748
    %v3753 = vadd.f32 %v3732, %v3747
    %v3754 = vadd.f32 %v3733, %v3748
    %v3755 = vadd.f32 %v3734, %v3747
    %v3756 = vadd.f32 %v3735, %v3748
    %v3757 = vadd.f32 %v3736, %v3747
    %v3758 = vadd.f32 %v3737, %v3748
    %v3759 = vadd.f32 %v3738, %v3747
    %v3760 = vadd.f32 %v3739, %v3748
    %v3761 = vadd.f32 %v3740, %v3747
    %v3762 = vadd.f32 %v3741, %v3748
    %v3763 = vadd.f32 %v3742, %v3747
    %v3764 = vadd.f32 %v3743, %v3748
    %v3765 = vadd.f32 %v3744, %v3747
    %v3766 = vadd.f32 %v3745, %v3748
    %3767 = vst [vmem:[#allocation21] sm:$0xff] %v3751
    %3768 = vst [vmem:[#allocation21 + $0x8] sm:$0xff] %v3752
    %3769 = vst [vmem:[#allocation21 + $0x10] sm:$0xff] %v3753
    %3770 = vst [vmem:[#allocation21 + $0x18] sm:$0xff] %v3754
    %3771 = vst [vmem:[#allocation21 + $0x20] sm:$0xff] %v3755
    %3772 = vst [vmem:[#allocation21 + $0x28] sm:$0xff] %v3756
    %3773 = vst [vmem:[#allocation21 + $0x30] sm:$0xff] %v3757
    %3774 = vst [vmem:[#allocation21 + $0x38] sm:$0xff] %v3758
    %3775 = vst [vmem:[#allocation21 + $0x40] sm:$0xff] %v3759
    %3776 = vst [vmem:[#allocation21 + $0x48] sm:$0xff] %v3760
    %3777 = vst [vmem:[#allocation21 + $0x50] sm:$0xff] %v3761
    %3778 = vst [vmem:[#allocation21 + $0x58] sm:$0xff] %v3762
    %3779 = vst [vmem:[#allocation21 + $0x60] sm:$0xff] %v3763
    %3780 = vst [vmem:[#allocation21 + $0x68] sm:$0xff] %v3764
    %3781 = vst [vmem:[#allocation21 + $0x70] sm:$0xff] %v3765
    %3782 = vst [vmem:[#allocation21 + $0x78] sm:$0xff] %v3766
    // Predicated region
    $region110: #{tpu_custom_call.1} parent=1 // pred_check
      _
    $region111: #{tpu_custom_call.1} parent=1 // pred_check_branch
      %3784 = sbr.rel (0) target = $region113
    $region112: #{tpu_custom_call.1} parent=1 // pred_region
      %3786 = vsyncadd [#allocation5], 0
      %s3787 = sshll.u32 [#allocation21], 4
      %s3788 = int_to_ptr.vmem [resolvable:$true] %s3787
      %s3789 = sshll.u32 %s16, 4
      %s3790 = int_to_ptr.hbm [resolvable:$true] %s3789
      %3795 = dma.vmem_to_hbm [thread:$0]  %s3788, 2048, %s3790, [#allocation5], 256, 256, 16
    $region113: #{tpu_custom_call.1} parent=1 // pred_fallthru
      _
    // Predicated region
    $region114: #{tpu_custom_call.1} parent=1 // pred_check
      _
    $region115: #{tpu_custom_call.1} parent=1 // pred_check_branch
      %3797 = sbr.rel (0) target = $region117
    $region116: #{tpu_custom_call.1} parent=1 // pred_region
      %3799 = dma.done [#allocation5], 2048
    $region117: #{tpu_custom_call.1} parent=1 // pred_fallthru
      _
    %3800 = vsyncpa [#allocation4], 1
    %3801 = vsyncpa [#allocation7], 1
    %3802 = vsyncpa [#allocation10], 1
    %3803 = vsyncpa [#allocation13], 1
    %3804 = vsyncpa [#allocation16], 1
    %3805 = vsyncpa [#allocation19], 1
    %3806 = vsyncpa [#allocation5], 1

</llo_original>
